<compile_context>
chip_gen: v5e
topology: v5e:2x2
jax: 0.10.0
libtpu: 0.0.40
codegen_flags: <defaults>
</compile_context>

<pallas_src>
import functools
import math

import jax
import jax.numpy as jnp
from jax import lax
from jax.experimental import pallas as pl
from jax.experimental.pallas import tpu as pltpu

# ---- config (mirrors MambaConfig with d_model=32) ----
D_MODEL = 32
D_STATE = 16
EXPAND = 2
D_CONV = 4
D_INNER = EXPAND * D_MODEL            # 64
DT_RANK = math.ceil(D_MODEL / 16)     # 2
N_FLAT = D_INNER * D_STATE            # 1024 (flattened d_inner x d_state, one stream)
DI2 = 2 * D_INNER                     # 128  (both streams packed on lanes)
N2 = 2 * N_FLAT                       # 2048 (flattened state, both streams)
RMS_EPS = 1e-5
DT_MIN, DT_MAX, DT_INIT_FLOOR = 0.001, 0.1, 1e-4


def _softplus(x):
    return jnp.maximum(x, 0.0) + jnp.log(1.0 + jnp.exp(-jnp.abs(x)))


def _silu(x):
    return x * jax.nn.sigmoid(x)


def residual_block_kernel(seq_len, x_ref, vecs_ref, aneg_ref, win_ref, wall_ref,
                          wout_ref, e2_ref, fbig_ref, et2_ref, o_ref):
    f32 = jnp.float32
    bf16 = jnp.bfloat16

    T, dm = x_ref.shape                               # T = batch_tile * seq_len
    L = seq_len

    x = x_ref[...]                                    # (T, D_MODEL) f32

    vp = vecs_ref[...]                                # (8, 128) packed f32 vectors
    rms_w = vp[0:1, :dm]
    cw = vp[1:1 + D_CONV, :]                          # conv taps (z lanes: identity tap)
    conv_b = vp[1 + D_CONV:2 + D_CONV, :]             # conv bias (z lanes: 0)
    b_dt = vp[2 + D_CONV:3 + D_CONV, :]               # dt_proj bias, both streams
    dpar = vp[3 + D_CONV:4 + D_CONV, :]               # D parameter, both streams

    # ---- RMSNorm ----
    ms = jnp.mean(x * x, axis=-1, keepdims=True)
    xn = x * lax.rsqrt(ms + RMS_EPS) * rms_w

    # ---- in_proj: (T, 128) = [x-stream | z-stream] packed on lanes ----
    xz = jnp.dot(xn.astype(bf16), win_ref[...], preferred_element_type=f32)

    # per-row position within its sequence (segments the folded batch)
    pos = lax.broadcasted_iota(jnp.int32, (T, 1), 0) % L

    # ---- causal depthwise conv on packed lanes (z half passes via identity tap) ----
    xc = conv_b
    for k in range(D_CONV):
        s = D_CONV - 1 - k                            # causal left shift of this tap
        if s == 0:
            xc = xc + xz * cw[k:k + 1, :]
        else:
            shifted = jnp.concatenate(
                [jnp.zeros((s, DI2), f32), xz[:T - s, :]], axis=0)
            shifted = jnp.where(pos >= s, shifted, 0.0)   # no leak across sequences
            xc = xc + shifted * cw[k:k + 1, :]

    uz = _silu(xc)                                    # [silu(conv(x)) | silu(z)]

    # ---- fused block-diagonal delta/B/C projection for both streams ----
    dbc = jnp.dot(uz.astype(bf16), wall_ref[...], preferred_element_type=f32)  # (T,192)
    delta = _softplus(dbc[:, :DI2] + b_dt)            # (T, 128)
    bc = dbc[:, DI2:]                                 # (T, 64) = [B_u|C_u|B_z|C_z]

    # ---- 0/1 lane expansions in f32 (exact copies, keeps recurrence precision) ----
    de = jnp.concatenate([delta, delta * uz], axis=0)                 # (2T, 128)
    de_rep = jnp.dot(de, e2_ref[...], preferred_element_type=f32)     # (2T, 2048)
    dA = jnp.exp(de_rep[:T] * aneg_ref[...])                          # deltaA   (T, 2048)
    bc_rep = jnp.dot(bc, fbig_ref[...], preferred_element_type=f32)   # (T, 4096)
    sbx = de_rep[T:] * bc_rep[:, :N2]                                 # deltaB*x (T, 2048)

    # ---- segmented Hillis-Steele log-depth scan over the time rows ----
    a = dA
    b = sbx
    shift = 1
    while shift < L:
        live = pos >= shift
        a_prev = jnp.where(live, jnp.concatenate(
            [jnp.ones((shift, N2), f32), a[:T - shift]], axis=0), 1.0)
        b_prev = jnp.where(live, jnp.concatenate(
            [jnp.zeros((shift, N2), f32), b[:T - shift]], axis=0), 0.0)
        b = a * b_prev + b
        a = a * a_prev
        shift *= 2
    hs = b                                                            # h_t (T, 2048)

    # ---- y[t,d] = sum_n hs[t,d,n]*C[t,n] + D[d]*v[t,d], both streams at once ----
    y = jnp.dot(hs * bc_rep[:, N2:], et2_ref[...],
                preferred_element_type=f32)                           # (T, 128)
    y = y + uz * dpar

    # ---- mix ssm(u)*silu(z) + ssm(silu(z))*u, out_proj (stacked), residual ----
    uz_swap = jnp.concatenate([uz[:, D_INNER:], uz[:, :D_INNER]], axis=-1)
    mixed = y * uz_swap                                               # (T, 128)
    out = jnp.dot(mixed.astype(bf16), wout_ref[...], preferred_element_type=f32)
    o_ref[...] = out + x


def residual_block_forward(x, params, batch_tile=None):
    B, L, dm = x.shape
    if batch_tile is None:
        # Fold as much of the batch as possible into the row/sublane axis while
        # keeping >=2 grid steps (when B allows) so v7x's two TensorCores both
        # get work; on v5e/v6e the grid is a serial loop, so fewer, fatter
        # steps is what we want anyway.
        batch_tile = max(1, B // 2)
    assert B % batch_tile == 0, "batch must divide evenly into batch tiles"
    nsteps = B // batch_tile
    rows = batch_tile * L

    weight_order = ("vecs", "a_neg2", "w_in_bf", "w_all2_bf", "w_out2_bf",
                    "E2", "F_big", "ET2")
    weights = [params[k] for k in weight_order]

    in_specs = [pl.BlockSpec((rows, dm), lambda i: (i, 0))]
    for w in weights:
        in_specs.append(pl.BlockSpec(w.shape, lambda i, _nd=w.ndim: (0,) * _nd))
    out_spec = pl.BlockSpec((rows, dm), lambda i: (i, 0))

    out = pl.pallas_call(
        functools.partial(residual_block_kernel, L),
        out_shape=jax.ShapeDtypeStruct((B * L, dm), jnp.float32),
        grid=(nsteps,),
        in_specs=in_specs,
        out_specs=out_spec,
        compiler_params=pltpu.CompilerParams(
            dimension_semantics=("parallel",)),
    )(x.reshape(B * L, dm), *weights)
    return out.reshape(B, L, dm)


def init_params(key):
    ks = jax.random.split(key, 8)

    def uniform(k, shape, bound):
        return jax.random.uniform(k, shape, jnp.float32, -bound, bound)

    def bf16_round(w):  # weights stored bf16-exact so kernel/ref agree
        return w.astype(jnp.bfloat16).astype(jnp.float32)

    w_in = bf16_round(uniform(ks[0], (D_MODEL, 2 * D_INNER), 1.0 / math.sqrt(D_MODEL)))
    conv_w = uniform(ks[1], (D_CONV, D_INNER), 1.0 / math.sqrt(D_CONV))
    conv_b = uniform(ks[2], (1, D_INNER), 1.0 / math.sqrt(D_CONV))
    w_x = bf16_round(uniform(ks[3], (D_INNER, DT_RANK + 2 * D_STATE),
                             1.0 / math.sqrt(D_INNER)))
    dt_init_std = DT_RANK ** -0.5
    w_dt = bf16_round(uniform(ks[4], (DT_RANK, D_INNER), dt_init_std))
    dt = jnp.exp(jax.random.uniform(ks[5], (D_INNER,), jnp.float32)
                 * (math.log(DT_MAX) - math.log(DT_MIN)) + math.log(DT_MIN))
    dt = jnp.maximum(dt, DT_INIT_FLOOR)
    inv_dt = dt + jnp.log(-jnp.expm1(-dt))
    b_dt = inv_dt.reshape(1, D_INNER)
    A_log = jnp.log(jnp.tile(jnp.arange(1, D_STATE + 1, dtype=jnp.float32),
                             (D_INNER, 1)))                       # (Di, Ds)
    D_par = jnp.ones((1, D_INNER), jnp.float32)
    w_out = bf16_round(uniform(ks[6], (D_INNER, D_MODEL), 1.0 / math.sqrt(D_INNER)))
    rms_w = jnp.ones((1, D_MODEL), jnp.float32)

    # ---- kernel-ready derived parameters ----
    def block_diag2(a, b):
        r1, c1 = a.shape
        r2, c2 = b.shape
        top = jnp.concatenate([a, jnp.zeros((r1, c2), a.dtype)], axis=1)
        bot = jnp.concatenate([jnp.zeros((r2, c1), b.dtype), b], axis=1)
        return jnp.concatenate([top, bot], axis=0)

    wdt_full = w_x[:, :DT_RANK] @ w_dt               # fold x_proj dt cols into dt_proj
    w_B = w_x[:, DT_RANK:DT_RANK + D_STATE]
    w_C = w_x[:, DT_RANK + D_STATE:]
    a_neg = (-jnp.exp(A_log)).reshape(1, N_FLAT)     # A = -exp(A_log), flat d-major

    # fused (both-stream, block-diagonal) delta/B/C projection: (128, 192)
    bc_one = jnp.concatenate([w_B, w_C], axis=1)                      # (64, 32)
    w_all2 = jnp.concatenate([block_diag2(wdt_full, wdt_full),
                              block_diag2(bc_one, bc_one)], axis=1)   # (128, 192)

    # 0/1 expanders (exact; applied to f32 activations in the kernel)
    E = jnp.repeat(jnp.eye(D_INNER, dtype=jnp.float32), D_STATE, axis=1)   # (64, 1024)
    F = jnp.tile(jnp.eye(D_STATE, dtype=jnp.float32), (1, D_INNER))        # (16, 1024)
    E2 = block_diag2(E, E)                                                 # (128, 2048)
    ET2 = E2.T                                                             # (2048, 128)
    F_big = jnp.zeros((4 * D_STATE, 4 * N_FLAT), jnp.float32)
    F_big = F_big.at[0:D_STATE, 0:N_FLAT].set(F)                           # B_u -> b_rep_u
    F_big = F_big.at[2 * D_STATE:3 * D_STATE, N_FLAT:2 * N_FLAT].set(F)    # B_z -> b_rep_z
    F_big = F_big.at[D_STATE:2 * D_STATE, 2 * N_FLAT:3 * N_FLAT].set(F)    # C_u -> c_rep_u
    F_big = F_big.at[3 * D_STATE:4 * D_STATE, 3 * N_FLAT:4 * N_FLAT].set(F)  # C_z -> c_rep_z

    # packed small per-channel vectors: one (8, 128) f32 tile
    conv_w_pack = jnp.zeros((D_CONV, DI2), jnp.float32).at[:, :D_INNER].set(conv_w)
    conv_w_pack = conv_w_pack.at[D_CONV - 1, D_INNER:].set(1.0)   # identity tap for z lanes
    conv_b_pack = jnp.concatenate([conv_b[0], jnp.zeros((D_INNER,), jnp.float32)])
    rms_row = jnp.zeros((DI2,), jnp.float32).at[:D_MODEL].set(rms_w[0])
    b_dt2 = jnp.concatenate([b_dt[0], b_dt[0]])
    D2 = jnp.concatenate([D_par[0], D_par[0]])
    vecs = jnp.stack([rms_row] + [conv_w_pack[i] for i in range(D_CONV)]
                     + [conv_b_pack, b_dt2, D2], axis=0)          # (8, 128)

    a_neg2 = jnp.concatenate([a_neg, a_neg], axis=1)              # (1, 2048)
    w_out2 = jnp.concatenate([w_out, w_out], axis=0)              # (128, 32)

    bf = jnp.bfloat16
    return dict(
        # reference-side (f32) parameters
        rms_w=rms_w, w_in=w_in, conv_w=conv_w, conv_b=conv_b, w_x=w_x, w_dt=w_dt,
        b_dt=b_dt, A_log=A_log, D=D_par, w_out=w_out,
        # kernel-side parameters
        vecs=vecs, a_neg2=a_neg2,
        w_in_bf=w_in.astype(bf), w_all2_bf=w_all2.astype(bf),
        w_out2_bf=w_out2.astype(bf),
        E2=E2, F_big=F_big, ET2=ET2)


def reference_forward(x, p):
    """Pure-JAX reference translation of ResidualBlock.forward (sanity check)."""
    B, L, _ = x.shape
    xn = x * lax.rsqrt(jnp.mean(x * x, axis=-1, keepdims=True) + RMS_EPS) * p["rms_w"][0]
    xz = xn @ p["w_in"]
    xin, z = xz[..., :D_INNER], xz[..., D_INNER:]
    pad = jnp.pad(xin, ((0, 0), (D_CONV - 1, 0), (0, 0)))
    xc = sum(pad[:, k:k + L, :] * p["conv_w"][k] for k in range(D_CONV)) + p["conv_b"][0]
    u = jax.nn.silu(xc)
    zs = jax.nn.silu(z)
    A = -jnp.exp(p["A_log"])

    def ssm(v):
        dbc = v @ p["w_x"]
        delta = jax.nn.softplus(dbc[..., :DT_RANK] @ p["w_dt"] + p["b_dt"][0])
        bm = dbc[..., DT_RANK:DT_RANK + D_STATE]
        cm = dbc[..., DT_RANK + D_STATE:]
        dA = jnp.exp(delta[..., None] * A)                          # (B,L,Di,Ds)
        bx = delta[..., None] * bm[:, :, None, :] * v[..., None]

        def step(h, inp):
            da_t, bx_t = inp
            h = da_t * h + bx_t
            return h, h

        h0 = jnp.zeros((B, D_INNER, D_STATE), jnp.float32)
        _, hs = lax.scan(step, h0, (jnp.swapaxes(dA, 0, 1), jnp.swapaxes(bx, 0, 1)))
        hs = jnp.swapaxes(hs, 0, 1)                                 # (B,L,Di,Ds)
        y = jnp.sum(hs * cm[:, :, None, :], axis=-1) + p["D"][0] * v
        return y

    y1 = ssm(u)
    y2 = ssm(zs)
    return (y1 * zs + y2 * u) @ p["w_out"] + x


if __name__ == "__main__":
    key = jax.random.PRNGKey(0)
    kx, kp = jax.random.split(key)
    B, L = 4, 8
    x = jax.random.normal(kx, (B, L, D_MODEL), jnp.float32)
    params = init_params(kp)

    out = jax.block_until_ready(residual_block_forward(x, params))
    assert out.shape == (B, L, D_MODEL)

    ref = reference_forward(x, params)
    if not bool(jnp.allclose(out, ref, atol=5e-2, rtol=5e-2)):
        max_err = float(jnp.max(jnp.abs(out - ref)))
        raise AssertionError(f"kernel/reference mismatch, max abs err = {max_err}")

    print("KERNEL_OK")
</pallas_src>

<mosaic_0001>
module attributes {stable_mosaic.version = 11 : i64} {
  func.func @residual_block_kernel(%arg0: i32, %arg1: memref<16x32xf32, #tpu.memory_space<vmem>>, %arg2: memref<8x128xf32, #tpu.memory_space<vmem>>, %arg3: memref<1x2048xf32, #tpu.memory_space<vmem>>, %arg4: memref<32x128xbf16, #tpu.memory_space<vmem>>, %arg5: memref<128x192xbf16, #tpu.memory_space<vmem>>, %arg6: memref<128x32xbf16, #tpu.memory_space<vmem>>, %arg7: memref<128x2048xf32, #tpu.memory_space<vmem>>, %arg8: memref<64x4096xf32, #tpu.memory_space<vmem>>, %arg9: memref<2048x128xf32, #tpu.memory_space<vmem>>, %arg10: memref<16x32xf32, #tpu.memory_space<vmem>>) attributes {dimension_semantics = [#tpu.dimension_semantics<parallel>], iteration_bounds = array<i64: 2>, scalar_prefetch = 0 : i64, scratch_operands = 0 : i64, tpu.core_type = #tpu.core_type<tc>, window_params = [{transform_indices = @transform_0, window_bounds = array<i64: 16, 32>}, {pipeline_mode = #tpu.pipeline_mode<synchronous>, transform_indices = @transform_1, window_bounds = array<i64: 8, 128>}, {pipeline_mode = #tpu.pipeline_mode<synchronous>, transform_indices = @transform_2, window_bounds = array<i64: 1, 2048>}, {pipeline_mode = #tpu.pipeline_mode<synchronous>, transform_indices = @transform_3, window_bounds = array<i64: 32, 128>}, {pipeline_mode = #tpu.pipeline_mode<synchronous>, transform_indices = @transform_4, window_bounds = array<i64: 128, 192>}, {pipeline_mode = #tpu.pipeline_mode<synchronous>, transform_indices = @transform_5, window_bounds = array<i64: 128, 32>}, {pipeline_mode = #tpu.pipeline_mode<synchronous>, transform_indices = @transform_6, window_bounds = array<i64: 128, 2048>}, {pipeline_mode = #tpu.pipeline_mode<synchronous>, transform_indices = @transform_7, window_bounds = array<i64: 64, 4096>}, {pipeline_mode = #tpu.pipeline_mode<synchronous>, transform_indices = @transform_8, window_bounds = array<i64: 2048, 128>}, {transform_indices = @transform_9, window_bounds = array<i64: 16, 32>}]} {
    %c0 = arith.constant 0 : index
    %c0_0 = arith.constant 0 : index
    %0 = vector.load %arg1[%c0, %c0_0] : memref<16x32xf32, #tpu.memory_space<vmem>>, vector<16x32xf32>
    %c0_1 = arith.constant 0 : index
    %c0_2 = arith.constant 0 : index
    %1 = vector.load %arg2[%c0_1, %c0_2] : memref<8x128xf32, #tpu.memory_space<vmem>>, vector<8x128xf32>
    %2 = vector.extract_strided_slice %1 {offsets = [0, 0], sizes = [1, 32], strides = [1, 1]} : vector<8x128xf32> to vector<1x32xf32>
    %3 = vector.extract_strided_slice %1 {offsets = [1, 0], sizes = [4, 128], strides = [1, 1]} : vector<8x128xf32> to vector<4x128xf32>
    %4 = vector.extract_strided_slice %1 {offsets = [5, 0], sizes = [1, 128], strides = [1, 1]} : vector<8x128xf32> to vector<1x128xf32>
    %5 = vector.extract_strided_slice %1 {offsets = [6, 0], sizes = [1, 128], strides = [1, 1]} : vector<8x128xf32> to vector<1x128xf32>
    %6 = vector.extract_strided_slice %1 {offsets = [7, 0], sizes = [1, 128], strides = [1, 1]} : vector<8x128xf32> to vector<1x128xf32>
    %7 = arith.mulf %0, %0 : vector<16x32xf32>
    %cst = arith.constant dense<0.000000e+00> : vector<16xf32>
    %8 = vector.multi_reduction <add>, %7, %cst [1] : vector<16x32xf32> to vector<16xf32>
    %9 = vector.shape_cast %8 : vector<16xf32> to vector<16x1xf32>
    %cst_3 = arith.constant 3.200000e+01 : f32
    %10 = vector.broadcast %cst_3 : f32 to vector<16x1xf32>
    %11 = arith.divf %9, %10 : vector<16x1xf32>
    %cst_4 = arith.constant 9.99999974E-6 : f32
    %12 = vector.broadcast %cst_4 : f32 to vector<16x1xf32>
    %13 = arith.addf %11, %12 : vector<16x1xf32>
    %14 = math.rsqrt %13 : vector<16x1xf32>
    %15 = vector.broadcast %14 : vector<16x1xf32> to vector<16x32xf32>
    %16 = arith.mulf %0, %15 : vector<16x32xf32>
    %17 = vector.broadcast %2 : vector<1x32xf32> to vector<16x32xf32>
    %18 = arith.mulf %16, %17 : vector<16x32xf32>
    %19 = arith.truncf %18 : vector<16x32xf32> to vector<16x32xbf16>
    %c0_5 = arith.constant 0 : index
    %c0_6 = arith.constant 0 : index
    %20 = vector.load %arg4[%c0_5, %c0_6] : memref<32x128xbf16, #tpu.memory_space<vmem>>, vector<32x128xbf16>
    %cst_7 = arith.constant dense<0.000000e+00> : vector<16x128xf32>
    %21 = tpu.matmul %19, %20, %cst_7 {dimension_numbers = #tpu.dot_dimension_numbers<[1], [0], [0], [1], [0, 0, 1, 1], [], []>} : vector<16x32xbf16>, vector<32x128xbf16>, vector<16x128xf32> -> vector<16x128xf32>
    %22 = tpu.iota {dimensions = array<i32: 0>} : vector<16x1xi32>
    %c8_i32 = arith.constant 8 : i32
    %c0_i32 = arith.constant 0 : i32
    %23 = arith.cmpi eq, %c8_i32, %c0_i32 : i32
    %c1_i32 = arith.constant 1 : i32
    %24 = arith.select %23, %c1_i32, %c8_i32 : i32
    %25 = vector.broadcast %24 : i32 to vector<16x1xi32>
    %26 = arith.remsi %22, %25 : vector<16x1xi32>
    %c0_i32_8 = arith.constant 0 : i32
    %27 = vector.broadcast %c0_i32_8 : i32 to vector<16x1xi32>
    %28 = arith.cmpi ne, %26, %27 : vector<16x1xi32>
    %c0_i32_9 = arith.constant 0 : i32
    %29 = vector.broadcast %c0_i32_9 : i32 to vector<16x1xi32>
    %30 = arith.cmpi slt, %26, %29 : vector<16x1xi32>
    %c0_i32_10 = arith.constant 0 : i32
    %31 = arith.cmpi slt, %24, %c0_i32_10 : i32
    %32 = vector.broadcast %31 : i1 to vector<16x1xi1>
    %33 = vector.broadcast %32 : vector<16x1xi1> to vector<16x1xi1>
    %34 = arith.xori %30, %33 : vector<16x1xi1>
    %35 = arith.andi %34, %28 : vector<16x1xi1>
    %36 = vector.broadcast %24 : i32 to vector<16x1xi32>
    %37 = arith.addi %26, %36 : vector<16x1xi32>
    %38 = arith.select %35, %37, %26 : vector<16x1xi1>, vector<16x1xi32>
    %cst_11 = arith.constant 0.000000e+00 : f32
    %39 = vector.broadcast %cst_11 : f32 to vector<3x128xf32>
    %40 = vector.extract_strided_slice %21 {offsets = [0, 0], sizes = [13, 128], strides = [1, 1]} : vector<16x128xf32> to vector<13x128xf32>
    %41 = tpu.concatenate %39, %40 in 0 : vector<3x128xf32>, vector<13x128xf32> -> vector<16x128xf32>
    %c3_i32 = arith.constant 3 : i32
    %42 = vector.broadcast %c3_i32 : i32 to vector<16x1xi32>
    %43 = arith.cmpi sge, %38, %42 : vector<16x1xi32>
    %cst_12 = arith.constant 0.000000e+00 : f32
    %44 = vector.shape_cast %43 : vector<16x1xi1> to vector<16x1xi1>
    %45 = vector.broadcast %44 : vector<16x1xi1> to vector<16x128xi1>
    %46 = vector.broadcast %cst_12 : f32 to vector<16x128xf32>
    %47 = arith.select %45, %41, %46 : vector<16x128xi1>, vector<16x128xf32>
    %48 = vector.extract_strided_slice %3 {offsets = [0, 0], sizes = [1, 128], strides = [1, 1]} : vector<4x128xf32> to vector<1x128xf32>
    %49 = vector.broadcast %48 : vector<1x128xf32> to vector<16x128xf32>
    %50 = arith.mulf %47, %49 : vector<16x128xf32>
    %51 = vector.broadcast %4 : vector<1x128xf32> to vector<16x128xf32>
    %52 = arith.addf %51, %50 : vector<16x128xf32>
    %cst_13 = arith.constant 0.000000e+00 : f32
    %53 = vector.broadcast %cst_13 : f32 to vector<2x128xf32>
    %54 = vector.extract_strided_slice %21 {offsets = [0, 0], sizes = [14, 128], strides = [1, 1]} : vector<16x128xf32> to vector<14x128xf32>
    %55 = tpu.concatenate %53, %54 in 0 : vector<2x128xf32>, vector<14x128xf32> -> vector<16x128xf32>
    %c2_i32 = arith.constant 2 : i32
    %56 = vector.broadcast %c2_i32 : i32 to vector<16x1xi32>
    %57 = arith.cmpi sge, %38, %56 : vector<16x1xi32>
    %cst_14 = arith.constant 0.000000e+00 : f32
    %58 = vector.shape_cast %57 : vector<16x1xi1> to vector<16x1xi1>
    %59 = vector.broadcast %58 : vector<16x1xi1> to vector<16x128xi1>
    %60 = vector.broadcast %cst_14 : f32 to vector<16x128xf32>
    %61 = arith.select %59, %55, %60 : vector<16x128xi1>, vector<16x128xf32>
    %62 = vector.extract_strided_slice %3 {offsets = [1, 0], sizes = [1, 128], strides = [1, 1]} : vector<4x128xf32> to vector<1x128xf32>
    %63 = vector.broadcast %62 : vector<1x128xf32> to vector<16x128xf32>
    %64 = arith.mulf %61, %63 : vector<16x128xf32>
    %65 = arith.addf %52, %64 : vector<16x128xf32>
    %cst_15 = arith.constant 0.000000e+00 : f32
    %66 = vector.broadcast %cst_15 : f32 to vector<1x128xf32>
    %67 = vector.extract_strided_slice %21 {offsets = [0, 0], sizes = [15, 128], strides = [1, 1]} : vector<16x128xf32> to vector<15x128xf32>
    %68 = tpu.concatenate %66, %67 in 0 : vector<1x128xf32>, vector<15x128xf32> -> vector<16x128xf32>
    %c1_i32_16 = arith.constant 1 : i32
    %69 = vector.broadcast %c1_i32_16 : i32 to vector<16x1xi32>
    %70 = arith.cmpi sge, %38, %69 : vector<16x1xi32>
    %cst_17 = arith.constant 0.000000e+00 : f32
    %71 = vector.shape_cast %70 : vector<16x1xi1> to vector<16x1xi1>
    %72 = vector.broadcast %71 : vector<16x1xi1> to vector<16x128xi1>
    %73 = vector.broadcast %cst_17 : f32 to vector<16x128xf32>
    %74 = arith.select %72, %68, %73 : vector<16x128xi1>, vector<16x128xf32>
    %75 = vector.extract_strided_slice %3 {offsets = [2, 0], sizes = [1, 128], strides = [1, 1]} : vector<4x128xf32> to vector<1x128xf32>
    %76 = vector.broadcast %75 : vector<1x128xf32> to vector<16x128xf32>
    %77 = arith.mulf %74, %76 : vector<16x128xf32>
    %78 = arith.addf %65, %77 : vector<16x128xf32>
    %79 = vector.extract_strided_slice %3 {offsets = [3, 0], sizes = [1, 128], strides = [1, 1]} : vector<4x128xf32> to vector<1x128xf32>
    %80 = vector.broadcast %79 : vector<1x128xf32> to vector<16x128xf32>
    %81 = arith.mulf %21, %80 : vector<16x128xf32>
    %82 = arith.addf %78, %81 : vector<16x128xf32>
    %83 = arith.negf %82 : vector<16x128xf32>
    %84 = math.exp %83 : vector<16x128xf32>
    %cst_18 = arith.constant 1.000000e+00 : f32
    %85 = vector.broadcast %cst_18 : f32 to vector<16x128xf32>
    %86 = arith.addf %85, %84 : vector<16x128xf32>
    %87 = arith.divf %85, %86 : vector<16x128xf32>
    %88 = arith.mulf %82, %87 : vector<16x128xf32>
    %89 = arith.truncf %88 : vector<16x128xf32> to vector<16x128xbf16>
    %c0_19 = arith.constant 0 : index
    %c0_20 = arith.constant 0 : index
    %90 = vector.load %arg5[%c0_19, %c0_20] : memref<128x192xbf16, #tpu.memory_space<vmem>>, vector<128x192xbf16>
    %cst_21 = arith.constant dense<0.000000e+00> : vector<16x192xf32>
    %91 = tpu.matmul %89, %90, %cst_21 {dimension_numbers = #tpu.dot_dimension_numbers<[1], [0], [0], [1], [0, 0, 1, 1], [], []>} : vector<16x128xbf16>, vector<128x192xbf16>, vector<16x192xf32> -> vector<16x192xf32>
    %92 = vector.extract_strided_slice %91 {offsets = [0, 0], sizes = [16, 128], strides = [1, 1]} : vector<16x192xf32> to vector<16x128xf32>
    %93 = vector.broadcast %5 : vector<1x128xf32> to vector<16x128xf32>
    %94 = arith.addf %92, %93 : vector<16x128xf32>
    %cst_22 = arith.constant 0.000000e+00 : f32
    %95 = vector.broadcast %cst_22 : f32 to vector<16x128xf32>
    %96 = arith.maximumf %94, %95 : vector<16x128xf32>
    %97 = math.absf %94 : vector<16x128xf32>
    %cst_23 = arith.constant 0.000000e+00 : f32
    %98 = vector.broadcast %cst_23 : f32 to vector<16x128xf32>
    %99 = arith.subf %98, %97 : vector<16x128xf32>
    %100 = math.exp %99 : vector<16x128xf32>
    %cst_24 = arith.constant 1.000000e+00 : f32
    %101 = vector.broadcast %cst_24 : f32 to vector<16x128xf32>
    %102 = arith.addf %101, %100 : vector<16x128xf32>
    %103 = math.log %102 : vector<16x128xf32>
    %104 = arith.addf %96, %103 : vector<16x128xf32>
    %105 = vector.extract_strided_slice %91 {offsets = [0, 128], sizes = [16, 64], strides = [1, 1]} : vector<16x192xf32> to vector<16x64xf32>
    %106 = arith.mulf %104, %88 : vector<16x128xf32>
    %107 = tpu.concatenate %104, %106 in 0 : vector<16x128xf32>, vector<16x128xf32> -> vector<32x128xf32>
    %c0_25 = arith.constant 0 : index
    %c0_26 = arith.constant 0 : index
    %108 = vector.load %arg7[%c0_25, %c0_26] : memref<128x2048xf32, #tpu.memory_space<vmem>>, vector<128x2048xf32>
    %cst_27 = arith.constant dense<0.000000e+00> : vector<32x2048xf32>
    %109 = tpu.matmul %107, %108, %cst_27 {dimension_numbers = #tpu.dot_dimension_numbers<[1], [0], [0], [1], [0, 0, 1, 1], [], []>} : vector<32x128xf32>, vector<128x2048xf32>, vector<32x2048xf32> -> vector<32x2048xf32>
    %110 = vector.extract_strided_slice %109 {offsets = [0, 0], sizes = [16, 2048], strides = [1, 1]} : vector<32x2048xf32> to vector<16x2048xf32>
    %c0_28 = arith.constant 0 : index
    %c0_29 = arith.constant 0 : index
    %111 = vector.load %arg3[%c0_28, %c0_29] : memref<1x2048xf32, #tpu.memory_space<vmem>>, vector<1x2048xf32>
    %112 = vector.broadcast %111 : vector<1x2048xf32> to vector<16x2048xf32>
    %113 = arith.mulf %110, %112 : vector<16x2048xf32>
    %114 = math.exp %113 : vector<16x2048xf32>
    %c0_30 = arith.constant 0 : index
    %c0_31 = arith.constant 0 : index
    %115 = vector.load %arg8[%c0_30, %c0_31] : memref<64x4096xf32, #tpu.memory_space<vmem>>, vector<64x4096xf32>
    %cst_32 = arith.constant dense<0.000000e+00> : vector<16x4096xf32>
    %116 = tpu.matmul %105, %115, %cst_32 {dimension_numbers = #tpu.dot_dimension_numbers<[1], [0], [0], [1], [0, 0, 1, 1], [], []>} : vector<16x64xf32>, vector<64x4096xf32>, vector<16x4096xf32> -> vector<16x4096xf32>
    %117 = vector.extract_strided_slice %109 {offsets = [16, 0], sizes = [16, 2048], strides = [1, 1]} : vector<32x2048xf32> to vector<16x2048xf32>
    %118 = vector.extract_strided_slice %116 {offsets = [0, 0], sizes = [16, 2048], strides = [1, 1]} : vector<16x4096xf32> to vector<16x2048xf32>
    %119 = arith.mulf %117, %118 : vector<16x2048xf32>
    %c1_i32_33 = arith.constant 1 : i32
    %120 = vector.broadcast %c1_i32_33 : i32 to vector<16x1xi32>
    %121 = arith.cmpi sge, %38, %120 : vector<16x1xi32>
    %cst_34 = arith.constant 1.000000e+00 : f32
    %122 = vector.broadcast %cst_34 : f32 to vector<1x2048xf32>
    %123 = vector.extract_strided_slice %114 {offsets = [0, 0], sizes = [15, 2048], strides = [1, 1]} : vector<16x2048xf32> to vector<15x2048xf32>
    %124 = tpu.concatenate %122, %123 in 0 : vector<1x2048xf32>, vector<15x2048xf32> -> vector<16x2048xf32>
    %cst_35 = arith.constant 1.000000e+00 : f32
    %125 = vector.shape_cast %121 : vector<16x1xi1> to vector<16x1xi1>
    %126 = vector.broadcast %125 : vector<16x1xi1> to vector<16x2048xi1>
    %127 = vector.broadcast %cst_35 : f32 to vector<16x2048xf32>
    %128 = arith.select %126, %124, %127 : vector<16x2048xi1>, vector<16x2048xf32>
    %cst_36 = arith.constant 0.000000e+00 : f32
    %129 = vector.broadcast %cst_36 : f32 to vector<1x2048xf32>
    %130 = vector.extract_strided_slice %119 {offsets = [0, 0], sizes = [15, 2048], strides = [1, 1]} : vector<16x2048xf32> to vector<15x2048xf32>
    %131 = tpu.concatenate %129, %130 in 0 : vector<1x2048xf32>, vector<15x2048xf32> -> vector<16x2048xf32>
    %cst_37 = arith.constant 0.000000e+00 : f32
    %132 = vector.shape_cast %121 : vector<16x1xi1> to vector<16x1xi1>
    %133 = vector.broadcast %132 : vector<16x1xi1> to vector<16x2048xi1>
    %134 = vector.broadcast %cst_37 : f32 to vector<16x2048xf32>
    %135 = arith.select %133, %131, %134 : vector<16x2048xi1>, vector<16x2048xf32>
    %136 = arith.mulf %114, %135 : vector<16x2048xf32>
    %137 = arith.addf %136, %119 : vector<16x2048xf32>
    %138 = arith.mulf %114, %128 : vector<16x2048xf32>
    %c2_i32_38 = arith.constant 2 : i32
    %139 = vector.broadcast %c2_i32_38 : i32 to vector<16x1xi32>
    %140 = arith.cmpi sge, %38, %139 : vector<16x1xi32>
    %cst_39 = arith.constant 1.000000e+00 : f32
    %141 = vector.broadcast %cst_39 : f32 to vector<2x2048xf32>
    %142 = vector.extract_strided_slice %138 {offsets = [0, 0], sizes = [14, 2048], strides = [1, 1]} : vector<16x2048xf32> to vector<14x2048xf32>
    %143 = tpu.concatenate %141, %142 in 0 : vector<2x2048xf32>, vector<14x2048xf32> -> vector<16x2048xf32>
    %cst_40 = arith.constant 1.000000e+00 : f32
    %144 = vector.shape_cast %140 : vector<16x1xi1> to vector<16x1xi1>
    %145 = vector.broadcast %144 : vector<16x1xi1> to vector<16x2048xi1>
    %146 = vector.broadcast %cst_40 : f32 to vector<16x2048xf32>
    %147 = arith.select %145, %143, %146 : vector<16x2048xi1>, vector<16x2048xf32>
    %cst_41 = arith.constant 0.000000e+00 : f32
    %148 = vector.broadcast %cst_41 : f32 to vector<2x2048xf32>
    %149 = vector.extract_strided_slice %137 {offsets = [0, 0], sizes = [14, 2048], strides = [1, 1]} : vector<16x2048xf32> to vector<14x2048xf32>
    %150 = tpu.concatenate %148, %149 in 0 : vector<2x2048xf32>, vector<14x2048xf32> -> vector<16x2048xf32>
    %cst_42 = arith.constant 0.000000e+00 : f32
    %151 = vector.shape_cast %140 : vector<16x1xi1> to vector<16x1xi1>
    %152 = vector.broadcast %151 : vector<16x1xi1> to vector<16x2048xi1>
    %153 = vector.broadcast %cst_42 : f32 to vector<16x2048xf32>
    %154 = arith.select %152, %150, %153 : vector<16x2048xi1>, vector<16x2048xf32>
    %155 = arith.mulf %138, %154 : vector<16x2048xf32>
    %156 = arith.addf %155, %137 : vector<16x2048xf32>
    %157 = arith.mulf %138, %147 : vector<16x2048xf32>
    %c4_i32 = arith.constant 4 : i32
    %158 = vector.broadcast %c4_i32 : i32 to vector<16x1xi32>
    %159 = arith.cmpi sge, %38, %158 : vector<16x1xi32>
    %cst_43 = arith.constant 0.000000e+00 : f32
    %160 = vector.broadcast %cst_43 : f32 to vector<4x2048xf32>
    %161 = vector.extract_strided_slice %156 {offsets = [0, 0], sizes = [12, 2048], strides = [1, 1]} : vector<16x2048xf32> to vector<12x2048xf32>
    %162 = tpu.concatenate %160, %161 in 0 : vector<4x2048xf32>, vector<12x2048xf32> -> vector<16x2048xf32>
    %cst_44 = arith.constant 0.000000e+00 : f32
    %163 = vector.shape_cast %159 : vector<16x1xi1> to vector<16x1xi1>
    %164 = vector.broadcast %163 : vector<16x1xi1> to vector<16x2048xi1>
    %165 = vector.broadcast %cst_44 : f32 to vector<16x2048xf32>
    %166 = arith.select %164, %162, %165 : vector<16x2048xi1>, vector<16x2048xf32>
    %167 = arith.mulf %157, %166 : vector<16x2048xf32>
    %168 = arith.addf %167, %156 : vector<16x2048xf32>
    %169 = vector.extract_strided_slice %116 {offsets = [0, 2048], sizes = [16, 2048], strides = [1, 1]} : vector<16x4096xf32> to vector<16x2048xf32>
    %170 = arith.mulf %168, %169 : vector<16x2048xf32>
    %c0_45 = arith.constant 0 : index
    %c0_46 = arith.constant 0 : index
    %171 = vector.load %arg9[%c0_45, %c0_46] : memref<2048x128xf32, #tpu.memory_space<vmem>>, vector<2048x128xf32>
    %cst_47 = arith.constant dense<0.000000e+00> : vector<16x128xf32>
    %172 = tpu.matmul %170, %171, %cst_47 {dimension_numbers = #tpu.dot_dimension_numbers<[1], [0], [0], [1], [0, 0, 1, 1], [], []>} : vector<16x2048xf32>, vector<2048x128xf32>, vector<16x128xf32> -> vector<16x128xf32>
    %173 = vector.broadcast %6 : vector<1x128xf32> to vector<16x128xf32>
    %174 = arith.mulf %88, %173 : vector<16x128xf32>
    %175 = arith.addf %172, %174 : vector<16x128xf32>
    %176 = vector.extract_strided_slice %88 {offsets = [0, 64], sizes = [16, 64], strides = [1, 1]} : vector<16x128xf32> to vector<16x64xf32>
    %177 = vector.extract_strided_slice %88 {offsets = [0, 0], sizes = [16, 64], strides = [1, 1]} : vector<16x128xf32> to vector<16x64xf32>
    %178 = tpu.concatenate %176, %177 in 1 : vector<16x64xf32>, vector<16x64xf32> -> vector<16x128xf32>
    %179 = arith.mulf %175, %178 : vector<16x128xf32>
    %180 = arith.truncf %179 : vector<16x128xf32> to vector<16x128xbf16>
    %c0_48 = arith.constant 0 : index
    %c0_49 = arith.constant 0 : index
    %181 = vector.load %arg6[%c0_48, %c0_49] : memref<128x32xbf16, #tpu.memory_space<vmem>>, vector<128x32xbf16>
    %cst_50 = arith.constant dense<0.000000e+00> : vector<16x32xf32>
    %182 = tpu.matmul %180, %181, %cst_50 {dimension_numbers = #tpu.dot_dimension_numbers<[1], [0], [0], [1], [0, 0, 1, 1], [], []>} : vector<16x128xbf16>, vector<128x32xbf16>, vector<16x32xf32> -> vector<16x32xf32>
    %183 = arith.addf %182, %0 : vector<16x32xf32>
    %c0_51 = arith.constant 0 : index
    %c0_52 = arith.constant 0 : index
    %184 = vector.load %arg10[%c0_51, %c0_52] : memref<16x32xf32, #tpu.memory_space<vmem>>, vector<16x32xf32>
    tpu.vector_store %arg10[%c0_51, %c0_52], %183 {strides = array<i32>} : memref<16x32xf32, #tpu.memory_space<vmem>>, vector<16x32xf32>,
    return
  }
  func.func @transform_0(%arg0: i32) -> (i32, i32) {
    %c0_i32 = arith.constant 0 : i32
    %c0_i32_0 = arith.constant 0 : i32
    return %arg0, %c0_i32 : i32, i32
  }
  func.func @transform_1(%arg0: i32) -> (i32, i32) {
    %c0_i32 = arith.constant 0 : i32
    %c0_i32_0 = arith.constant 0 : i32
    %c0_i32_1 = arith.constant 0 : i32
    return %c0_i32, %c0_i32_0 : i32, i32
  }
  func.func @transform_2(%arg0: i32) -> (i32, i32) {
    %c0_i32 = arith.constant 0 : i32
    %c0_i32_0 = arith.constant 0 : i32
    %c0_i32_1 = arith.constant 0 : i32
    return %c0_i32, %c0_i32_0 : i32, i32
  }
  func.func @transform_3(%arg0: i32) -> (i32, i32) {
    %c0_i32 = arith.constant 0 : i32
    %c0_i32_0 = arith.constant 0 : i32
    %c0_i32_1 = arith.constant 0 : i32
    return %c0_i32, %c0_i32_0 : i32, i32
  }
  func.func @transform_4(%arg0: i32) -> (i32, i32) {
    %c0_i32 = arith.constant 0 : i32
    %c0_i32_0 = arith.constant 0 : i32
    %c0_i32_1 = arith.constant 0 : i32
    return %c0_i32, %c0_i32_0 : i32, i32
  }
  func.func @transform_5(%arg0: i32) -> (i32, i32) {
    %c0_i32 = arith.constant 0 : i32
    %c0_i32_0 = arith.constant 0 : i32
    %c0_i32_1 = arith.constant 0 : i32
    return %c0_i32, %c0_i32_0 : i32, i32
  }
  func.func @transform_6(%arg0: i32) -> (i32, i32) {
    %c0_i32 = arith.constant 0 : i32
    %c0_i32_0 = arith.constant 0 : i32
    %c0_i32_1 = arith.constant 0 : i32
    return %c0_i32, %c0_i32_0 : i32, i32
  }
  func.func @transform_7(%arg0: i32) -> (i32, i32) {
    %c0_i32 = arith.constant 0 : i32
    %c0_i32_0 = arith.constant 0 : i32
    %c0_i32_1 = arith.constant 0 : i32
    return %c0_i32, %c0_i32_0 : i32, i32
  }
  func.func @transform_8(%arg0: i32) -> (i32, i32) {
    %c0_i32 = arith.constant 0 : i32
    %c0_i32_0 = arith.constant 0 : i32
    %c0_i32_1 = arith.constant 0 : i32
    return %c0_i32, %c0_i32_0 : i32, i32
  }
  func.func @transform_9(%arg0: i32) -> (i32, i32) {
    %c0_i32 = arith.constant 0 : i32
    %c0_i32_0 = arith.constant 0 : i32
    return %arg0, %c0_i32 : i32, i32
  }
}

</mosaic_0001>

<llo_original>
// kernel: tpu_custom_call.1
$region0: #{tpu_custom_call.1}
  #allocation0 [shape = 'u32[]', space=smem, size = 0x4, offset = 0x4, fixed_abs, tag = 'smem constant byte address 0x4 - core index']
  #allocation1 [shape = 'u32[72,128]{1,0:T(1,128)}', space=vmem, size = 0x9000, scoped, tag = 'internal scratch']
  %s0 = inlined_call_operand.vmem [shape: f32[32,32], index: 0, kind: input, shape index: {}]
  %s1 = inlined_call_operand.vmem [shape: f32[8,128], index: 1, kind: input, shape index: {}]
  %s2 = inlined_call_operand.vmem [shape: f32[1,2048], index: 2, kind: input, shape index: {}]
  %s3 = inlined_call_operand.vmem [shape: bf16[32,128], index: 3, kind: input, shape index: {}]
  %s4 = inlined_call_operand.vmem [shape: bf16[128,192], index: 4, kind: input, shape index: {}]
  %s5 = inlined_call_operand.vmem [shape: bf16[128,32], index: 5, kind: input, shape index: {}]
  %s6 = inlined_call_operand.hbm [shape: f32[128,2048], index: 6, kind: input, shape index: {}]
  %s7 = inlined_call_operand.hbm [shape: f32[64,4096], index: 7, kind: input, shape index: {}]
  %s8 = inlined_call_operand.hbm [shape: f32[2048,128], index: 8, kind: input, shape index: {}]
  %s9 = inlined_call_operand.hbm [shape: f32[32,32], index: 9, kind: output, shape index: {}]
  %s10 = sld [smem:[#allocation0]]
  $region81: #{tpu_custom_call.1} parent=0
    _
  %s12 = ssub.s32 1, %s10
  %s13 = scalar_select 0, %s12, %s10
  $region1: #{tpu_custom_call.1} parent=0
    #allocation2 [shape = 'u8[1048576]{0}', space=vmem, size = 0x100000, scoped, tag = 'input window, operand 6, single buffered']
    #allocation3 [shape = 's32[2]{0}', space=sflag, size = 0x8, scoped, tag = 'scoped memory for tpu_custom_call.1']
    #allocation4 [shape = 's32[2]{0}', space=sflag, size = 0x8, scoped, tag = 'scoped memory for tpu_custom_call.1']
    #allocation5 [shape = 'u8[1048576]{0}', space=vmem, size = 0x100000, scoped, tag = 'input window, operand 7, single buffered']
    #allocation6 [shape = 's32[1]{0}', space=sflag, size = 0x4, scoped, tag = 'scoped memory for tpu_custom_call.1']
    #allocation7 [shape = 'u8[1048576]{0}', space=vmem, size = 0x100000, scoped, tag = 'input window, operand 8, single buffered']
    #allocation8 [shape = 'u8[16384]{0}', space=vmem, size = 0x4000, scoped, tag = 'output window, operand 0']
    %14 = vsyncpa [#allocation3], 0
    %15 = vsyncpa [#allocation6], 0
    %16 = vsyncpa [#allocation4], 0
    %s17 = scalar_lea.sflag [#allocation4], 1
    %18 = vsyncpa %s17, 0
    loop: start=0, step=1, limit=4
    $region2: #{tpu_custom_call.1} parent=1 // loop_pre_header
      _
    $region3: #{tpu_custom_call.1} parent=1 // loop_header
      %s20 = sphi 0, %s24
      %p21 = scmp.ge.s32.totalorder %s20, 4
      %s30 = sphi 0, %s32
      %s33 = sphi 0, %s30
      %s34 = sphi 0, %s33
      %s50 = sphi 0, %s34
      %s54 = sphi 0, %s54
      %s56 = sphi 0, %s54
      %s57 = sphi 0, %s56
      %s71 = sphi 0, %s57
      %s75 = sphi 0, %s75
      %s77 = sphi 0, %s75
      %s78 = sphi 0, %s77
      %s92 = sphi 0, %s78
      %s96 = sphi 0, %s96
      %s98 = sphi 0, %s96
      %s99 = sphi 0, %s98
      %s113 = sphi 0, %s99
      %s117 = sphi 0, %s117
      %s119 = sphi 0, %s117
      %s120 = sphi 0, %s119
      %s134 = sphi 0, %s120
      %s138 = sphi 0, %s138
      %s140 = sphi 0, %s138
      %s141 = sphi 0, %s140
      %s155 = sphi 0, %s141
      %s159 = sphi 0, %s159
      %s161 = sphi 0, %s159
      %s162 = sphi 0, %s161
      %s176 = sphi 0, %s162
      %s180 = sphi 0, %s180
      %s182 = sphi 0, %s180
      %s183 = sphi 0, %s182
      %s197 = sphi 0, %s183
      %s201 = sphi 0, %s201
      %s203 = sphi 0, %s201
      %s204 = sphi 0, %s203
      %s218 = sphi 0, %s204
      %s224 = sphi 0, %s226
      %s227 = sphi 0, %s224
      %s228 = sphi 0, %s227
      %s244 = sphi 0, %s228
    $region4: #{tpu_custom_call.1} parent=1 // loop_header_branch
      %23 = sbr.rel (%p21) target = $region8
    $region5: #{tpu_custom_call.1} parent=1 // loop_body
      %s25 = ssub.s32 %s20, 1
      %s26 = ssub.s32 %s20, 2
      %s27 = sadd.s32 %s20, 1
      %s28 = ssub.s32 %s20, %s27
      %p29 = scmp.eq.s32.totalorder %s28, 0
      %s31 = sadd.s32 %s30, 1
      %s32 = scalar_select %p29, %s30, %s31
      %p35 = pneg %p29
      %p36 = scmp.eq.s32.totalorder %s20, 1
      %p37 = por %p35, %p36
      %p38 = scmp.ne.s32.totalorder %s30, %s33
      %p39 = scmp.eq.s32.totalorder %s20, 0
      %p40 = por %p38, %p39
      %p41 = scmp.ne.s32.totalorder %s30, %s33
      %p42 = scmp.eq.s32.totalorder %s25, 1
      %p43 = por %p41, %p42
      %p44 = scmp.ne.s32.totalorder %s33, %s34
      %p45 = scmp.eq.s32.totalorder %s25, 0
      %p46 = por %p44, %p45
      %p47 = scmp.ne.s32.totalorder %s33, %s34
      %p48 = scmp.eq.s32.totalorder %s26, 1
      %p49 = por %p47, %p48
      %p51 = scmp.ne.s32.totalorder %s34, %s50
      %p52 = scmp.eq.s32.totalorder %s26, 0
      %p53 = por %p51, %p52
      %s55 = sadd.s32 %s54, 1
      %p58 = scmp.eq.s32.totalorder %s20, 1
      %p59 = scmp.ne.s32.totalorder %s54, %s56
      %p60 = scmp.eq.s32.totalorder %s20, 0
      %p61 = por %p59, %p60
      %p62 = scmp.ne.s32.totalorder %s54, %s56
      %p63 = scmp.eq.s32.totalorder %s25, 1
      %p64 = por %p62, %p63
      %p65 = scmp.ne.s32.totalorder %s56, %s57
      %p66 = scmp.eq.s32.totalorder %s25, 0
      %p67 = por %p65, %p66
      %p68 = scmp.ne.s32.totalorder %s56, %s57
      %p69 = scmp.eq.s32.totalorder %s26, 1
      %p70 = por %p68, %p69
      %p72 = scmp.ne.s32.totalorder %s57, %s71
      %p73 = scmp.eq.s32.totalorder %s26, 0
      %p74 = por %p72, %p73
      %s76 = sadd.s32 %s75, 1
      %p79 = scmp.eq.s32.totalorder %s20, 1
      %p80 = scmp.ne.s32.totalorder %s75, %s77
      %p81 = scmp.eq.s32.totalorder %s20, 0
      %p82 = por %p80, %p81
      %p83 = scmp.ne.s32.totalorder %s75, %s77
      %p84 = scmp.eq.s32.totalorder %s25, 1
      %p85 = por %p83, %p84
      %p86 = scmp.ne.s32.totalorder %s77, %s78
      %p87 = scmp.eq.s32.totalorder %s25, 0
      %p88 = por %p86, %p87
      %p89 = scmp.ne.s32.totalorder %s77, %s78
      %p90 = scmp.eq.s32.totalorder %s26, 1
      %p91 = por %p89, %p90
      %p93 = scmp.ne.s32.totalorder %s78, %s92
      %p94 = scmp.eq.s32.totalorder %s26, 0
      %p95 = por %p93, %p94
      %s97 = sadd.s32 %s96, 1
      %p100 = scmp.eq.s32.totalorder %s20, 1
      %p101 = scmp.ne.s32.totalorder %s96, %s98
      %p102 = scmp.eq.s32.totalorder %s20, 0
      %p103 = por %p101, %p102
      %p104 = scmp.ne.s32.totalorder %s96, %s98
      %p105 = scmp.eq.s32.totalorder %s25, 1
      %p106 = por %p104, %p105
      %p107 = scmp.ne.s32.totalorder %s98, %s99
      %p108 = scmp.eq.s32.totalorder %s25, 0
      %p109 = por %p107, %p108
      %p110 = scmp.ne.s32.totalorder %s98, %s99
      %p111 = scmp.eq.s32.totalorder %s26, 1
      %p112 = por %p110, %p111
      %p114 = scmp.ne.s32.totalorder %s99, %s113
      %p115 = scmp.eq.s32.totalorder %s26, 0
      %p116 = por %p114, %p115
      %s118 = sadd.s32 %s117, 1
      %p121 = scmp.eq.s32.totalorder %s20, 1
      %p122 = scmp.ne.s32.totalorder %s117, %s119
      %p123 = scmp.eq.s32.totalorder %s20, 0
      %p124 = por %p122, %p123
      %p125 = scmp.ne.s32.totalorder %s117, %s119
      %p126 = scmp.eq.s32.totalorder %s25, 1
      %p127 = por %p125, %p126
      %p128 = scmp.ne.s32.totalorder %s119, %s120
      %p129 = scmp.eq.s32.totalorder %s25, 0
      %p130 = por %p128, %p129
      %p131 = scmp.ne.s32.totalorder %s119, %s120
      %p132 = scmp.eq.s32.totalorder %s26, 1
      %p133 = por %p131, %p132
      %p135 = scmp.ne.s32.totalorder %s120, %s134
      %p136 = scmp.eq.s32.totalorder %s26, 0
      %p137 = por %p135, %p136
      %s139 = sadd.s32 %s138, 1
      %p142 = scmp.eq.s32.totalorder %s20, 1
      %p143 = scmp.ne.s32.totalorder %s138, %s140
      %p144 = scmp.eq.s32.totalorder %s20, 0
      %p145 = por %p143, %p144
      %p146 = scmp.ne.s32.totalorder %s138, %s140
      %p147 = scmp.eq.s32.totalorder %s25, 1
      %p148 = por %p146, %p147
      %p149 = scmp.ne.s32.totalorder %s140, %s141
      %p150 = scmp.eq.s32.totalorder %s25, 0
      %p151 = por %p149, %p150
      %p152 = scmp.ne.s32.totalorder %s140, %s141
      %p153 = scmp.eq.s32.totalorder %s26, 1
      %p154 = por %p152, %p153
      %p156 = scmp.ne.s32.totalorder %s141, %s155
      %p157 = scmp.eq.s32.totalorder %s26, 0
      %p158 = por %p156, %p157
      %s160 = sadd.s32 %s159, 1
      %p163 = scmp.eq.s32.totalorder %s20, 1
      %p164 = scmp.ne.s32.totalorder %s159, %s161
      %p165 = scmp.eq.s32.totalorder %s20, 0
      %p166 = por %p164, %p165
      %p167 = scmp.ne.s32.totalorder %s159, %s161
      %p168 = scmp.eq.s32.totalorder %s25, 1
      %p169 = por %p167, %p168
      %p170 = scmp.ne.s32.totalorder %s161, %s162
      %p171 = scmp.eq.s32.totalorder %s25, 0
      %p172 = por %p170, %p171
      %p173 = scmp.ne.s32.totalorder %s161, %s162
      %p174 = scmp.eq.s32.totalorder %s26, 1
      %p175 = por %p173, %p174
      %p177 = scmp.ne.s32.totalorder %s162, %s176
      %p178 = scmp.eq.s32.totalorder %s26, 0
      %p179 = por %p177, %p178
      %s181 = sadd.s32 %s180, 1
      %p184 = scmp.eq.s32.totalorder %s20, 1
      %p185 = scmp.ne.s32.totalorder %s180, %s182
      %p186 = scmp.eq.s32.totalorder %s20, 0
      %p187 = por %p185, %p186
      %p188 = scmp.ne.s32.totalorder %s180, %s182
      %p189 = scmp.eq.s32.totalorder %s25, 1
      %p190 = por %p188, %p189
      %p191 = scmp.ne.s32.totalorder %s182, %s183
      %p192 = scmp.eq.s32.totalorder %s25, 0
      %p193 = por %p191, %p192
      %p194 = scmp.ne.s32.totalorder %s182, %s183
      %p195 = scmp.eq.s32.totalorder %s26, 1
      %p196 = por %p194, %p195
      %p198 = scmp.ne.s32.totalorder %s183, %s197
      %p199 = scmp.eq.s32.totalorder %s26, 0
      %p200 = por %p198, %p199
      %s202 = sadd.s32 %s201, 1
      %p205 = scmp.eq.s32.totalorder %s20, 1
      %p206 = scmp.ne.s32.totalorder %s201, %s203
      %p207 = scmp.eq.s32.totalorder %s20, 0
      %p208 = por %p206, %p207
      %p209 = scmp.ne.s32.totalorder %s201, %s203
      %p210 = scmp.eq.s32.totalorder %s25, 1
      %p211 = por %p209, %p210
      %p212 = scmp.ne.s32.totalorder %s203, %s204
      %p213 = scmp.eq.s32.totalorder %s25, 0
      %p214 = por %p212, %p213
      %p215 = scmp.ne.s32.totalorder %s203, %s204
      %p216 = scmp.eq.s32.totalorder %s26, 1
      %p217 = por %p215, %p216
      %p219 = scmp.ne.s32.totalorder %s204, %s218
      %p220 = scmp.eq.s32.totalorder %s26, 0
      %p221 = por %p219, %p220
      %s222 = ssub.s32 %s20, %s27
      %p223 = scmp.eq.s32.totalorder %s222, 0
      %s225 = sadd.s32 %s224, 1
      %s226 = scalar_select %p223, %s224, %s225
      %p229 = pneg %p223
      %p230 = scmp.eq.s32.totalorder %s20, 1
      %p231 = por %p229, %p230
      %p232 = scmp.ne.s32.totalorder %s224, %s227
      %p233 = scmp.eq.s32.totalorder %s20, 0
      %p234 = por %p232, %p233
      %p235 = scmp.ne.s32.totalorder %s224, %s227
      %p236 = scmp.eq.s32.totalorder %s25, 1
      %p237 = por %p235, %p236
      %p238 = scmp.ne.s32.totalorder %s227, %s228
      %p239 = scmp.eq.s32.totalorder %s25, 0
      %p240 = por %p238, %p239
      %p241 = scmp.ne.s32.totalorder %s227, %s228
      %p242 = scmp.eq.s32.totalorder %s26, 1
      %p243 = por %p241, %p242
      %p245 = scmp.ne.s32.totalorder %s228, %s244
      %p246 = scmp.eq.s32.totalorder %s26, 0
      %p247 = por %p245, %p246
      %p248 = scmp.le.s32.totalorder 1, %s20
      %p249 = scmp.lt.s32.totalorder %s20, 3
      %p250 = pnand %p248, %p249
      %p251 = pneg %p250
      // Predicated region
      $region9: #{tpu_custom_call.1} parent=5 // pred_check
        _
      $region10: #{tpu_custom_call.1} parent=5 // pred_check_branch
        %253 = sbr.rel (%p250) target = $region12
      $region11: #{tpu_custom_call.1} parent=5 // pred_region
        %s254 = ssub.s32 %s20, 1
        // Predicated region
        $region13: #{tpu_custom_call.1} parent=11 // pred_check
          %p255 = pneg %p67
        $region14: #{tpu_custom_call.1} parent=11 // pred_check_branch
          %257 = sbr.rel (%p255) target = $region16
        $region15: #{tpu_custom_call.1} parent=11 // pred_region
          _
        $region16: #{tpu_custom_call.1} parent=11 // pred_fallthru
          _
        // Predicated region
        $region17: #{tpu_custom_call.1} parent=11 // pred_check
          %p258 = pneg %p88
        $region18: #{tpu_custom_call.1} parent=11 // pred_check_branch
          %260 = sbr.rel (%p258) target = $region20
        $region19: #{tpu_custom_call.1} parent=11 // pred_region
          _
        $region20: #{tpu_custom_call.1} parent=11 // pred_fallthru
          _
        // Predicated region
        $region21: #{tpu_custom_call.1} parent=11 // pred_check
          %p261 = pneg %p109
        $region22: #{tpu_custom_call.1} parent=11 // pred_check_branch
          %263 = sbr.rel (%p261) target = $region24
        $region23: #{tpu_custom_call.1} parent=11 // pred_region
          _
        $region24: #{tpu_custom_call.1} parent=11 // pred_fallthru
          _
        // Predicated region
        $region25: #{tpu_custom_call.1} parent=11 // pred_check
          %p264 = pneg %p130
        $region26: #{tpu_custom_call.1} parent=11 // pred_check_branch
          %266 = sbr.rel (%p264) target = $region28
        $region27: #{tpu_custom_call.1} parent=11 // pred_region
          _
        $region28: #{tpu_custom_call.1} parent=11 // pred_fallthru
          _
        // Predicated region
        $region29: #{tpu_custom_call.1} parent=11 // pred_check
          %p267 = pneg %p151
        $region30: #{tpu_custom_call.1} parent=11 // pred_check_branch
          %269 = sbr.rel (%p267) target = $region32
        $region31: #{tpu_custom_call.1} parent=11 // pred_region
          _
        $region32: #{tpu_custom_call.1} parent=11 // pred_fallthru
          _
        // Predicated region
        $region33: #{tpu_custom_call.1} parent=11 // pred_check
          %p270 = pneg %p172
        $region34: #{tpu_custom_call.1} parent=11 // pred_check_branch
          %272 = sbr.rel (%p270) target = $region36
        $region35: #{tpu_custom_call.1} parent=11 // pred_region
          %274 = vsyncadd [#allocation3], 0
          %s275 = sshll.u32 %s6, 4
          %s276 = int_to_ptr.hbm [resolvable:$true] %s275
          %s277 = sshll.u32 [#allocation2], 4
          %s278 = int_to_ptr.vmem [resolvable:$true] %s277
          %283 = dma.hbm_to_vmem [thread:$0]  %s276, 32768, %s278, [#allocation3], 2048, 2048, 128
        $region36: #{tpu_custom_call.1} parent=11 // pred_fallthru
          _
        // Predicated region
        $region37: #{tpu_custom_call.1} parent=11 // pred_check
          %p284 = pneg %p193
        $region38: #{tpu_custom_call.1} parent=11 // pred_check_branch
          %286 = sbr.rel (%p284) target = $region40
        $region39: #{tpu_custom_call.1} parent=11 // pred_region
          %288 = vsyncadd [#allocation6], 0
          %s289 = sshll.u32 %s7, 4
          %s290 = int_to_ptr.hbm [resolvable:$true] %s289
          %s291 = sshll.u32 [#allocation5], 4
          %s292 = int_to_ptr.vmem [resolvable:$true] %s291
          %297 = dma.hbm_to_vmem [thread:$0]  %s290, 32768, %s292, [#allocation6], 4096, 4096, 256
        $region40: #{tpu_custom_call.1} parent=11 // pred_fallthru
          _
        // Predicated region
        $region41: #{tpu_custom_call.1} parent=11 // pred_check
          %p298 = pneg %p214
        $region42: #{tpu_custom_call.1} parent=11 // pred_check_branch
          %300 = sbr.rel (%p298) target = $region44
        $region43: #{tpu_custom_call.1} parent=11 // pred_region
          %302 = vsyncadd [#allocation6], 0
          %s303 = sshll.u32 %s8, 4
          %s304 = int_to_ptr.hbm [resolvable:$true] %s303
          %s305 = sshll.u32 [#allocation7], 4
          %s306 = int_to_ptr.vmem [resolvable:$true] %s305
          %311 = dma.hbm_to_vmem [thread:$0]  %s304, 32768, %s306, [#allocation6], 128, 128, 8
        $region44: #{tpu_custom_call.1} parent=11 // pred_fallthru
          _
      $region12: #{tpu_custom_call.1} parent=5 // pred_fallthru
        _
      %p312 = scmp.lt.s32.totalorder %s20, 2
      // Predicated region
      $region45: #{tpu_custom_call.1} parent=5 // pred_check
        %p313 = pneg %p312
      $region46: #{tpu_custom_call.1} parent=5 // pred_check_branch
        %315 = sbr.rel (%p313) target = $region48
      $region47: #{tpu_custom_call.1} parent=5 // pred_region
        // Predicated region
        $region49: #{tpu_custom_call.1} parent=47 // pred_check
          %p316 = pneg %p40
        $region50: #{tpu_custom_call.1} parent=47 // pred_check_branch
          %318 = sbr.rel (%p316) target = $region52
        $region51: #{tpu_custom_call.1} parent=47 // pred_region
          %s319 = smul.u32 2, %s20
          %p320 = scmp.lt.s32.totalorder %s319, 3
          %s321 = scalar_select %p320, %s319, 3
          %s322 = smul.addr %s321, 8
          %s323 = scalar_lea.vmem %s0, %s322
          %s324 = smul.u32 2, %s20
        $region52: #{tpu_custom_call.1} parent=47 // pred_fallthru
          _
      $region48: #{tpu_custom_call.1} parent=5 // pred_fallthru
        _
      %p325 = scmp.le.s32.totalorder 1, %s20
      %p326 = scmp.lt.s32.totalorder %s20, 3
      %p327 = pnand %p325, %p326
      %p328 = pneg %p327
      // Predicated region
      $region53: #{tpu_custom_call.1} parent=5 // pred_check
        _
      $region54: #{tpu_custom_call.1} parent=5 // pred_check_branch
        %330 = sbr.rel (%p327) target = $region56
      $region55: #{tpu_custom_call.1} parent=5 // pred_region
        %s331 = ssub.s32 %s20, 1
        // Predicated region
        $region57: #{tpu_custom_call.1} parent=55 // pred_check
          %p332 = pneg %p172
        $region58: #{tpu_custom_call.1} parent=55 // pred_check_branch
          %334 = sbr.rel (%p332) target = $region60
        $region59: #{tpu_custom_call.1} parent=55 // pred_region
          %336 = dma.done [#allocation3], 32768
        $region60: #{tpu_custom_call.1} parent=55 // pred_fallthru
          _
        // Predicated region
        $region61: #{tpu_custom_call.1} parent=55 // pred_check
          %p337 = pneg %p193
        $region62: #{tpu_custom_call.1} parent=55 // pred_check_branch
          %339 = sbr.rel (%p337) target = $region64
        $region63: #{tpu_custom_call.1} parent=55 // pred_region
          %341 = dma.done [#allocation6], 32768
        $region64: #{tpu_custom_call.1} parent=55 // pred_fallthru
          _
        // Predicated region
        $region65: #{tpu_custom_call.1} parent=55 // pred_check
          %p342 = pneg %p214
        $region66: #{tpu_custom_call.1} parent=55 // pred_check_branch
          %344 = sbr.rel (%p342) target = $region68
        $region67: #{tpu_custom_call.1} parent=55 // pred_region
          %346 = dma.done [#allocation6], 32768
        $region68: #{tpu_custom_call.1} parent=55 // pred_fallthru
          _
        %s347 = smul.u32 2, %s25
        %p348 = scmp.lt.s32.totalorder %s347, 3
        %s349 = scalar_select %p348, %s347, 3
        %s350 = smul.addr %s349, 8
        %s351 = scalar_lea.vmem %s0, %s350
        %p352 = pneg %p46
        %p353 = pneg %p43
        %p354 = pneg %p67
        %p355 = pneg %p64
        %p356 = pneg %p88
        %p357 = pneg %p85
        %p358 = pneg %p109
        %p359 = pneg %p106
        %p360 = pneg %p130
        %p361 = pneg %p127
        %p362 = pneg %p151
        %p363 = pneg %p148
        %p364 = pneg %p172
        %p365 = pneg %p169
        %p366 = pneg %p193
        %p367 = pneg %p190
        %p368 = pneg %p214
        %p369 = pneg %p211
        %p370 = pneg %p240
        %p371 = pneg %p237
        %s372 = sand.u32 %s227, 1
        %s373 = scalar_lea.sflag [#allocation4], %s372
        %s374 = sand.u32 %s227, 1
        %s375 = smul.addr %s374, 16
        %s376 = scalar_lea.vmem [#allocation8], %s375
        %s377 = smul.u32 2, %s25
        %p378 = scmp.lt.s32.totalorder %s377, 3
        %s379 = scalar_select %p378, %s377, 3
        %s380 = smul.addr %s379, 8
        %s381 = scalar_lea.vmem %s0, %s380
        %s382 = smul.u32 2, %s25
        %s383 = smul.u32 2, %s25
        %v385 = vld [vmem:[%s381] sm:$0xff]
        %v386 = vld [vmem:[%s381 + $0x8] sm:$0xff]
        %v387 = vld [vmem:[%s1] sm:$0xff]
        %v388 = vmul.f32 %v385, %v385
        %v389 = vmul.f32 %v386, %v386
        %vm390 = vcmask 261120
        %v391 = vsel %vm390, %v388, 0.0
        %392 = vadd.xlane.f32.xlu0 %v391
        %v393 = vpop.xlane.xlu0 %392
        %v394 = vsel %vm390, %v389, 0.0
        %395 = vadd.xlane.f32.xlu0 %v394
        %v396 = vpop.xlane.xlu0 %395
        %v397 = vrcp.pop 32.0
        %v398 = vmul.f32 32.0, %v397
        %v399 = vsub.f32 1.0, %v398
        %v400 = vmul.f32 %v397, %v399
        %v401 = vadd.f32 %v397, %v400
        %vm402 = vweird.f32 %v397
        %v403 = vsel %vm402, %v397, %v401
        %v404 = vmul.f32 %v393, %v403
        %v405 = vmul.f32 %v396, %v403
        %v406 = vadd.f32 %v404, 1e-05
        %v407 = vadd.f32 %v405, 1e-05
        %v408 = vrsqrt.pop %v406
        %v409 = vmul.f32 %v408, %v406
        %v410 = vmul.f32 %v409, %v408
        %v411 = vmul.f32 0.5, %v410
        %v412 = vsub.f32 1.5, %v411
        %v413 = vmul.f32 %v408, %v412
        %vm414 = vweird.f32 %v406
        %vm415 = vweird.f32 %v408
        %vm416 = vmor %vm414, %vm415
        %v417 = vsel %vm416, %v408, %v413
        %v418 = vrsqrt.pop %v407
        %v419 = vmul.f32 %v418, %v407
        %v420 = vmul.f32 %v419, %v418
        %v421 = vmul.f32 0.5, %v420
        %v422 = vsub.f32 1.5, %v421
        %v423 = vmul.f32 %v418, %v422
        %vm424 = vweird.f32 %v407
        %vm425 = vweird.f32 %v418
        %vm426 = vmor %vm424, %vm425
        %v427 = vsel %vm426, %v418, %v423
        %v428 = vmul.f32 %v385, %v417
        %v429 = vmul.f32 %v386, %v427
        %v430 = vperm.slane %v387, 0
        %v431 = vmul.f32 %v428, %v430
        %v432 = vmul.f32 %v429, %v430
        %v433 = vpack.c.bf16 %v432, %v431
        %v434 = vld [vmem:[%s3] sm:$0xf]
        %v435 = vld [vmem:[%s3 + $0x4] sm:$0xf]
        %v436 = vld [vmem:[%s3 + $0x8] sm:$0xf]
        %v437 = vld [vmem:[%s3 + $0xc] sm:$0xf]
        %v442 = vunpack.c.l.b16 %v434
        %v443 = vunpack.c.l.b16 %v435
        %v444 = vunpack.c.l.b16 %v436
        %v445 = vunpack.c.l.b16 %v437
        %v446 = vpack.c.b16 %v443, %v442
        %v447 = vpack.c.b16 %v445, %v444
        %v451 = vsel %vm390, %v433, 0
        %453 = vmatpush.bf16.msra.mxu0 0
        %454 = vmatpush.bf16.msra.mxu0 0
        %455 = vmatpush.bf16.msra.mxu0 0
        %456 = vmatpush.bf16.msra.mxu0 0
        %457 = vmatpush.bf16.msra.mxu0 0
        %458 = vmatpush.bf16.msra.mxu0 0
        %459 = vmatpush.bf16.msra.mxu0 %v447
        %460 = vmatpush.bf16.msra.mxu0 %v446
        %461 = vmatmul.bf16.gmra.mxu0 %v451
        %v462 = vpop.f32.mrf.mxu0
        %v463 = vadd.f32 0.0, %v462
        %v464 = vpop.f32.mrf.mxu0
        %v465 = vadd.f32 0.0, %v464
        %466 = vdwg.mxu0
        %v467 = vlaneseq
        %v468 = vshrl.u32 %v467, 7
        %v469 = vadd.s32 %v468, 8
        %vm470 = vcmp.lt.s32.totalorder %v468, 0
        %v471 = vsub.s32 0, %v468
        %v472 = vsel %vm470, %v471, %v468
        %v473 = vshrl.u32 %v472, 3
        %v474 = vand.u32 %v472, 7
        %v475 = vsub.s32 0, %v474
        %v476 = vsel %vm470, %v475, %v474
        %vm477 = vcmp.lt.s32.totalorder %v469, 0
        %v478 = vsub.s32 0, %v469
        %v479 = vsel %vm477, %v478, %v469
        %v480 = vshrl.u32 %v479, 3
        %v481 = vand.u32 %v479, 7
        %v482 = vsub.s32 0, %v481
        %v483 = vsel %vm477, %v482, %v481
        %vm484 = vcmp.ne.s32.totalorder %v476, 0
        %vm485 = vcmp.ne.s32.totalorder %v483, 0
        %vm486 = vcmp.lt.s32.totalorder %v476, 0
        %vm487 = vcmp.lt.s32.totalorder %v483, 0
        %vm488 = vmand %vm486, %vm484
        %vm489 = vmand %vm487, %vm485
        %v490 = vadd.s32 %v476, 8
        %v491 = vadd.s32 %v483, 8
        %v492 = vsel %vm488, %v490, %v476
        %v493 = vsel %vm489, %v491, %v483
        %vm496 = vcmask 1042432
        %v497 = vrot.slane %v463, 5
        %v498 = vrot.slane %v465, 5
        %v499 = vsel %vm496, %v497, %v498
        %v502 = vsel %vm496, 0.0, %v497
        %vm503 = vcmp.ge.s32.totalorder %v492, 3
        %vm504 = vcmp.ge.s32.totalorder %v493, 3
        %v505 = vsel %vm503, 1, 0
        %v506 = vsel %vm504, 1, 0
        %vm507 = vcmp.eq.s32.totalorder %v505, 1
        %vm508 = vcmp.eq.s32.totalorder %v506, 1
        %v509 = vsel %vm507, %v502, 0.0
        %v510 = vsel %vm508, %v499, 0.0
        %v511 = vperm.slane %v387, 1
        %v512 = vmul.f32 %v509, %v511
        %v513 = vmul.f32 %v510, %v511
        %v514 = vperm.slane %v387, 5
        %v515 = vadd.f32 %v514, %v512
        %v516 = vadd.f32 %v514, %v513
        %vm517 = vcmask 1041408
        %v518 = vrot.slane %v463, 6
        %v519 = vrot.slane %v465, 6
        %v520 = vsel %vm517, %v518, %v519
        %v523 = vsel %vm517, 0.0, %v518
        %vm524 = vcmp.ge.s32.totalorder %v492, 2
        %vm525 = vcmp.ge.s32.totalorder %v493, 2
        %v526 = vsel %vm524, 1, 0
        %v527 = vsel %vm525, 1, 0
        %vm528 = vcmp.eq.s32.totalorder %v526, 1
        %vm529 = vcmp.eq.s32.totalorder %v527, 1
        %v530 = vsel %vm528, %v523, 0.0
        %v531 = vsel %vm529, %v520, 0.0
        %v532 = vperm.slane %v387, 2
        %v533 = vmul.f32 %v530, %v532
        %v534 = vmul.f32 %v531, %v532
        %v535 = vadd.f32 %v515, %v533
        %v536 = vadd.f32 %v516, %v534
        %vm537 = vcmask 1040384
        %v538 = vrot.slane %v463, 7
        %v539 = vrot.slane %v465, 7
        %v540 = vsel %vm537, %v538, %v539
        %v543 = vsel %vm537, 0.0, %v538
        %vm544 = vcmp.ge.s32.totalorder %v492, 1
        %vm545 = vcmp.ge.s32.totalorder %v493, 1
        %v546 = vsel %vm544, 1, 0
        %v547 = vsel %vm545, 1, 0
        %vm548 = vcmp.eq.s32.totalorder %v546, 1
        %vm549 = vcmp.eq.s32.totalorder %v547, 1
        %v550 = vsel %vm548, %v543, 0.0
        %v551 = vsel %vm549, %v540, 0.0
        %v552 = vperm.slane %v387, 3
        %v553 = vmul.f32 %v550, %v552
        %v554 = vmul.f32 %v551, %v552
        %v555 = vadd.f32 %v535, %v553
        %v556 = vadd.f32 %v536, %v554
        %v557 = vperm.slane %v387, 4
        %v558 = vmul.f32 %v463, %v557
        %v559 = vmul.f32 %v465, %v557
        %v560 = vadd.f32 %v555, %v558
        %v561 = vadd.f32 %v556, %v559
        %v562 = vxor.u32 %v560, 2147483648
        %v563 = vxor.u32 %v561, 2147483648
        %v564 = vmul.f32 %v562, 1.442695
        %v565 = vpow.pop %v564
        %v566 = vmul.f32 %v563, 1.442695
        %v567 = vpow.pop %v566
        %v568 = vadd.f32 %v565, 1.0
        %v569 = vadd.f32 %v567, 1.0
        %v570 = vrcp.pop %v568
        %v571 = vmul.f32 %v568, %v570
        %v572 = vsub.f32 1.0, %v571
        %v573 = vmul.f32 %v570, %v572
        %v574 = vadd.f32 %v570, %v573
        %vm575 = vweird.f32 %v568
        %vm576 = vweird.f32 %v570
        %vm577 = vmor %vm575, %vm576
        %v578 = vsel %vm577, %v570, %v574
        %v579 = vand.u32 2147483647, %v568
        %vm580 = vcmp.eq.f32.partialorder %v579, 8.507059e+37
        %v581 = vand.u32 %v568, 2147483648
        %v582 = vor.u32 1.1754944e-38, %v581
        %v583 = vsel %vm580, %v582, %v578
        %v584 = vmul.f32 1.0, %v583
        %v585 = vrcp.pop %v569
        %v586 = vmul.f32 %v569, %v585
        %v587 = vsub.f32 1.0, %v586
        %v588 = vmul.f32 %v585, %v587
        %v589 = vadd.f32 %v585, %v588
        %vm590 = vweird.f32 %v569
        %vm591 = vweird.f32 %v585
        %vm592 = vmor %vm590, %vm591
        %v593 = vsel %vm592, %v585, %v589
        %v594 = vand.u32 2147483647, %v569
        %vm595 = vcmp.eq.f32.partialorder %v594, 8.507059e+37
        %v596 = vand.u32 %v569, 2147483648
        %v597 = vor.u32 1.1754944e-38, %v596
        %v598 = vsel %vm595, %v597, %v593
        %v599 = vmul.f32 1.0, %v598
        %v600 = vmul.f32 %v560, %v584
        %v601 = vmul.f32 %v561, %v599
        %v602 = vpack.c.bf16 %v601, %v600
        %v603 = vld [vmem:[%s4] sm:$0xff]
        %v604 = vld [vmem:[%s4 + $0x8] sm:$0xff]
        %v605 = vld [vmem:[%s4 + $0x10] sm:$0xff]
        %v606 = vld [vmem:[%s4 + $0x18] sm:$0xff]
        %v607 = vld [vmem:[%s4 + $0x20] sm:$0xff]
        %v608 = vld [vmem:[%s4 + $0x28] sm:$0xff]
        %v609 = vld [vmem:[%s4 + $0x30] sm:$0xff]
        %v610 = vld [vmem:[%s4 + $0x38] sm:$0xff]
        %v611 = vld [vmem:[%s4 + $0x40] sm:$0xff]
        %v612 = vld [vmem:[%s4 + $0x48] sm:$0xff]
        %v613 = vld [vmem:[%s4 + $0x50] sm:$0xff]
        %v614 = vld [vmem:[%s4 + $0x58] sm:$0xff]
        %v615 = vld [vmem:[%s4 + $0x60] sm:$0xff]
        %v616 = vld [vmem:[%s4 + $0x68] sm:$0xff]
        %v617 = vld [vmem:[%s4 + $0x70] sm:$0xff]
        %v618 = vld [vmem:[%s4 + $0x78] sm:$0xff]
        %v635 = vunpack.c.l.b16 %v603
        %v636 = vunpack.c.h.b16 %v603
        %v637 = vunpack.c.l.b16 %v604
        %v638 = vunpack.c.h.b16 %v604
        %v639 = vunpack.c.l.b16 %v605
        %v640 = vunpack.c.h.b16 %v605
        %v641 = vunpack.c.l.b16 %v606
        %v642 = vunpack.c.h.b16 %v606
        %v643 = vunpack.c.l.b16 %v607
        %v644 = vunpack.c.h.b16 %v607
        %v645 = vunpack.c.l.b16 %v608
        %v646 = vunpack.c.h.b16 %v608
        %v647 = vunpack.c.l.b16 %v609
        %v648 = vunpack.c.h.b16 %v609
        %v649 = vunpack.c.l.b16 %v610
        %v650 = vunpack.c.h.b16 %v610
        %v651 = vunpack.c.l.b16 %v611
        %v652 = vunpack.c.h.b16 %v611
        %v653 = vunpack.c.l.b16 %v612
        %v654 = vunpack.c.h.b16 %v612
        %v655 = vunpack.c.l.b16 %v613
        %v656 = vunpack.c.h.b16 %v613
        %v657 = vunpack.c.l.b16 %v614
        %v658 = vunpack.c.h.b16 %v614
        %v659 = vunpack.c.l.b16 %v615
        %v660 = vunpack.c.h.b16 %v615
        %v661 = vunpack.c.l.b16 %v616
        %v662 = vunpack.c.h.b16 %v616
        %v663 = vunpack.c.l.b16 %v617
        %v664 = vunpack.c.h.b16 %v617
        %v665 = vunpack.c.l.b16 %v618
        %v666 = vunpack.c.h.b16 %v618
        %v667 = vpack.c.b16 %v637, %v635
        %v668 = vpack.c.b16 %v638, %v636
        %v669 = vpack.c.b16 %v641, %v639
        %v670 = vpack.c.b16 %v642, %v640
        %v671 = vpack.c.b16 %v645, %v643
        %v672 = vpack.c.b16 %v646, %v644
        %v673 = vpack.c.b16 %v649, %v647
        %v674 = vpack.c.b16 %v650, %v648
        %v675 = vpack.c.b16 %v653, %v651
        %v676 = vpack.c.b16 %v654, %v652
        %v677 = vpack.c.b16 %v657, %v655
        %v678 = vpack.c.b16 %v658, %v656
        %v679 = vpack.c.b16 %v661, %v659
        %v680 = vpack.c.b16 %v662, %v660
        %v681 = vpack.c.b16 %v665, %v663
        %v682 = vpack.c.b16 %v666, %v664
        %699 = vmatpush.bf16.msra.mxu0 %v681
        %700 = vmatpush.bf16.msra.mxu0 %v679
        %701 = vmatpush.bf16.msra.mxu0 %v677
        %702 = vmatpush.bf16.msra.mxu0 %v675
        %703 = vmatpush.bf16.msra.mxu0 %v673
        %704 = vmatpush.bf16.msra.mxu0 %v671
        %705 = vmatpush.bf16.msra.mxu0 %v669
        %706 = vmatpush.bf16.msra.mxu0 %v667
        %707 = vmatmul.bf16.gmra.mxu0 %v602
        %v708 = vpop.f32.mrf.mxu0
        %v709 = vadd.f32 0.0, %v708
        %v710 = vpop.f32.mrf.mxu0
        %v711 = vadd.f32 0.0, %v710
        %712 = vdwg.mxu0
        %713 = vmatpush.bf16.msra.mxu0 %v682
        %714 = vmatpush.bf16.msra.mxu0 %v680
        %715 = vmatpush.bf16.msra.mxu0 %v678
        %716 = vmatpush.bf16.msra.mxu0 %v676
        %717 = vmatpush.bf16.msra.mxu0 %v674
        %718 = vmatpush.bf16.msra.mxu0 %v672
        %719 = vmatpush.bf16.msra.mxu0 %v670
        %720 = vmatpush.bf16.msra.mxu0 %v668
        %721 = vmatmul.bf16.gmra.mxu0 %v602
        %v722 = vpop.f32.mrf.mxu0
        %v723 = vadd.f32 0.0, %v722
        %v724 = vpop.f32.mrf.mxu0
        %v725 = vadd.f32 0.0, %v724
        %726 = vdwg.mxu0
        %v727 = vperm.slane %v387, 6
        %v728 = vadd.f32 %v709, %v727
        %v729 = vadd.f32 %v711, %v727
        %v730 = vmax.f32 %v728, 0.0
        %v731 = vmax.f32 %v729, 0.0
        %v732 = vand.u32 2147483647, %v728
        %v733 = vand.u32 2147483647, %v729
        %v734 = vsub.f32 0.0, %v732
        %v735 = vsub.f32 0.0, %v733
        %v736 = vmul.f32 %v734, 1.442695
        %v737 = vpow.pop %v736
        %v738 = vmul.f32 %v735, 1.442695
        %v739 = vpow.pop %v738
        %v740 = vadd.f32 %v737, 1.0
        %v741 = vadd.f32 %v739, 1.0
        %v742 = vlog2.pop %v740
        %v743 = vmul.f32 %v742, 0.6931472
        %v744 = vlog2.pop %v741
        %v745 = vmul.f32 %v744, 0.6931472
        %v746 = vadd.f32 %v730, %v743
        %v747 = vadd.f32 %v731, %v745
        %v748 = vmul.f32 %v746, %v600
        %v749 = vmul.f32 %v747, %v601
        %v750 = vld [vmem:[#allocation2] sm:$0xff]
        %v751 = vld [vmem:[#allocation2 + $0x8] sm:$0xff]
        %v752 = vld [vmem:[#allocation2 + $0x10] sm:$0xff]
        %v753 = vld [vmem:[#allocation2 + $0x18] sm:$0xff]
        %v754 = vld [vmem:[#allocation2 + $0x20] sm:$0xff]
        %v755 = vld [vmem:[#allocation2 + $0x28] sm:$0xff]
        %v756 = vld [vmem:[#allocation2 + $0x30] sm:$0xff]
        %v757 = vld [vmem:[#allocation2 + $0x38] sm:$0xff]
        %v758 = vld [vmem:[#allocation2 + $0x40] sm:$0xff]
        %v759 = vld [vmem:[#allocation2 + $0x48] sm:$0xff]
        %v760 = vld [vmem:[#allocation2 + $0x50] sm:$0xff]
        %v761 = vld [vmem:[#allocation2 + $0x58] sm:$0xff]
        %v762 = vld [vmem:[#allocation2 + $0x60] sm:$0xff]
        %v763 = vld [vmem:[#allocation2 + $0x68] sm:$0xff]
        %v764 = vld [vmem:[#allocation2 + $0x70] sm:$0xff]
        %v765 = vld [vmem:[#allocation2 + $0x78] sm:$0xff]
        %v766 = vld [vmem:[#allocation2 + $0x80] sm:$0xff]
        %v767 = vld [vmem:[#allocation2 + $0x88] sm:$0xff]
        %v768 = vld [vmem:[#allocation2 + $0x90] sm:$0xff]
        %v769 = vld [vmem:[#allocation2 + $0x98] sm:$0xff]
        %v770 = vld [vmem:[#allocation2 + $0xa0] sm:$0xff]
        %v771 = vld [vmem:[#allocation2 + $0xa8] sm:$0xff]
        %v772 = vld [vmem:[#allocation2 + $0xb0] sm:$0xff]
        %v773 = vld [vmem:[#allocation2 + $0xb8] sm:$0xff]
        %v774 = vld [vmem:[#allocation2 + $0xc0] sm:$0xff]
        %v775 = vld [vmem:[#allocation2 + $0xc8] sm:$0xff]
        %v776 = vld [vmem:[#allocation2 + $0xd0] sm:$0xff]
        %v777 = vld [vmem:[#allocation2 + $0xd8] sm:$0xff]
        %v778 = vld [vmem:[#allocation2 + $0xe0] sm:$0xff]
        %v779 = vld [vmem:[#allocation2 + $0xe8] sm:$0xff]
        %v780 = vld [vmem:[#allocation2 + $0xf0] sm:$0xff]
        %v781 = vld [vmem:[#allocation2 + $0xf8] sm:$0xff]
        %v782 = vld [vmem:[#allocation2 + $0x100] sm:$0xff]
        %v783 = vld [vmem:[#allocation2 + $0x108] sm:$0xff]
        %v784 = vld [vmem:[#allocation2 + $0x110] sm:$0xff]
        %v785 = vld [vmem:[#allocation2 + $0x118] sm:$0xff]
        %v786 = vld [vmem:[#allocation2 + $0x120] sm:$0xff]
        %v787 = vld [vmem:[#allocation2 + $0x128] sm:$0xff]
        %v788 = vld [vmem:[#allocation2 + $0x130] sm:$0xff]
        %v789 = vld [vmem:[#allocation2 + $0x138] sm:$0xff]
        %v790 = vld [vmem:[#allocation2 + $0x140] sm:$0xff]
        %v791 = vld [vmem:[#allocation2 + $0x148] sm:$0xff]
        %v792 = vld [vmem:[#allocation2 + $0x150] sm:$0xff]
        %v793 = vld [vmem:[#allocation2 + $0x158] sm:$0xff]
        %v794 = vld [vmem:[#allocation2 + $0x160] sm:$0xff]
        %v795 = vld [vmem:[#allocation2 + $0x168] sm:$0xff]
        %v796 = vld [vmem:[#allocation2 + $0x170] sm:$0xff]
        %v797 = vld [vmem:[#allocation2 + $0x178] sm:$0xff]
        %v798 = vld [vmem:[#allocation2 + $0x180] sm:$0xff]
        %v799 = vld [vmem:[#allocation2 + $0x188] sm:$0xff]
        %v800 = vld [vmem:[#allocation2 + $0x190] sm:$0xff]
        %v801 = vld [vmem:[#allocation2 + $0x198] sm:$0xff]
        %v802 = vld [vmem:[#allocation2 + $0x1a0] sm:$0xff]
        %v803 = vld [vmem:[#allocation2 + $0x1a8] sm:$0xff]
        %v804 = vld [vmem:[#allocation2 + $0x1b0] sm:$0xff]
        %v805 = vld [vmem:[#allocation2 + $0x1b8] sm:$0xff]
        %v806 = vld [vmem:[#allocation2 + $0x1c0] sm:$0xff]
        %v807 = vld [vmem:[#allocation2 + $0x1c8] sm:$0xff]
        %v808 = vld [vmem:[#allocation2 + $0x1d0] sm:$0xff]
        %v809 = vld [vmem:[#allocation2 + $0x1d8] sm:$0xff]
        %v810 = vld [vmem:[#allocation2 + $0x1e0] sm:$0xff]
        %v811 = vld [vmem:[#allocation2 + $0x1e8] sm:$0xff]
        %v812 = vld [vmem:[#allocation2 + $0x1f0] sm:$0xff]
        %v813 = vld [vmem:[#allocation2 + $0x1f8] sm:$0xff]
        %v814 = vld [vmem:[#allocation2 + $0x200] sm:$0xff]
        %v815 = vld [vmem:[#allocation2 + $0x208] sm:$0xff]
        %v816 = vld [vmem:[#allocation2 + $0x210] sm:$0xff]
        %v817 = vld [vmem:[#allocation2 + $0x218] sm:$0xff]
        %v818 = vld [vmem:[#allocation2 + $0x220] sm:$0xff]
        %v819 = vld [vmem:[#allocation2 + $0x228] sm:$0xff]
        %v820 = vld [vmem:[#allocation2 + $0x230] sm:$0xff]
        %v821 = vld [vmem:[#allocation2 + $0x238] sm:$0xff]
        %v822 = vld [vmem:[#allocation2 + $0x240] sm:$0xff]
        %v823 = vld [vmem:[#allocation2 + $0x248] sm:$0xff]
        %v824 = vld [vmem:[#allocation2 + $0x250] sm:$0xff]
        %v825 = vld [vmem:[#allocation2 + $0x258] sm:$0xff]
        %v826 = vld [vmem:[#allocation2 + $0x260] sm:$0xff]
        %v827 = vld [vmem:[#allocation2 + $0x268] sm:$0xff]
        %v828 = vld [vmem:[#allocation2 + $0x270] sm:$0xff]
        %v829 = vld [vmem:[#allocation2 + $0x278] sm:$0xff]
        %v830 = vld [vmem:[#allocation2 + $0x280] sm:$0xff]
        %v831 = vld [vmem:[#allocation2 + $0x288] sm:$0xff]
        %v832 = vld [vmem:[#allocation2 + $0x290] sm:$0xff]
        %v833 = vld [vmem:[#allocation2 + $0x298] sm:$0xff]
        %v834 = vld [vmem:[#allocation2 + $0x2a0] sm:$0xff]
        %v835 = vld [vmem:[#allocation2 + $0x2a8] sm:$0xff]
        %v836 = vld [vmem:[#allocation2 + $0x2b0] sm:$0xff]
        %v837 = vld [vmem:[#allocation2 + $0x2b8] sm:$0xff]
        %v838 = vld [vmem:[#allocation2 + $0x2c0] sm:$0xff]
        %v839 = vld [vmem:[#allocation2 + $0x2c8] sm:$0xff]
        %v840 = vld [vmem:[#allocation2 + $0x2d0] sm:$0xff]
        %v841 = vld [vmem:[#allocation2 + $0x2d8] sm:$0xff]
        %v842 = vld [vmem:[#allocation2 + $0x2e0] sm:$0xff]
        %v843 = vld [vmem:[#allocation2 + $0x2e8] sm:$0xff]
        %v844 = vld [vmem:[#allocation2 + $0x2f0] sm:$0xff]
        %v845 = vld [vmem:[#allocation2 + $0x2f8] sm:$0xff]
        %v846 = vld [vmem:[#allocation2 + $0x300] sm:$0xff]
        %v847 = vld [vmem:[#allocation2 + $0x308] sm:$0xff]
        %v848 = vld [vmem:[#allocation2 + $0x310] sm:$0xff]
        %v849 = vld [vmem:[#allocation2 + $0x318] sm:$0xff]
        %v850 = vld [vmem:[#allocation2 + $0x320] sm:$0xff]
        %v851 = vld [vmem:[#allocation2 + $0x328] sm:$0xff]
        %v852 = vld [vmem:[#allocation2 + $0x330] sm:$0xff]
        %v853 = vld [vmem:[#allocation2 + $0x338] sm:$0xff]
        %v854 = vld [vmem:[#allocation2 + $0x340] sm:$0xff]
        %v855 = vld [vmem:[#allocation2 + $0x348] sm:$0xff]
        %v856 = vld [vmem:[#allocation2 + $0x350] sm:$0xff]
        %v857 = vld [vmem:[#allocation2 + $0x358] sm:$0xff]
        %v858 = vld [vmem:[#allocation2 + $0x360] sm:$0xff]
        %v859 = vld [vmem:[#allocation2 + $0x368] sm:$0xff]
        %v860 = vld [vmem:[#allocation2 + $0x370] sm:$0xff]
        %v861 = vld [vmem:[#allocation2 + $0x378] sm:$0xff]
        %v862 = vld [vmem:[#allocation2 + $0x380] sm:$0xff]
        %v863 = vld [vmem:[#allocation2 + $0x388] sm:$0xff]
        %v864 = vld [vmem:[#allocation2 + $0x390] sm:$0xff]
        %v865 = vld [vmem:[#allocation2 + $0x398] sm:$0xff]
        %v866 = vld [vmem:[#allocation2 + $0x3a0] sm:$0xff]
        %v867 = vld [vmem:[#allocation2 + $0x3a8] sm:$0xff]
        %v868 = vld [vmem:[#allocation2 + $0x3b0] sm:$0xff]
        %v869 = vld [vmem:[#allocation2 + $0x3b8] sm:$0xff]
        %v870 = vld [vmem:[#allocation2 + $0x3c0] sm:$0xff]
        %v871 = vld [vmem:[#allocation2 + $0x3c8] sm:$0xff]
        %v872 = vld [vmem:[#allocation2 + $0x3d0] sm:$0xff]
        %v873 = vld [vmem:[#allocation2 + $0x3d8] sm:$0xff]
        %v874 = vld [vmem:[#allocation2 + $0x3e0] sm:$0xff]
        %v875 = vld [vmem:[#allocation2 + $0x3e8] sm:$0xff]
        %v876 = vld [vmem:[#allocation2 + $0x3f0] sm:$0xff]
        %v877 = vld [vmem:[#allocation2 + $0x3f8] sm:$0xff]
        %v878 = vld [vmem:[#allocation2 + $0x400] sm:$0xff]
        %v879 = vld [vmem:[#allocation2 + $0x408] sm:$0xff]
        %v880 = vld [vmem:[#allocation2 + $0x410] sm:$0xff]
        %v881 = vld [vmem:[#allocation2 + $0x418] sm:$0xff]
        %v882 = vld [vmem:[#allocation2 + $0x420] sm:$0xff]
        %v883 = vld [vmem:[#allocation2 + $0x428] sm:$0xff]
        %v884 = vld [vmem:[#allocation2 + $0x430] sm:$0xff]
        %v885 = vld [vmem:[#allocation2 + $0x438] sm:$0xff]
        %v886 = vld [vmem:[#allocation2 + $0x440] sm:$0xff]
        %v887 = vld [vmem:[#allocation2 + $0x448] sm:$0xff]
        %v888 = vld [vmem:[#allocation2 + $0x450] sm:$0xff]
        %v889 = vld [vmem:[#allocation2 + $0x458] sm:$0xff]
        %v890 = vld [vmem:[#allocation2 + $0x460] sm:$0xff]
        %v891 = vld [vmem:[#allocation2 + $0x468] sm:$0xff]
        %v892 = vld [vmem:[#allocation2 + $0x470] sm:$0xff]
        %v893 = vld [vmem:[#allocation2 + $0x478] sm:$0xff]
        %v894 = vld [vmem:[#allocation2 + $0x480] sm:$0xff]
        %v895 = vld [vmem:[#allocation2 + $0x488] sm:$0xff]
        %v896 = vld [vmem:[#allocation2 + $0x490] sm:$0xff]
        %v897 = vld [vmem:[#allocation2 + $0x498] sm:$0xff]
        %v898 = vld [vmem:[#allocation2 + $0x4a0] sm:$0xff]
        %v899 = vld [vmem:[#allocation2 + $0x4a8] sm:$0xff]
        %v900 = vld [vmem:[#allocation2 + $0x4b0] sm:$0xff]
        %v901 = vld [vmem:[#allocation2 + $0x4b8] sm:$0xff]
        %v902 = vld [vmem:[#allocation2 + $0x4c0] sm:$0xff]
        %v903 = vld [vmem:[#allocation2 + $0x4c8] sm:$0xff]
        %v904 = vld [vmem:[#allocation2 + $0x4d0] sm:$0xff]
        %v905 = vld [vmem:[#allocation2 + $0x4d8] sm:$0xff]
        %v906 = vld [vmem:[#allocation2 + $0x4e0] sm:$0xff]
        %v907 = vld [vmem:[#allocation2 + $0x4e8] sm:$0xff]
        %v908 = vld [vmem:[#allocation2 + $0x4f0] sm:$0xff]
        %v909 = vld [vmem:[#allocation2 + $0x4f8] sm:$0xff]
        %v910 = vld [vmem:[#allocation2 + $0x500] sm:$0xff]
        %v911 = vld [vmem:[#allocation2 + $0x508] sm:$0xff]
        %v912 = vld [vmem:[#allocation2 + $0x510] sm:$0xff]
        %v913 = vld [vmem:[#allocation2 + $0x518] sm:$0xff]
        %v914 = vld [vmem:[#allocation2 + $0x520] sm:$0xff]
        %v915 = vld [vmem:[#allocation2 + $0x528] sm:$0xff]
        %v916 = vld [vmem:[#allocation2 + $0x530] sm:$0xff]
        %v917 = vld [vmem:[#allocation2 + $0x538] sm:$0xff]
        %v918 = vld [vmem:[#allocation2 + $0x540] sm:$0xff]
        %v919 = vld [vmem:[#allocation2 + $0x548] sm:$0xff]
        %v920 = vld [vmem:[#allocation2 + $0x550] sm:$0xff]
        %v921 = vld [vmem:[#allocation2 + $0x558] sm:$0xff]
        %v922 = vld [vmem:[#allocation2 + $0x560] sm:$0xff]
        %v923 = vld [vmem:[#allocation2 + $0x568] sm:$0xff]
        %v924 = vld [vmem:[#allocation2 + $0x570] sm:$0xff]
        %v925 = vld [vmem:[#allocation2 + $0x578] sm:$0xff]
        %v926 = vld [vmem:[#allocation2 + $0x580] sm:$0xff]
        %v927 = vld [vmem:[#allocation2 + $0x588] sm:$0xff]
        %v928 = vld [vmem:[#allocation2 + $0x590] sm:$0xff]
        %v929 = vld [vmem:[#allocation2 + $0x598] sm:$0xff]
        %v930 = vld [vmem:[#allocation2 + $0x5a0] sm:$0xff]
        %v931 = vld [vmem:[#allocation2 + $0x5a8] sm:$0xff]
        %v932 = vld [vmem:[#allocation2 + $0x5b0] sm:$0xff]
        %v933 = vld [vmem:[#allocation2 + $0x5b8] sm:$0xff]
        %v934 = vld [vmem:[#allocation2 + $0x5c0] sm:$0xff]
        %v935 = vld [vmem:[#allocation2 + $0x5c8] sm:$0xff]
        %v936 = vld [vmem:[#allocation2 + $0x5d0] sm:$0xff]
        %v937 = vld [vmem:[#allocation2 + $0x5d8] sm:$0xff]
        %v938 = vld [vmem:[#allocation2 + $0x5e0] sm:$0xff]
        %v939 = vld [vmem:[#allocation2 + $0x5e8] sm:$0xff]
        %v940 = vld [vmem:[#allocation2 + $0x5f0] sm:$0xff]
        %v941 = vld [vmem:[#allocation2 + $0x5f8] sm:$0xff]
        %v942 = vld [vmem:[#allocation2 + $0x600] sm:$0xff]
        %v943 = vld [vmem:[#allocation2 + $0x608] sm:$0xff]
        %v944 = vld [vmem:[#allocation2 + $0x610] sm:$0xff]
        %v945 = vld [vmem:[#allocation2 + $0x618] sm:$0xff]
        %v946 = vld [vmem:[#allocation2 + $0x620] sm:$0xff]
        %v947 = vld [vmem:[#allocation2 + $0x628] sm:$0xff]
        %v948 = vld [vmem:[#allocation2 + $0x630] sm:$0xff]
        %v949 = vld [vmem:[#allocation2 + $0x638] sm:$0xff]
        %v950 = vld [vmem:[#allocation2 + $0x640] sm:$0xff]
        %v951 = vld [vmem:[#allocation2 + $0x648] sm:$0xff]
        %v952 = vld [vmem:[#allocation2 + $0x650] sm:$0xff]
        %v953 = vld [vmem:[#allocation2 + $0x658] sm:$0xff]
        %v954 = vld [vmem:[#allocation2 + $0x660] sm:$0xff]
        %v955 = vld [vmem:[#allocation2 + $0x668] sm:$0xff]
        %v956 = vld [vmem:[#allocation2 + $0x670] sm:$0xff]
        %v957 = vld [vmem:[#allocation2 + $0x678] sm:$0xff]
        %v958 = vld [vmem:[#allocation2 + $0x680] sm:$0xff]
        %v959 = vld [vmem:[#allocation2 + $0x688] sm:$0xff]
        %v960 = vld [vmem:[#allocation2 + $0x690] sm:$0xff]
        %v961 = vld [vmem:[#allocation2 + $0x698] sm:$0xff]
        %v962 = vld [vmem:[#allocation2 + $0x6a0] sm:$0xff]
        %v963 = vld [vmem:[#allocation2 + $0x6a8] sm:$0xff]
        %v964 = vld [vmem:[#allocation2 + $0x6b0] sm:$0xff]
        %v965 = vld [vmem:[#allocation2 + $0x6b8] sm:$0xff]
        %v966 = vld [vmem:[#allocation2 + $0x6c0] sm:$0xff]
        %v967 = vld [vmem:[#allocation2 + $0x6c8] sm:$0xff]
        %v968 = vld [vmem:[#allocation2 + $0x6d0] sm:$0xff]
        %v969 = vld [vmem:[#allocation2 + $0x6d8] sm:$0xff]
        %v970 = vld [vmem:[#allocation2 + $0x6e0] sm:$0xff]
        %v971 = vld [vmem:[#allocation2 + $0x6e8] sm:$0xff]
        %v972 = vld [vmem:[#allocation2 + $0x6f0] sm:$0xff]
        %v973 = vld [vmem:[#allocation2 + $0x6f8] sm:$0xff]
        %v974 = vld [vmem:[#allocation2 + $0x700] sm:$0xff]
        %v975 = vld [vmem:[#allocation2 + $0x708] sm:$0xff]
        %v976 = vld [vmem:[#allocation2 + $0x710] sm:$0xff]
        %v977 = vld [vmem:[#allocation2 + $0x718] sm:$0xff]
        %v978 = vld [vmem:[#allocation2 + $0x720] sm:$0xff]
        %v979 = vld [vmem:[#allocation2 + $0x728] sm:$0xff]
        %v980 = vld [vmem:[#allocation2 + $0x730] sm:$0xff]
        %v981 = vld [vmem:[#allocation2 + $0x738] sm:$0xff]
        %v982 = vld [vmem:[#allocation2 + $0x740] sm:$0xff]
        %v983 = vld [vmem:[#allocation2 + $0x748] sm:$0xff]
        %v984 = vld [vmem:[#allocation2 + $0x750] sm:$0xff]
        %v985 = vld [vmem:[#allocation2 + $0x758] sm:$0xff]
        %v986 = vld [vmem:[#allocation2 + $0x760] sm:$0xff]
        %v987 = vld [vmem:[#allocation2 + $0x768] sm:$0xff]
        %v988 = vld [vmem:[#allocation2 + $0x770] sm:$0xff]
        %v989 = vld [vmem:[#allocation2 + $0x778] sm:$0xff]
        %v990 = vld [vmem:[#allocation2 + $0x780] sm:$0xff]
        %v991 = vld [vmem:[#allocation2 + $0x788] sm:$0xff]
        %v992 = vld [vmem:[#allocation2 + $0x790] sm:$0xff]
        %v993 = vld [vmem:[#allocation2 + $0x798] sm:$0xff]
        %v994 = vld [vmem:[#allocation2 + $0x7a0] sm:$0xff]
        %v995 = vld [vmem:[#allocation2 + $0x7a8] sm:$0xff]
        %v996 = vld [vmem:[#allocation2 + $0x7b0] sm:$0xff]
        %v997 = vld [vmem:[#allocation2 + $0x7b8] sm:$0xff]
        %v998 = vld [vmem:[#allocation2 + $0x7c0] sm:$0xff]
        %v999 = vld [vmem:[#allocation2 + $0x7c8] sm:$0xff]
        %v1000 = vld [vmem:[#allocation2 + $0x7d0] sm:$0xff]
        %v1001 = vld [vmem:[#allocation2 + $0x7d8] sm:$0xff]
        %v1002 = vld [vmem:[#allocation2 + $0x7e0] sm:$0xff]
        %v1003 = vld [vmem:[#allocation2 + $0x7e8] sm:$0xff]
        %v1004 = vld [vmem:[#allocation2 + $0x7f0] sm:$0xff]
        %v1005 = vld [vmem:[#allocation2 + $0x7f8] sm:$0xff]
        %1006 = vmatpush.msra.mxu0 %v990
        %1007 = vmatpush.msra.mxu0 %v974
        %1008 = vmatpush.msra.mxu0 %v958
        %1009 = vmatpush.msra.mxu0 %v942
        %1010 = vmatpush.msra.mxu0 %v926
        %1011 = vmatpush.msra.mxu0 %v910
        %1012 = vmatpush.msra.mxu0 %v894
        %1013 = vmatpush.msra.mxu0 %v878
        %1014 = vmatpush.msra.mxu0 %v862
        %1015 = vmatpush.msra.mxu0 %v846
        %1016 = vmatpush.msra.mxu0 %v830
        %1017 = vmatpush.msra.mxu0 %v814
        %1018 = vmatpush.msra.mxu0 %v798
        %1019 = vmatpush.msra.mxu0 %v782
        %1020 = vmatpush.msra.mxu0 %v766
        %1021 = vmatpush.msra.mxu0 %v750
        %1022 = vmatmul.f32.gmra.mxu0 %v746
        %v1023 = vpop.f32.mrf.mxu0
        %v1024 = vadd.f32 0.0, %v1023
        %1025 = vmatmul.f32.gmra.mxu0 %v747
        %v1026 = vpop.f32.mrf.mxu0
        %v1027 = vadd.f32 0.0, %v1026
        %1028 = vmatmul.f32.gmra.mxu0 %v748
        %v1029 = vpop.f32.mrf.mxu0
        %v1030 = vadd.f32 0.0, %v1029
        %1031 = vmatmul.f32.gmra.mxu0 %v749
        %v1032 = vpop.f32.mrf.mxu0
        %v1033 = vadd.f32 0.0, %v1032
        %1034 = vdwg.mxu0
        %1035 = vmatpush.msra.mxu0 %v991
        %1036 = vmatpush.msra.mxu0 %v975
        %1037 = vmatpush.msra.mxu0 %v959
        %1038 = vmatpush.msra.mxu0 %v943
        %1039 = vmatpush.msra.mxu0 %v927
        %1040 = vmatpush.msra.mxu0 %v911
        %1041 = vmatpush.msra.mxu0 %v895
        %1042 = vmatpush.msra.mxu0 %v879
        %1043 = vmatpush.msra.mxu0 %v863
        %1044 = vmatpush.msra.mxu0 %v847
        %1045 = vmatpush.msra.mxu0 %v831
        %1046 = vmatpush.msra.mxu0 %v815
        %1047 = vmatpush.msra.mxu0 %v799
        %1048 = vmatpush.msra.mxu0 %v783
        %1049 = vmatpush.msra.mxu0 %v767
        %1050 = vmatpush.msra.mxu0 %v751
        %1051 = vmatmul.f32.gmra.mxu0 %v746
        %v1052 = vpop.f32.mrf.mxu0
        %v1053 = vadd.f32 0.0, %v1052
        %1054 = vmatmul.f32.gmra.mxu0 %v747
        %v1055 = vpop.f32.mrf.mxu0
        %v1056 = vadd.f32 0.0, %v1055
        %1057 = vmatmul.f32.gmra.mxu0 %v748
        %v1058 = vpop.f32.mrf.mxu0
        %v1059 = vadd.f32 0.0, %v1058
        %1060 = vmatmul.f32.gmra.mxu0 %v749
        %v1061 = vpop.f32.mrf.mxu0
        %v1062 = vadd.f32 0.0, %v1061
        %1063 = vdwg.mxu0
        %1064 = vmatpush.msra.mxu0 %v992
        %1065 = vmatpush.msra.mxu0 %v976
        %1066 = vmatpush.msra.mxu0 %v960
        %1067 = vmatpush.msra.mxu0 %v944
        %1068 = vmatpush.msra.mxu0 %v928
        %1069 = vmatpush.msra.mxu0 %v912
        %1070 = vmatpush.msra.mxu0 %v896
        %1071 = vmatpush.msra.mxu0 %v880
        %1072 = vmatpush.msra.mxu0 %v864
        %1073 = vmatpush.msra.mxu0 %v848
        %1074 = vmatpush.msra.mxu0 %v832
        %1075 = vmatpush.msra.mxu0 %v816
        %1076 = vmatpush.msra.mxu0 %v800
        %1077 = vmatpush.msra.mxu0 %v784
        %1078 = vmatpush.msra.mxu0 %v768
        %1079 = vmatpush.msra.mxu0 %v752
        %1080 = vmatmul.f32.gmra.mxu0 %v746
        %v1081 = vpop.f32.mrf.mxu0
        %v1082 = vadd.f32 0.0, %v1081
        %1083 = vmatmul.f32.gmra.mxu0 %v747
        %v1084 = vpop.f32.mrf.mxu0
        %v1085 = vadd.f32 0.0, %v1084
        %1086 = vmatmul.f32.gmra.mxu0 %v748
        %v1087 = vpop.f32.mrf.mxu0
        %v1088 = vadd.f32 0.0, %v1087
        %1089 = vmatmul.f32.gmra.mxu0 %v749
        %v1090 = vpop.f32.mrf.mxu0
        %v1091 = vadd.f32 0.0, %v1090
        %1092 = vdwg.mxu0
        %1093 = vmatpush.msra.mxu0 %v993
        %1094 = vmatpush.msra.mxu0 %v977
        %1095 = vmatpush.msra.mxu0 %v961
        %1096 = vmatpush.msra.mxu0 %v945
        %1097 = vmatpush.msra.mxu0 %v929
        %1098 = vmatpush.msra.mxu0 %v913
        %1099 = vmatpush.msra.mxu0 %v897
        %1100 = vmatpush.msra.mxu0 %v881
        %1101 = vmatpush.msra.mxu0 %v865
        %1102 = vmatpush.msra.mxu0 %v849
        %1103 = vmatpush.msra.mxu0 %v833
        %1104 = vmatpush.msra.mxu0 %v817
        %1105 = vmatpush.msra.mxu0 %v801
        %1106 = vmatpush.msra.mxu0 %v785
        %1107 = vmatpush.msra.mxu0 %v769
        %1108 = vmatpush.msra.mxu0 %v753
        %1109 = vmatmul.f32.gmra.mxu0 %v746
        %v1110 = vpop.f32.mrf.mxu0
        %v1111 = vadd.f32 0.0, %v1110
        %1112 = vmatmul.f32.gmra.mxu0 %v747
        %v1113 = vpop.f32.mrf.mxu0
        %v1114 = vadd.f32 0.0, %v1113
        %1115 = vmatmul.f32.gmra.mxu0 %v748
        %v1116 = vpop.f32.mrf.mxu0
        %v1117 = vadd.f32 0.0, %v1116
        %1118 = vmatmul.f32.gmra.mxu0 %v749
        %v1119 = vpop.f32.mrf.mxu0
        %v1120 = vadd.f32 0.0, %v1119
        %1121 = vdwg.mxu0
        %1122 = vmatpush.msra.mxu0 %v994
        %1123 = vmatpush.msra.mxu0 %v978
        %1124 = vmatpush.msra.mxu0 %v962
        %1125 = vmatpush.msra.mxu0 %v946
        %1126 = vmatpush.msra.mxu0 %v930
        %1127 = vmatpush.msra.mxu0 %v914
        %1128 = vmatpush.msra.mxu0 %v898
        %1129 = vmatpush.msra.mxu0 %v882
        %1130 = vmatpush.msra.mxu0 %v866
        %1131 = vmatpush.msra.mxu0 %v850
        %1132 = vmatpush.msra.mxu0 %v834
        %1133 = vmatpush.msra.mxu0 %v818
        %1134 = vmatpush.msra.mxu0 %v802
        %1135 = vmatpush.msra.mxu0 %v786
        %1136 = vmatpush.msra.mxu0 %v770
        %1137 = vmatpush.msra.mxu0 %v754
        %1138 = vmatmul.f32.gmra.mxu0 %v746
        %v1139 = vpop.f32.mrf.mxu0
        %v1140 = vadd.f32 0.0, %v1139
        %1141 = vmatmul.f32.gmra.mxu0 %v747
        %v1142 = vpop.f32.mrf.mxu0
        %v1143 = vadd.f32 0.0, %v1142
        %1144 = vmatmul.f32.gmra.mxu0 %v748
        %v1145 = vpop.f32.mrf.mxu0
        %v1146 = vadd.f32 0.0, %v1145
        %1147 = vmatmul.f32.gmra.mxu0 %v749
        %v1148 = vpop.f32.mrf.mxu0
        %v1149 = vadd.f32 0.0, %v1148
        %1150 = vdwg.mxu0
        %1151 = vmatpush.msra.mxu0 %v995
        %1152 = vmatpush.msra.mxu0 %v979
        %1153 = vmatpush.msra.mxu0 %v963
        %1154 = vmatpush.msra.mxu0 %v947
        %1155 = vmatpush.msra.mxu0 %v931
        %1156 = vmatpush.msra.mxu0 %v915
        %1157 = vmatpush.msra.mxu0 %v899
        %1158 = vmatpush.msra.mxu0 %v883
        %1159 = vmatpush.msra.mxu0 %v867
        %1160 = vmatpush.msra.mxu0 %v851
        %1161 = vmatpush.msra.mxu0 %v835
        %1162 = vmatpush.msra.mxu0 %v819
        %1163 = vmatpush.msra.mxu0 %v803
        %1164 = vmatpush.msra.mxu0 %v787
        %1165 = vmatpush.msra.mxu0 %v771
        %1166 = vmatpush.msra.mxu0 %v755
        %1167 = vmatmul.f32.gmra.mxu0 %v746
        %v1168 = vpop.f32.mrf.mxu0
        %v1169 = vadd.f32 0.0, %v1168
        %1170 = vmatmul.f32.gmra.mxu0 %v747
        %v1171 = vpop.f32.mrf.mxu0
        %v1172 = vadd.f32 0.0, %v1171
        %1173 = vmatmul.f32.gmra.mxu0 %v748
        %v1174 = vpop.f32.mrf.mxu0
        %v1175 = vadd.f32 0.0, %v1174
        %1176 = vmatmul.f32.gmra.mxu0 %v749
        %v1177 = vpop.f32.mrf.mxu0
        %v1178 = vadd.f32 0.0, %v1177
        %1179 = vdwg.mxu0
        %1180 = vmatpush.msra.mxu0 %v996
        %1181 = vmatpush.msra.mxu0 %v980
        %1182 = vmatpush.msra.mxu0 %v964
        %1183 = vmatpush.msra.mxu0 %v948
        %1184 = vmatpush.msra.mxu0 %v932
        %1185 = vmatpush.msra.mxu0 %v916
        %1186 = vmatpush.msra.mxu0 %v900
        %1187 = vmatpush.msra.mxu0 %v884
        %1188 = vmatpush.msra.mxu0 %v868
        %1189 = vmatpush.msra.mxu0 %v852
        %1190 = vmatpush.msra.mxu0 %v836
        %1191 = vmatpush.msra.mxu0 %v820
        %1192 = vmatpush.msra.mxu0 %v804
        %1193 = vmatpush.msra.mxu0 %v788
        %1194 = vmatpush.msra.mxu0 %v772
        %1195 = vmatpush.msra.mxu0 %v756
        %1196 = vmatmul.f32.gmra.mxu0 %v746
        %v1197 = vpop.f32.mrf.mxu0
        %v1198 = vadd.f32 0.0, %v1197
        %1199 = vmatmul.f32.gmra.mxu0 %v747
        %v1200 = vpop.f32.mrf.mxu0
        %v1201 = vadd.f32 0.0, %v1200
        %1202 = vmatmul.f32.gmra.mxu0 %v748
        %v1203 = vpop.f32.mrf.mxu0
        %v1204 = vadd.f32 0.0, %v1203
        %1205 = vmatmul.f32.gmra.mxu0 %v749
        %v1206 = vpop.f32.mrf.mxu0
        %v1207 = vadd.f32 0.0, %v1206
        %1208 = vdwg.mxu0
        %1209 = vmatpush.msra.mxu0 %v997
        %1210 = vmatpush.msra.mxu0 %v981
        %1211 = vmatpush.msra.mxu0 %v965
        %1212 = vmatpush.msra.mxu0 %v949
        %1213 = vmatpush.msra.mxu0 %v933
        %1214 = vmatpush.msra.mxu0 %v917
        %1215 = vmatpush.msra.mxu0 %v901
        %1216 = vmatpush.msra.mxu0 %v885
        %1217 = vmatpush.msra.mxu0 %v869
        %1218 = vmatpush.msra.mxu0 %v853
        %1219 = vmatpush.msra.mxu0 %v837
        %1220 = vmatpush.msra.mxu0 %v821
        %1221 = vmatpush.msra.mxu0 %v805
        %1222 = vmatpush.msra.mxu0 %v789
        %1223 = vmatpush.msra.mxu0 %v773
        %1224 = vmatpush.msra.mxu0 %v757
        %1225 = vmatmul.f32.gmra.mxu0 %v746
        %v1226 = vpop.f32.mrf.mxu0
        %v1227 = vadd.f32 0.0, %v1226
        %1228 = vmatmul.f32.gmra.mxu0 %v747
        %v1229 = vpop.f32.mrf.mxu0
        %v1230 = vadd.f32 0.0, %v1229
        %1231 = vmatmul.f32.gmra.mxu0 %v748
        %v1232 = vpop.f32.mrf.mxu0
        %v1233 = vadd.f32 0.0, %v1232
        %1234 = vmatmul.f32.gmra.mxu0 %v749
        %v1235 = vpop.f32.mrf.mxu0
        %v1236 = vadd.f32 0.0, %v1235
        %1237 = vdwg.mxu0
        %1238 = vmatpush.msra.mxu0 %v998
        %1239 = vmatpush.msra.mxu0 %v982
        %1240 = vmatpush.msra.mxu0 %v966
        %1241 = vmatpush.msra.mxu0 %v950
        %1242 = vmatpush.msra.mxu0 %v934
        %1243 = vmatpush.msra.mxu0 %v918
        %1244 = vmatpush.msra.mxu0 %v902
        %1245 = vmatpush.msra.mxu0 %v886
        %1246 = vmatpush.msra.mxu0 %v870
        %1247 = vmatpush.msra.mxu0 %v854
        %1248 = vmatpush.msra.mxu0 %v838
        %1249 = vmatpush.msra.mxu0 %v822
        %1250 = vmatpush.msra.mxu0 %v806
        %1251 = vmatpush.msra.mxu0 %v790
        %1252 = vmatpush.msra.mxu0 %v774
        %1253 = vmatpush.msra.mxu0 %v758
        %1254 = vmatmul.f32.gmra.mxu0 %v746
        %v1255 = vpop.f32.mrf.mxu0
        %v1256 = vadd.f32 0.0, %v1255
        %1257 = vmatmul.f32.gmra.mxu0 %v747
        %v1258 = vpop.f32.mrf.mxu0
        %v1259 = vadd.f32 0.0, %v1258
        %1260 = vmatmul.f32.gmra.mxu0 %v748
        %v1261 = vpop.f32.mrf.mxu0
        %v1262 = vadd.f32 0.0, %v1261
        %1263 = vmatmul.f32.gmra.mxu0 %v749
        %v1264 = vpop.f32.mrf.mxu0
        %v1265 = vadd.f32 0.0, %v1264
        %1266 = vdwg.mxu0
        %1267 = vmatpush.msra.mxu0 %v999
        %1268 = vmatpush.msra.mxu0 %v983
        %1269 = vmatpush.msra.mxu0 %v967
        %1270 = vmatpush.msra.mxu0 %v951
        %1271 = vmatpush.msra.mxu0 %v935
        %1272 = vmatpush.msra.mxu0 %v919
        %1273 = vmatpush.msra.mxu0 %v903
        %1274 = vmatpush.msra.mxu0 %v887
        %1275 = vmatpush.msra.mxu0 %v871
        %1276 = vmatpush.msra.mxu0 %v855
        %1277 = vmatpush.msra.mxu0 %v839
        %1278 = vmatpush.msra.mxu0 %v823
        %1279 = vmatpush.msra.mxu0 %v807
        %1280 = vmatpush.msra.mxu0 %v791
        %1281 = vmatpush.msra.mxu0 %v775
        %1282 = vmatpush.msra.mxu0 %v759
        %1283 = vmatmul.f32.gmra.mxu0 %v746
        %v1284 = vpop.f32.mrf.mxu0
        %v1285 = vadd.f32 0.0, %v1284
        %1286 = vmatmul.f32.gmra.mxu0 %v747
        %v1287 = vpop.f32.mrf.mxu0
        %v1288 = vadd.f32 0.0, %v1287
        %1289 = vmatmul.f32.gmra.mxu0 %v748
        %v1290 = vpop.f32.mrf.mxu0
        %v1291 = vadd.f32 0.0, %v1290
        %1292 = vmatmul.f32.gmra.mxu0 %v749
        %v1293 = vpop.f32.mrf.mxu0
        %v1294 = vadd.f32 0.0, %v1293
        %1295 = vdwg.mxu0
        %1296 = vmatpush.msra.mxu0 %v1000
        %1297 = vmatpush.msra.mxu0 %v984
        %1298 = vmatpush.msra.mxu0 %v968
        %1299 = vmatpush.msra.mxu0 %v952
        %1300 = vmatpush.msra.mxu0 %v936
        %1301 = vmatpush.msra.mxu0 %v920
        %1302 = vmatpush.msra.mxu0 %v904
        %1303 = vmatpush.msra.mxu0 %v888
        %1304 = vmatpush.msra.mxu0 %v872
        %1305 = vmatpush.msra.mxu0 %v856
        %1306 = vmatpush.msra.mxu0 %v840
        %1307 = vmatpush.msra.mxu0 %v824
        %1308 = vmatpush.msra.mxu0 %v808
        %1309 = vmatpush.msra.mxu0 %v792
        %1310 = vmatpush.msra.mxu0 %v776
        %1311 = vmatpush.msra.mxu0 %v760
        %1312 = vmatmul.f32.gmra.mxu0 %v746
        %v1313 = vpop.f32.mrf.mxu0
        %v1314 = vadd.f32 0.0, %v1313
        %1315 = vmatmul.f32.gmra.mxu0 %v747
        %v1316 = vpop.f32.mrf.mxu0
        %v1317 = vadd.f32 0.0, %v1316
        %1318 = vmatmul.f32.gmra.mxu0 %v748
        %v1319 = vpop.f32.mrf.mxu0
        %v1320 = vadd.f32 0.0, %v1319
        %1321 = vmatmul.f32.gmra.mxu0 %v749
        %v1322 = vpop.f32.mrf.mxu0
        %v1323 = vadd.f32 0.0, %v1322
        %1324 = vdwg.mxu0
        %1325 = vmatpush.msra.mxu0 %v1001
        %1326 = vmatpush.msra.mxu0 %v985
        %1327 = vmatpush.msra.mxu0 %v969
        %1328 = vmatpush.msra.mxu0 %v953
        %1329 = vmatpush.msra.mxu0 %v937
        %1330 = vmatpush.msra.mxu0 %v921
        %1331 = vmatpush.msra.mxu0 %v905
        %1332 = vmatpush.msra.mxu0 %v889
        %1333 = vmatpush.msra.mxu0 %v873
        %1334 = vmatpush.msra.mxu0 %v857
        %1335 = vmatpush.msra.mxu0 %v841
        %1336 = vmatpush.msra.mxu0 %v825
        %1337 = vmatpush.msra.mxu0 %v809
        %1338 = vmatpush.msra.mxu0 %v793
        %1339 = vmatpush.msra.mxu0 %v777
        %1340 = vmatpush.msra.mxu0 %v761
        %1341 = vmatmul.f32.gmra.mxu0 %v746
        %v1342 = vpop.f32.mrf.mxu0
        %v1343 = vadd.f32 0.0, %v1342
        %1344 = vmatmul.f32.gmra.mxu0 %v747
        %v1345 = vpop.f32.mrf.mxu0
        %v1346 = vadd.f32 0.0, %v1345
        %1347 = vmatmul.f32.gmra.mxu0 %v748
        %v1348 = vpop.f32.mrf.mxu0
        %v1349 = vadd.f32 0.0, %v1348
        %1350 = vmatmul.f32.gmra.mxu0 %v749
        %v1351 = vpop.f32.mrf.mxu0
        %v1352 = vadd.f32 0.0, %v1351
        %1353 = vdwg.mxu0
        %1354 = vmatpush.msra.mxu0 %v1002
        %1355 = vmatpush.msra.mxu0 %v986
        %1356 = vmatpush.msra.mxu0 %v970
        %1357 = vmatpush.msra.mxu0 %v954
        %1358 = vmatpush.msra.mxu0 %v938
        %1359 = vmatpush.msra.mxu0 %v922
        %1360 = vmatpush.msra.mxu0 %v906
        %1361 = vmatpush.msra.mxu0 %v890
        %1362 = vmatpush.msra.mxu0 %v874
        %1363 = vmatpush.msra.mxu0 %v858
        %1364 = vmatpush.msra.mxu0 %v842
        %1365 = vmatpush.msra.mxu0 %v826
        %1366 = vmatpush.msra.mxu0 %v810
        %1367 = vmatpush.msra.mxu0 %v794
        %1368 = vmatpush.msra.mxu0 %v778
        %1369 = vmatpush.msra.mxu0 %v762
        %1370 = vmatmul.f32.gmra.mxu0 %v746
        %v1371 = vpop.f32.mrf.mxu0
        %v1372 = vadd.f32 0.0, %v1371
        %1373 = vmatmul.f32.gmra.mxu0 %v747
        %v1374 = vpop.f32.mrf.mxu0
        %v1375 = vadd.f32 0.0, %v1374
        %1376 = vmatmul.f32.gmra.mxu0 %v748
        %v1377 = vpop.f32.mrf.mxu0
        %v1378 = vadd.f32 0.0, %v1377
        %1379 = vmatmul.f32.gmra.mxu0 %v749
        %v1380 = vpop.f32.mrf.mxu0
        %v1381 = vadd.f32 0.0, %v1380
        %1382 = vdwg.mxu0
        %1383 = vmatpush.msra.mxu0 %v1003
        %1384 = vmatpush.msra.mxu0 %v987
        %1385 = vmatpush.msra.mxu0 %v971
        %1386 = vmatpush.msra.mxu0 %v955
        %1387 = vmatpush.msra.mxu0 %v939
        %1388 = vmatpush.msra.mxu0 %v923
        %1389 = vmatpush.msra.mxu0 %v907
        %1390 = vmatpush.msra.mxu0 %v891
        %1391 = vmatpush.msra.mxu0 %v875
        %1392 = vmatpush.msra.mxu0 %v859
        %1393 = vmatpush.msra.mxu0 %v843
        %1394 = vmatpush.msra.mxu0 %v827
        %1395 = vmatpush.msra.mxu0 %v811
        %1396 = vmatpush.msra.mxu0 %v795
        %1397 = vmatpush.msra.mxu0 %v779
        %1398 = vmatpush.msra.mxu0 %v763
        %1399 = vmatmul.f32.gmra.mxu0 %v746
        %v1400 = vpop.f32.mrf.mxu0
        %v1401 = vadd.f32 0.0, %v1400
        %1402 = vmatmul.f32.gmra.mxu0 %v747
        %v1403 = vpop.f32.mrf.mxu0
        %v1404 = vadd.f32 0.0, %v1403
        %1405 = vmatmul.f32.gmra.mxu0 %v748
        %v1406 = vpop.f32.mrf.mxu0
        %v1407 = vadd.f32 0.0, %v1406
        %1408 = vmatmul.f32.gmra.mxu0 %v749
        %v1409 = vpop.f32.mrf.mxu0
        %v1410 = vadd.f32 0.0, %v1409
        %1411 = vdwg.mxu0
        %1412 = vmatpush.msra.mxu0 %v1004
        %1413 = vmatpush.msra.mxu0 %v988
        %1414 = vmatpush.msra.mxu0 %v972
        %1415 = vmatpush.msra.mxu0 %v956
        %1416 = vmatpush.msra.mxu0 %v940
        %1417 = vmatpush.msra.mxu0 %v924
        %1418 = vmatpush.msra.mxu0 %v908
        %1419 = vmatpush.msra.mxu0 %v892
        %1420 = vmatpush.msra.mxu0 %v876
        %1421 = vmatpush.msra.mxu0 %v860
        %1422 = vmatpush.msra.mxu0 %v844
        %1423 = vmatpush.msra.mxu0 %v828
        %1424 = vmatpush.msra.mxu0 %v812
        %1425 = vmatpush.msra.mxu0 %v796
        %1426 = vmatpush.msra.mxu0 %v780
        %1427 = vmatpush.msra.mxu0 %v764
        %1428 = vmatmul.f32.gmra.mxu0 %v746
        %v1429 = vpop.f32.mrf.mxu0
        %v1430 = vadd.f32 0.0, %v1429
        %1431 = vmatmul.f32.gmra.mxu0 %v747
        %v1432 = vpop.f32.mrf.mxu0
        %v1433 = vadd.f32 0.0, %v1432
        %1434 = vmatmul.f32.gmra.mxu0 %v748
        %v1435 = vpop.f32.mrf.mxu0
        %v1436 = vadd.f32 0.0, %v1435
        %1437 = vmatmul.f32.gmra.mxu0 %v749
        %v1438 = vpop.f32.mrf.mxu0
        %v1439 = vadd.f32 0.0, %v1438
        %1440 = vdwg.mxu0
        %1441 = vmatpush.msra.mxu0 %v1005
        %1442 = vmatpush.msra.mxu0 %v989
        %1443 = vmatpush.msra.mxu0 %v973
        %1444 = vmatpush.msra.mxu0 %v957
        %1445 = vmatpush.msra.mxu0 %v941
        %1446 = vmatpush.msra.mxu0 %v925
        %1447 = vmatpush.msra.mxu0 %v909
        %1448 = vmatpush.msra.mxu0 %v893
        %1449 = vmatpush.msra.mxu0 %v877
        %1450 = vmatpush.msra.mxu0 %v861
        %1451 = vmatpush.msra.mxu0 %v845
        %1452 = vmatpush.msra.mxu0 %v829
        %1453 = vmatpush.msra.mxu0 %v813
        %1454 = vmatpush.msra.mxu0 %v797
        %1455 = vmatpush.msra.mxu0 %v781
        %1456 = vmatpush.msra.mxu0 %v765
        %1457 = vmatmul.f32.gmra.mxu0 %v746
        %v1458 = vpop.f32.mrf.mxu0
        %v1459 = vadd.f32 0.0, %v1458
        %1460 = vmatmul.f32.gmra.mxu0 %v747
        %v1461 = vpop.f32.mrf.mxu0
        %v1462 = vadd.f32 0.0, %v1461
        %1463 = vmatmul.f32.gmra.mxu0 %v748
        %v1464 = vpop.f32.mrf.mxu0
        %v1465 = vadd.f32 0.0, %v1464
        %1466 = vmatmul.f32.gmra.mxu0 %v749
        %v1467 = vpop.f32.mrf.mxu0
        %v1468 = vadd.f32 0.0, %v1467
        %1469 = vdwg.mxu0
        %v1470 = vld [vmem:[%s2] sm:$0xff]
        %v1471 = vld [vmem:[%s2 + $0x8] sm:$0xff]
        %v1474 = vperm.slane %v1470, 0
        %v1475 = vperm.slane %v1470, 1
        %v1476 = vperm.slane %v1470, 2
        %v1477 = vperm.slane %v1470, 3
        %v1478 = vperm.slane %v1470, 4
        %v1479 = vperm.slane %v1470, 5
        %v1480 = vperm.slane %v1470, 6
        %v1481 = vperm.slane %v1470, 7
        %v1482 = vperm.slane %v1471, 0
        %v1483 = vperm.slane %v1471, 1
        %v1484 = vperm.slane %v1471, 2
        %v1485 = vperm.slane %v1471, 3
        %v1486 = vperm.slane %v1471, 4
        %v1487 = vperm.slane %v1471, 5
        %v1488 = vperm.slane %v1471, 6
        %v1489 = vperm.slane %v1471, 7
        %v1506 = vmul.f32 %v1024, %v1474
        %v1507 = vmul.f32 %v1053, %v1475
        %v1508 = vmul.f32 %v1082, %v1476
        %v1509 = vmul.f32 %v1111, %v1477
        %v1510 = vmul.f32 %v1140, %v1478
        %v1511 = vmul.f32 %v1169, %v1479
        %v1512 = vmul.f32 %v1198, %v1480
        %v1513 = vmul.f32 %v1227, %v1481
        %v1514 = vmul.f32 %v1256, %v1482
        %v1515 = vmul.f32 %v1285, %v1483
        %v1516 = vmul.f32 %v1314, %v1484
        %v1517 = vmul.f32 %v1343, %v1485
        %v1518 = vmul.f32 %v1372, %v1486
        %v1519 = vmul.f32 %v1401, %v1487
        %v1520 = vmul.f32 %v1430, %v1488
        %v1521 = vmul.f32 %v1459, %v1489
        %v1522 = vmul.f32 %v1027, %v1474
        %v1523 = vmul.f32 %v1056, %v1475
        %v1524 = vmul.f32 %v1085, %v1476
        %v1525 = vmul.f32 %v1114, %v1477
        %v1526 = vmul.f32 %v1143, %v1478
        %v1527 = vmul.f32 %v1172, %v1479
        %v1528 = vmul.f32 %v1201, %v1480
        %v1529 = vmul.f32 %v1230, %v1481
        %v1530 = vmul.f32 %v1259, %v1482
        %v1531 = vmul.f32 %v1288, %v1483
        %v1532 = vmul.f32 %v1317, %v1484
        %v1533 = vmul.f32 %v1346, %v1485
        %v1534 = vmul.f32 %v1375, %v1486
        %v1535 = vmul.f32 %v1404, %v1487
        %v1536 = vmul.f32 %v1433, %v1488
        %v1537 = vmul.f32 %v1462, %v1489
        %v1538 = vmul.f32 %v1506, 1.442695
        %v1539 = vpow.pop %v1538
        %v1540 = vmul.f32 %v1507, 1.442695
        %v1541 = vpow.pop %v1540
        %v1542 = vmul.f32 %v1508, 1.442695
        %v1543 = vpow.pop %v1542
        %v1544 = vmul.f32 %v1509, 1.442695
        %v1545 = vpow.pop %v1544
        %v1546 = vmul.f32 %v1510, 1.442695
        %v1547 = vpow.pop %v1546
        %v1548 = vmul.f32 %v1511, 1.442695
        %v1549 = vpow.pop %v1548
        %v1550 = vmul.f32 %v1512, 1.442695
        %v1551 = vpow.pop %v1550
        %v1552 = vmul.f32 %v1513, 1.442695
        %v1553 = vpow.pop %v1552
        %v1554 = vmul.f32 %v1514, 1.442695
        %v1555 = vpow.pop %v1554
        %v1556 = vmul.f32 %v1515, 1.442695
        %v1557 = vpow.pop %v1556
        %v1558 = vmul.f32 %v1516, 1.442695
        %v1559 = vpow.pop %v1558
        %v1560 = vmul.f32 %v1517, 1.442695
        %v1561 = vpow.pop %v1560
        %v1562 = vmul.f32 %v1518, 1.442695
        %v1563 = vpow.pop %v1562
        %v1564 = vmul.f32 %v1519, 1.442695
        %v1565 = vpow.pop %v1564
        %v1566 = vmul.f32 %v1520, 1.442695
        %v1567 = vpow.pop %v1566
        %v1568 = vmul.f32 %v1521, 1.442695
        %v1569 = vpow.pop %v1568
        %v1570 = vmul.f32 %v1522, 1.442695
        %v1571 = vpow.pop %v1570
        %v1572 = vmul.f32 %v1523, 1.442695
        %v1573 = vpow.pop %v1572
        %v1574 = vmul.f32 %v1524, 1.442695
        %v1575 = vpow.pop %v1574
        %v1576 = vmul.f32 %v1525, 1.442695
        %v1577 = vpow.pop %v1576
        %v1578 = vmul.f32 %v1526, 1.442695
        %v1579 = vpow.pop %v1578
        %v1580 = vmul.f32 %v1527, 1.442695
        %v1581 = vpow.pop %v1580
        %v1582 = vmul.f32 %v1528, 1.442695
        %v1583 = vpow.pop %v1582
        %v1584 = vmul.f32 %v1529, 1.442695
        %v1585 = vpow.pop %v1584
        %v1586 = vmul.f32 %v1530, 1.442695
        %v1587 = vpow.pop %v1586
        %v1588 = vmul.f32 %v1531, 1.442695
        %v1589 = vpow.pop %v1588
        %v1590 = vmul.f32 %v1532, 1.442695
        %v1591 = vpow.pop %v1590
        %v1592 = vmul.f32 %v1533, 1.442695
        %v1593 = vpow.pop %v1592
        %v1594 = vmul.f32 %v1534, 1.442695
        %v1595 = vpow.pop %v1594
        %v1596 = vmul.f32 %v1535, 1.442695
        %v1597 = vpow.pop %v1596
        %v1598 = vmul.f32 %v1536, 1.442695
        %v1599 = vpow.pop %v1598
        %v1600 = vmul.f32 %v1537, 1.442695
        %v1601 = vpow.pop %v1600
        %v1602 = vld [vmem:[#allocation5] sm:$0xff]
        %v1603 = vld [vmem:[#allocation5 + $0x8] sm:$0xff]
        %v1604 = vld [vmem:[#allocation5 + $0x10] sm:$0xff]
        %v1605 = vld [vmem:[#allocation5 + $0x18] sm:$0xff]
        %v1606 = vld [vmem:[#allocation5 + $0x20] sm:$0xff]
        %v1607 = vld [vmem:[#allocation5 + $0x28] sm:$0xff]
        %v1608 = vld [vmem:[#allocation5 + $0x30] sm:$0xff]
        %v1609 = vld [vmem:[#allocation5 + $0x38] sm:$0xff]
        %v1610 = vld [vmem:[#allocation5 + $0x40] sm:$0xff]
        %v1611 = vld [vmem:[#allocation5 + $0x48] sm:$0xff]
        %v1612 = vld [vmem:[#allocation5 + $0x50] sm:$0xff]
        %v1613 = vld [vmem:[#allocation5 + $0x58] sm:$0xff]
        %v1614 = vld [vmem:[#allocation5 + $0x60] sm:$0xff]
        %v1615 = vld [vmem:[#allocation5 + $0x68] sm:$0xff]
        %v1616 = vld [vmem:[#allocation5 + $0x70] sm:$0xff]
        %v1617 = vld [vmem:[#allocation5 + $0x78] sm:$0xff]
        %v1618 = vld [vmem:[#allocation5 + $0x80] sm:$0xff]
        %v1619 = vld [vmem:[#allocation5 + $0x88] sm:$0xff]
        %v1620 = vld [vmem:[#allocation5 + $0x90] sm:$0xff]
        %v1621 = vld [vmem:[#allocation5 + $0x98] sm:$0xff]
        %v1622 = vld [vmem:[#allocation5 + $0xa0] sm:$0xff]
        %v1623 = vld [vmem:[#allocation5 + $0xa8] sm:$0xff]
        %v1624 = vld [vmem:[#allocation5 + $0xb0] sm:$0xff]
        %v1625 = vld [vmem:[#allocation5 + $0xb8] sm:$0xff]
        %v1626 = vld [vmem:[#allocation5 + $0xc0] sm:$0xff]
        %v1627 = vld [vmem:[#allocation5 + $0xc8] sm:$0xff]
        %v1628 = vld [vmem:[#allocation5 + $0xd0] sm:$0xff]
        %v1629 = vld [vmem:[#allocation5 + $0xd8] sm:$0xff]
        %v1630 = vld [vmem:[#allocation5 + $0xe0] sm:$0xff]
        %v1631 = vld [vmem:[#allocation5 + $0xe8] sm:$0xff]
        %v1632 = vld [vmem:[#allocation5 + $0xf0] sm:$0xff]
        %v1633 = vld [vmem:[#allocation5 + $0xf8] sm:$0xff]
        %v1634 = vld [vmem:[#allocation5 + $0x100] sm:$0xff]
        %v1635 = vld [vmem:[#allocation5 + $0x108] sm:$0xff]
        %v1636 = vld [vmem:[#allocation5 + $0x110] sm:$0xff]
        %v1637 = vld [vmem:[#allocation5 + $0x118] sm:$0xff]
        %v1638 = vld [vmem:[#allocation5 + $0x120] sm:$0xff]
        %v1639 = vld [vmem:[#allocation5 + $0x128] sm:$0xff]
        %v1640 = vld [vmem:[#allocation5 + $0x130] sm:$0xff]
        %v1641 = vld [vmem:[#allocation5 + $0x138] sm:$0xff]
        %v1642 = vld [vmem:[#allocation5 + $0x140] sm:$0xff]
        %v1643 = vld [vmem:[#allocation5 + $0x148] sm:$0xff]
        %v1644 = vld [vmem:[#allocation5 + $0x150] sm:$0xff]
        %v1645 = vld [vmem:[#allocation5 + $0x158] sm:$0xff]
        %v1646 = vld [vmem:[#allocation5 + $0x160] sm:$0xff]
        %v1647 = vld [vmem:[#allocation5 + $0x168] sm:$0xff]
        %v1648 = vld [vmem:[#allocation5 + $0x170] sm:$0xff]
        %v1649 = vld [vmem:[#allocation5 + $0x178] sm:$0xff]
        %v1650 = vld [vmem:[#allocation5 + $0x180] sm:$0xff]
        %v1651 = vld [vmem:[#allocation5 + $0x188] sm:$0xff]
        %v1652 = vld [vmem:[#allocation5 + $0x190] sm:$0xff]
        %v1653 = vld [vmem:[#allocation5 + $0x198] sm:$0xff]
        %v1654 = vld [vmem:[#allocation5 + $0x1a0] sm:$0xff]
        %v1655 = vld [vmem:[#allocation5 + $0x1a8] sm:$0xff]
        %v1656 = vld [vmem:[#allocation5 + $0x1b0] sm:$0xff]
        %v1657 = vld [vmem:[#allocation5 + $0x1b8] sm:$0xff]
        %v1658 = vld [vmem:[#allocation5 + $0x1c0] sm:$0xff]
        %v1659 = vld [vmem:[#allocation5 + $0x1c8] sm:$0xff]
        %v1660 = vld [vmem:[#allocation5 + $0x1d0] sm:$0xff]
        %v1661 = vld [vmem:[#allocation5 + $0x1d8] sm:$0xff]
        %v1662 = vld [vmem:[#allocation5 + $0x1e0] sm:$0xff]
        %v1663 = vld [vmem:[#allocation5 + $0x1e8] sm:$0xff]
        %v1664 = vld [vmem:[#allocation5 + $0x1f0] sm:$0xff]
        %v1665 = vld [vmem:[#allocation5 + $0x1f8] sm:$0xff]
        %v1666 = vld [vmem:[#allocation5 + $0x200] sm:$0xff]
        %v1667 = vld [vmem:[#allocation5 + $0x208] sm:$0xff]
        %v1668 = vld [vmem:[#allocation5 + $0x210] sm:$0xff]
        %v1669 = vld [vmem:[#allocation5 + $0x218] sm:$0xff]
        %v1670 = vld [vmem:[#allocation5 + $0x220] sm:$0xff]
        %v1671 = vld [vmem:[#allocation5 + $0x228] sm:$0xff]
        %v1672 = vld [vmem:[#allocation5 + $0x230] sm:$0xff]
        %v1673 = vld [vmem:[#allocation5 + $0x238] sm:$0xff]
        %v1674 = vld [vmem:[#allocation5 + $0x240] sm:$0xff]
        %v1675 = vld [vmem:[#allocation5 + $0x248] sm:$0xff]
        %v1676 = vld [vmem:[#allocation5 + $0x250] sm:$0xff]
        %v1677 = vld [vmem:[#allocation5 + $0x258] sm:$0xff]
        %v1678 = vld [vmem:[#allocation5 + $0x260] sm:$0xff]
        %v1679 = vld [vmem:[#allocation5 + $0x268] sm:$0xff]
        %v1680 = vld [vmem:[#allocation5 + $0x270] sm:$0xff]
        %v1681 = vld [vmem:[#allocation5 + $0x278] sm:$0xff]
        %v1682 = vld [vmem:[#allocation5 + $0x280] sm:$0xff]
        %v1683 = vld [vmem:[#allocation5 + $0x288] sm:$0xff]
        %v1684 = vld [vmem:[#allocation5 + $0x290] sm:$0xff]
        %v1685 = vld [vmem:[#allocation5 + $0x298] sm:$0xff]
        %v1686 = vld [vmem:[#allocation5 + $0x2a0] sm:$0xff]
        %v1687 = vld [vmem:[#allocation5 + $0x2a8] sm:$0xff]
        %v1688 = vld [vmem:[#allocation5 + $0x2b0] sm:$0xff]
        %v1689 = vld [vmem:[#allocation5 + $0x2b8] sm:$0xff]
        %v1690 = vld [vmem:[#allocation5 + $0x2c0] sm:$0xff]
        %v1691 = vld [vmem:[#allocation5 + $0x2c8] sm:$0xff]
        %v1692 = vld [vmem:[#allocation5 + $0x2d0] sm:$0xff]
        %v1693 = vld [vmem:[#allocation5 + $0x2d8] sm:$0xff]
        %v1694 = vld [vmem:[#allocation5 + $0x2e0] sm:$0xff]
        %v1695 = vld [vmem:[#allocation5 + $0x2e8] sm:$0xff]
        %v1696 = vld [vmem:[#allocation5 + $0x2f0] sm:$0xff]
        %v1697 = vld [vmem:[#allocation5 + $0x2f8] sm:$0xff]
        %v1698 = vld [vmem:[#allocation5 + $0x300] sm:$0xff]
        %v1699 = vld [vmem:[#allocation5 + $0x308] sm:$0xff]
        %v1700 = vld [vmem:[#allocation5 + $0x310] sm:$0xff]
        %v1701 = vld [vmem:[#allocation5 + $0x318] sm:$0xff]
        %v1702 = vld [vmem:[#allocation5 + $0x320] sm:$0xff]
        %v1703 = vld [vmem:[#allocation5 + $0x328] sm:$0xff]
        %v1704 = vld [vmem:[#allocation5 + $0x330] sm:$0xff]
        %v1705 = vld [vmem:[#allocation5 + $0x338] sm:$0xff]
        %v1706 = vld [vmem:[#allocation5 + $0x340] sm:$0xff]
        %v1707 = vld [vmem:[#allocation5 + $0x348] sm:$0xff]
        %v1708 = vld [vmem:[#allocation5 + $0x350] sm:$0xff]
        %v1709 = vld [vmem:[#allocation5 + $0x358] sm:$0xff]
        %v1710 = vld [vmem:[#allocation5 + $0x360] sm:$0xff]
        %v1711 = vld [vmem:[#allocation5 + $0x368] sm:$0xff]
        %v1712 = vld [vmem:[#allocation5 + $0x370] sm:$0xff]
        %v1713 = vld [vmem:[#allocation5 + $0x378] sm:$0xff]
        %v1714 = vld [vmem:[#allocation5 + $0x380] sm:$0xff]
        %v1715 = vld [vmem:[#allocation5 + $0x388] sm:$0xff]
        %v1716 = vld [vmem:[#allocation5 + $0x390] sm:$0xff]
        %v1717 = vld [vmem:[#allocation5 + $0x398] sm:$0xff]
        %v1718 = vld [vmem:[#allocation5 + $0x3a0] sm:$0xff]
        %v1719 = vld [vmem:[#allocation5 + $0x3a8] sm:$0xff]
        %v1720 = vld [vmem:[#allocation5 + $0x3b0] sm:$0xff]
        %v1721 = vld [vmem:[#allocation5 + $0x3b8] sm:$0xff]
        %v1722 = vld [vmem:[#allocation5 + $0x3c0] sm:$0xff]
        %v1723 = vld [vmem:[#allocation5 + $0x3c8] sm:$0xff]
        %v1724 = vld [vmem:[#allocation5 + $0x3d0] sm:$0xff]
        %v1725 = vld [vmem:[#allocation5 + $0x3d8] sm:$0xff]
        %v1726 = vld [vmem:[#allocation5 + $0x3e0] sm:$0xff]
        %v1727 = vld [vmem:[#allocation5 + $0x3e8] sm:$0xff]
        %v1728 = vld [vmem:[#allocation5 + $0x3f0] sm:$0xff]
        %v1729 = vld [vmem:[#allocation5 + $0x3f8] sm:$0xff]
        %v1730 = vld [vmem:[#allocation5 + $0x400] sm:$0xff]
        %v1731 = vld [vmem:[#allocation5 + $0x408] sm:$0xff]
        %v1732 = vld [vmem:[#allocation5 + $0x410] sm:$0xff]
        %v1733 = vld [vmem:[#allocation5 + $0x418] sm:$0xff]
        %v1734 = vld [vmem:[#allocation5 + $0x420] sm:$0xff]
        %v1735 = vld [vmem:[#allocation5 + $0x428] sm:$0xff]
        %v1736 = vld [vmem:[#allocation5 + $0x430] sm:$0xff]
        %v1737 = vld [vmem:[#allocation5 + $0x438] sm:$0xff]
        %v1738 = vld [vmem:[#allocation5 + $0x440] sm:$0xff]
        %v1739 = vld [vmem:[#allocation5 + $0x448] sm:$0xff]
        %v1740 = vld [vmem:[#allocation5 + $0x450] sm:$0xff]
        %v1741 = vld [vmem:[#allocation5 + $0x458] sm:$0xff]
        %v1742 = vld [vmem:[#allocation5 + $0x460] sm:$0xff]
        %v1743 = vld [vmem:[#allocation5 + $0x468] sm:$0xff]
        %v1744 = vld [vmem:[#allocation5 + $0x470] sm:$0xff]
        %v1745 = vld [vmem:[#allocation5 + $0x478] sm:$0xff]
        %v1746 = vld [vmem:[#allocation5 + $0x480] sm:$0xff]
        %v1747 = vld [vmem:[#allocation5 + $0x488] sm:$0xff]
        %v1748 = vld [vmem:[#allocation5 + $0x490] sm:$0xff]
        %v1749 = vld [vmem:[#allocation5 + $0x498] sm:$0xff]
        %v1750 = vld [vmem:[#allocation5 + $0x4a0] sm:$0xff]
        %v1751 = vld [vmem:[#allocation5 + $0x4a8] sm:$0xff]
        %v1752 = vld [vmem:[#allocation5 + $0x4b0] sm:$0xff]
        %v1753 = vld [vmem:[#allocation5 + $0x4b8] sm:$0xff]
        %v1754 = vld [vmem:[#allocation5 + $0x4c0] sm:$0xff]
        %v1755 = vld [vmem:[#allocation5 + $0x4c8] sm:$0xff]
        %v1756 = vld [vmem:[#allocation5 + $0x4d0] sm:$0xff]
        %v1757 = vld [vmem:[#allocation5 + $0x4d8] sm:$0xff]
        %v1758 = vld [vmem:[#allocation5 + $0x4e0] sm:$0xff]
        %v1759 = vld [vmem:[#allocation5 + $0x4e8] sm:$0xff]
        %v1760 = vld [vmem:[#allocation5 + $0x4f0] sm:$0xff]
        %v1761 = vld [vmem:[#allocation5 + $0x4f8] sm:$0xff]
        %v1762 = vld [vmem:[#allocation5 + $0x500] sm:$0xff]
        %v1763 = vld [vmem:[#allocation5 + $0x508] sm:$0xff]
        %v1764 = vld [vmem:[#allocation5 + $0x510] sm:$0xff]
        %v1765 = vld [vmem:[#allocation5 + $0x518] sm:$0xff]
        %v1766 = vld [vmem:[#allocation5 + $0x520] sm:$0xff]
        %v1767 = vld [vmem:[#allocation5 + $0x528] sm:$0xff]
        %v1768 = vld [vmem:[#allocation5 + $0x530] sm:$0xff]
        %v1769 = vld [vmem:[#allocation5 + $0x538] sm:$0xff]
        %v1770 = vld [vmem:[#allocation5 + $0x540] sm:$0xff]
        %v1771 = vld [vmem:[#allocation5 + $0x548] sm:$0xff]
        %v1772 = vld [vmem:[#allocation5 + $0x550] sm:$0xff]
        %v1773 = vld [vmem:[#allocation5 + $0x558] sm:$0xff]
        %v1774 = vld [vmem:[#allocation5 + $0x560] sm:$0xff]
        %v1775 = vld [vmem:[#allocation5 + $0x568] sm:$0xff]
        %v1776 = vld [vmem:[#allocation5 + $0x570] sm:$0xff]
        %v1777 = vld [vmem:[#allocation5 + $0x578] sm:$0xff]
        %v1778 = vld [vmem:[#allocation5 + $0x580] sm:$0xff]
        %v1779 = vld [vmem:[#allocation5 + $0x588] sm:$0xff]
        %v1780 = vld [vmem:[#allocation5 + $0x590] sm:$0xff]
        %v1781 = vld [vmem:[#allocation5 + $0x598] sm:$0xff]
        %v1782 = vld [vmem:[#allocation5 + $0x5a0] sm:$0xff]
        %v1783 = vld [vmem:[#allocation5 + $0x5a8] sm:$0xff]
        %v1784 = vld [vmem:[#allocation5 + $0x5b0] sm:$0xff]
        %v1785 = vld [vmem:[#allocation5 + $0x5b8] sm:$0xff]
        %v1786 = vld [vmem:[#allocation5 + $0x5c0] sm:$0xff]
        %v1787 = vld [vmem:[#allocation5 + $0x5c8] sm:$0xff]
        %v1788 = vld [vmem:[#allocation5 + $0x5d0] sm:$0xff]
        %v1789 = vld [vmem:[#allocation5 + $0x5d8] sm:$0xff]
        %v1790 = vld [vmem:[#allocation5 + $0x5e0] sm:$0xff]
        %v1791 = vld [vmem:[#allocation5 + $0x5e8] sm:$0xff]
        %v1792 = vld [vmem:[#allocation5 + $0x5f0] sm:$0xff]
        %v1793 = vld [vmem:[#allocation5 + $0x5f8] sm:$0xff]
        %v1794 = vld [vmem:[#allocation5 + $0x600] sm:$0xff]
        %v1795 = vld [vmem:[#allocation5 + $0x608] sm:$0xff]
        %v1796 = vld [vmem:[#allocation5 + $0x610] sm:$0xff]
        %v1797 = vld [vmem:[#allocation5 + $0x618] sm:$0xff]
        %v1798 = vld [vmem:[#allocation5 + $0x620] sm:$0xff]
        %v1799 = vld [vmem:[#allocation5 + $0x628] sm:$0xff]
        %v1800 = vld [vmem:[#allocation5 + $0x630] sm:$0xff]
        %v1801 = vld [vmem:[#allocation5 + $0x638] sm:$0xff]
        %v1802 = vld [vmem:[#allocation5 + $0x640] sm:$0xff]
        %v1803 = vld [vmem:[#allocation5 + $0x648] sm:$0xff]
        %v1804 = vld [vmem:[#allocation5 + $0x650] sm:$0xff]
        %v1805 = vld [vmem:[#allocation5 + $0x658] sm:$0xff]
        %v1806 = vld [vmem:[#allocation5 + $0x660] sm:$0xff]
        %v1807 = vld [vmem:[#allocation5 + $0x668] sm:$0xff]
        %v1808 = vld [vmem:[#allocation5 + $0x670] sm:$0xff]
        %v1809 = vld [vmem:[#allocation5 + $0x678] sm:$0xff]
        %v1810 = vld [vmem:[#allocation5 + $0x680] sm:$0xff]
        %v1811 = vld [vmem:[#allocation5 + $0x688] sm:$0xff]
        %v1812 = vld [vmem:[#allocation5 + $0x690] sm:$0xff]
        %v1813 = vld [vmem:[#allocation5 + $0x698] sm:$0xff]
        %v1814 = vld [vmem:[#allocation5 + $0x6a0] sm:$0xff]
        %v1815 = vld [vmem:[#allocation5 + $0x6a8] sm:$0xff]
        %v1816 = vld [vmem:[#allocation5 + $0x6b0] sm:$0xff]
        %v1817 = vld [vmem:[#allocation5 + $0x6b8] sm:$0xff]
        %v1818 = vld [vmem:[#allocation5 + $0x6c0] sm:$0xff]
        %v1819 = vld [vmem:[#allocation5 + $0x6c8] sm:$0xff]
        %v1820 = vld [vmem:[#allocation5 + $0x6d0] sm:$0xff]
        %v1821 = vld [vmem:[#allocation5 + $0x6d8] sm:$0xff]
        %v1822 = vld [vmem:[#allocation5 + $0x6e0] sm:$0xff]
        %v1823 = vld [vmem:[#allocation5 + $0x6e8] sm:$0xff]
        %v1824 = vld [vmem:[#allocation5 + $0x6f0] sm:$0xff]
        %v1825 = vld [vmem:[#allocation5 + $0x6f8] sm:$0xff]
        %v1826 = vld [vmem:[#allocation5 + $0x700] sm:$0xff]
        %v1827 = vld [vmem:[#allocation5 + $0x708] sm:$0xff]
        %v1828 = vld [vmem:[#allocation5 + $0x710] sm:$0xff]
        %v1829 = vld [vmem:[#allocation5 + $0x718] sm:$0xff]
        %v1830 = vld [vmem:[#allocation5 + $0x720] sm:$0xff]
        %v1831 = vld [vmem:[#allocation5 + $0x728] sm:$0xff]
        %v1832 = vld [vmem:[#allocation5 + $0x730] sm:$0xff]
        %v1833 = vld [vmem:[#allocation5 + $0x738] sm:$0xff]
        %v1834 = vld [vmem:[#allocation5 + $0x740] sm:$0xff]
        %v1835 = vld [vmem:[#allocation5 + $0x748] sm:$0xff]
        %v1836 = vld [vmem:[#allocation5 + $0x750] sm:$0xff]
        %v1837 = vld [vmem:[#allocation5 + $0x758] sm:$0xff]
        %v1838 = vld [vmem:[#allocation5 + $0x760] sm:$0xff]
        %v1839 = vld [vmem:[#allocation5 + $0x768] sm:$0xff]
        %v1840 = vld [vmem:[#allocation5 + $0x770] sm:$0xff]
        %v1841 = vld [vmem:[#allocation5 + $0x778] sm:$0xff]
        %v1842 = vld [vmem:[#allocation5 + $0x780] sm:$0xff]
        %v1843 = vld [vmem:[#allocation5 + $0x788] sm:$0xff]
        %v1844 = vld [vmem:[#allocation5 + $0x790] sm:$0xff]
        %v1845 = vld [vmem:[#allocation5 + $0x798] sm:$0xff]
        %v1846 = vld [vmem:[#allocation5 + $0x7a0] sm:$0xff]
        %v1847 = vld [vmem:[#allocation5 + $0x7a8] sm:$0xff]
        %v1848 = vld [vmem:[#allocation5 + $0x7b0] sm:$0xff]
        %v1849 = vld [vmem:[#allocation5 + $0x7b8] sm:$0xff]
        %v1850 = vld [vmem:[#allocation5 + $0x7c0] sm:$0xff]
        %v1851 = vld [vmem:[#allocation5 + $0x7c8] sm:$0xff]
        %v1852 = vld [vmem:[#allocation5 + $0x7d0] sm:$0xff]
        %v1853 = vld [vmem:[#allocation5 + $0x7d8] sm:$0xff]
        %v1854 = vld [vmem:[#allocation5 + $0x7e0] sm:$0xff]
        %v1855 = vld [vmem:[#allocation5 + $0x7e8] sm:$0xff]
        %v1856 = vld [vmem:[#allocation5 + $0x7f0] sm:$0xff]
        %v1857 = vld [vmem:[#allocation5 + $0x7f8] sm:$0xff]
        %vm1858 = vcmask 523264
        %v1860 = vsel %vm1858, %v723, 0
        %v1863 = vsel %vm1858, %v725, 0
        %1865 = vmatpush.msra.mxu0 0.0
        %1866 = vmatpush.msra.mxu0 0.0
        %1867 = vmatpush.msra.mxu0 0.0
        %1868 = vmatpush.msra.mxu0 0.0
        %1869 = vmatpush.msra.mxu0 0.0
        %1870 = vmatpush.msra.mxu0 0.0
        %1871 = vmatpush.msra.mxu0 0.0
        %1872 = vmatpush.msra.mxu0 0.0
        %1873 = vmatpush.msra.mxu0 %v1826
        %1874 = vmatpush.msra.mxu0 %v1794
        %1875 = vmatpush.msra.mxu0 %v1762
        %1876 = vmatpush.msra.mxu0 %v1730
        %1877 = vmatpush.msra.mxu0 %v1698
        %1878 = vmatpush.msra.mxu0 %v1666
        %1879 = vmatpush.msra.mxu0 %v1634
        %1880 = vmatpush.msra.mxu0 %v1602
        %1881 = vmatmul.f32.gmra.mxu0 %v1860
        %v1882 = vpop.f32.mrf.mxu0
        %v1883 = vadd.f32 0.0, %v1882
        %1884 = vmatmul.f32.gmra.mxu0 %v1863
        %v1885 = vpop.f32.mrf.mxu0
        %v1886 = vadd.f32 0.0, %v1885
        %1887 = vdwg.mxu0
        %1888 = vmatpush.msra.mxu0 0.0
        %1889 = vmatpush.msra.mxu0 0.0
        %1890 = vmatpush.msra.mxu0 0.0
        %1891 = vmatpush.msra.mxu0 0.0
        %1892 = vmatpush.msra.mxu0 0.0
        %1893 = vmatpush.msra.mxu0 0.0
        %1894 = vmatpush.msra.mxu0 0.0
        %1895 = vmatpush.msra.mxu0 0.0
        %1896 = vmatpush.msra.mxu0 %v1827
        %1897 = vmatpush.msra.mxu0 %v1795
        %1898 = vmatpush.msra.mxu0 %v1763
        %1899 = vmatpush.msra.mxu0 %v1731
        %1900 = vmatpush.msra.mxu0 %v1699
        %1901 = vmatpush.msra.mxu0 %v1667
        %1902 = vmatpush.msra.mxu0 %v1635
        %1903 = vmatpush.msra.mxu0 %v1603
        %1904 = vmatmul.f32.gmra.mxu0 %v1860
        %v1905 = vpop.f32.mrf.mxu0
        %v1906 = vadd.f32 0.0, %v1905
        %1907 = vmatmul.f32.gmra.mxu0 %v1863
        %v1908 = vpop.f32.mrf.mxu0
        %v1909 = vadd.f32 0.0, %v1908
        %1910 = vdwg.mxu0
        %1911 = vmatpush.msra.mxu0 0.0
        %1912 = vmatpush.msra.mxu0 0.0
        %1913 = vmatpush.msra.mxu0 0.0
        %1914 = vmatpush.msra.mxu0 0.0
        %1915 = vmatpush.msra.mxu0 0.0
        %1916 = vmatpush.msra.mxu0 0.0
        %1917 = vmatpush.msra.mxu0 0.0
        %1918 = vmatpush.msra.mxu0 0.0
        %1919 = vmatpush.msra.mxu0 %v1828
        %1920 = vmatpush.msra.mxu0 %v1796
        %1921 = vmatpush.msra.mxu0 %v1764
        %1922 = vmatpush.msra.mxu0 %v1732
        %1923 = vmatpush.msra.mxu0 %v1700
        %1924 = vmatpush.msra.mxu0 %v1668
        %1925 = vmatpush.msra.mxu0 %v1636
        %1926 = vmatpush.msra.mxu0 %v1604
        %1927 = vmatmul.f32.gmra.mxu0 %v1860
        %v1928 = vpop.f32.mrf.mxu0
        %v1929 = vadd.f32 0.0, %v1928
        %1930 = vmatmul.f32.gmra.mxu0 %v1863
        %v1931 = vpop.f32.mrf.mxu0
        %v1932 = vadd.f32 0.0, %v1931
        %1933 = vdwg.mxu0
        %1934 = vmatpush.msra.mxu0 0.0
        %1935 = vmatpush.msra.mxu0 0.0
        %1936 = vmatpush.msra.mxu0 0.0
        %1937 = vmatpush.msra.mxu0 0.0
        %1938 = vmatpush.msra.mxu0 0.0
        %1939 = vmatpush.msra.mxu0 0.0
        %1940 = vmatpush.msra.mxu0 0.0
        %1941 = vmatpush.msra.mxu0 0.0
        %1942 = vmatpush.msra.mxu0 %v1829
        %1943 = vmatpush.msra.mxu0 %v1797
        %1944 = vmatpush.msra.mxu0 %v1765
        %1945 = vmatpush.msra.mxu0 %v1733
        %1946 = vmatpush.msra.mxu0 %v1701
        %1947 = vmatpush.msra.mxu0 %v1669
        %1948 = vmatpush.msra.mxu0 %v1637
        %1949 = vmatpush.msra.mxu0 %v1605
        %1950 = vmatmul.f32.gmra.mxu0 %v1860
        %v1951 = vpop.f32.mrf.mxu0
        %v1952 = vadd.f32 0.0, %v1951
        %1953 = vmatmul.f32.gmra.mxu0 %v1863
        %v1954 = vpop.f32.mrf.mxu0
        %v1955 = vadd.f32 0.0, %v1954
        %1956 = vdwg.mxu0
        %1957 = vmatpush.msra.mxu0 0.0
        %1958 = vmatpush.msra.mxu0 0.0
        %1959 = vmatpush.msra.mxu0 0.0
        %1960 = vmatpush.msra.mxu0 0.0
        %1961 = vmatpush.msra.mxu0 0.0
        %1962 = vmatpush.msra.mxu0 0.0
        %1963 = vmatpush.msra.mxu0 0.0
        %1964 = vmatpush.msra.mxu0 0.0
        %1965 = vmatpush.msra.mxu0 %v1830
        %1966 = vmatpush.msra.mxu0 %v1798
        %1967 = vmatpush.msra.mxu0 %v1766
        %1968 = vmatpush.msra.mxu0 %v1734
        %1969 = vmatpush.msra.mxu0 %v1702
        %1970 = vmatpush.msra.mxu0 %v1670
        %1971 = vmatpush.msra.mxu0 %v1638
        %1972 = vmatpush.msra.mxu0 %v1606
        %1973 = vmatmul.f32.gmra.mxu0 %v1860
        %v1974 = vpop.f32.mrf.mxu0
        %v1975 = vadd.f32 0.0, %v1974
        %1976 = vmatmul.f32.gmra.mxu0 %v1863
        %v1977 = vpop.f32.mrf.mxu0
        %v1978 = vadd.f32 0.0, %v1977
        %1979 = vdwg.mxu0
        %1980 = vmatpush.msra.mxu0 0.0
        %1981 = vmatpush.msra.mxu0 0.0
        %1982 = vmatpush.msra.mxu0 0.0
        %1983 = vmatpush.msra.mxu0 0.0
        %1984 = vmatpush.msra.mxu0 0.0
        %1985 = vmatpush.msra.mxu0 0.0
        %1986 = vmatpush.msra.mxu0 0.0
        %1987 = vmatpush.msra.mxu0 0.0
        %1988 = vmatpush.msra.mxu0 %v1831
        %1989 = vmatpush.msra.mxu0 %v1799
        %1990 = vmatpush.msra.mxu0 %v1767
        %1991 = vmatpush.msra.mxu0 %v1735
        %1992 = vmatpush.msra.mxu0 %v1703
        %1993 = vmatpush.msra.mxu0 %v1671
        %1994 = vmatpush.msra.mxu0 %v1639
        %1995 = vmatpush.msra.mxu0 %v1607
        %1996 = vmatmul.f32.gmra.mxu0 %v1860
        %v1997 = vpop.f32.mrf.mxu0
        %v1998 = vadd.f32 0.0, %v1997
        %1999 = vmatmul.f32.gmra.mxu0 %v1863
        %v2000 = vpop.f32.mrf.mxu0
        %v2001 = vadd.f32 0.0, %v2000
        %2002 = vdwg.mxu0
        %2003 = vmatpush.msra.mxu0 0.0
        %2004 = vmatpush.msra.mxu0 0.0
        %2005 = vmatpush.msra.mxu0 0.0
        %2006 = vmatpush.msra.mxu0 0.0
        %2007 = vmatpush.msra.mxu0 0.0
        %2008 = vmatpush.msra.mxu0 0.0
        %2009 = vmatpush.msra.mxu0 0.0
        %2010 = vmatpush.msra.mxu0 0.0
        %2011 = vmatpush.msra.mxu0 %v1832
        %2012 = vmatpush.msra.mxu0 %v1800
        %2013 = vmatpush.msra.mxu0 %v1768
        %2014 = vmatpush.msra.mxu0 %v1736
        %2015 = vmatpush.msra.mxu0 %v1704
        %2016 = vmatpush.msra.mxu0 %v1672
        %2017 = vmatpush.msra.mxu0 %v1640
        %2018 = vmatpush.msra.mxu0 %v1608
        %2019 = vmatmul.f32.gmra.mxu0 %v1860
        %v2020 = vpop.f32.mrf.mxu0
        %v2021 = vadd.f32 0.0, %v2020
        %2022 = vmatmul.f32.gmra.mxu0 %v1863
        %v2023 = vpop.f32.mrf.mxu0
        %v2024 = vadd.f32 0.0, %v2023
        %2025 = vdwg.mxu0
        %2026 = vmatpush.msra.mxu0 0.0
        %2027 = vmatpush.msra.mxu0 0.0
        %2028 = vmatpush.msra.mxu0 0.0
        %2029 = vmatpush.msra.mxu0 0.0
        %2030 = vmatpush.msra.mxu0 0.0
        %2031 = vmatpush.msra.mxu0 0.0
        %2032 = vmatpush.msra.mxu0 0.0
        %2033 = vmatpush.msra.mxu0 0.0
        %2034 = vmatpush.msra.mxu0 %v1833
        %2035 = vmatpush.msra.mxu0 %v1801
        %2036 = vmatpush.msra.mxu0 %v1769
        %2037 = vmatpush.msra.mxu0 %v1737
        %2038 = vmatpush.msra.mxu0 %v1705
        %2039 = vmatpush.msra.mxu0 %v1673
        %2040 = vmatpush.msra.mxu0 %v1641
        %2041 = vmatpush.msra.mxu0 %v1609
        %2042 = vmatmul.f32.gmra.mxu0 %v1860
        %v2043 = vpop.f32.mrf.mxu0
        %v2044 = vadd.f32 0.0, %v2043
        %2045 = vmatmul.f32.gmra.mxu0 %v1863
        %v2046 = vpop.f32.mrf.mxu0
        %v2047 = vadd.f32 0.0, %v2046
        %2048 = vdwg.mxu0
        %2049 = vmatpush.msra.mxu0 0.0
        %2050 = vmatpush.msra.mxu0 0.0
        %2051 = vmatpush.msra.mxu0 0.0
        %2052 = vmatpush.msra.mxu0 0.0
        %2053 = vmatpush.msra.mxu0 0.0
        %2054 = vmatpush.msra.mxu0 0.0
        %2055 = vmatpush.msra.mxu0 0.0
        %2056 = vmatpush.msra.mxu0 0.0
        %2057 = vmatpush.msra.mxu0 %v1834
        %2058 = vmatpush.msra.mxu0 %v1802
        %2059 = vmatpush.msra.mxu0 %v1770
        %2060 = vmatpush.msra.mxu0 %v1738
        %2061 = vmatpush.msra.mxu0 %v1706
        %2062 = vmatpush.msra.mxu0 %v1674
        %2063 = vmatpush.msra.mxu0 %v1642
        %2064 = vmatpush.msra.mxu0 %v1610
        %2065 = vmatmul.f32.gmra.mxu0 %v1860
        %v2066 = vpop.f32.mrf.mxu0
        %v2067 = vadd.f32 0.0, %v2066
        %2068 = vmatmul.f32.gmra.mxu0 %v1863
        %v2069 = vpop.f32.mrf.mxu0
        %v2070 = vadd.f32 0.0, %v2069
        %2071 = vdwg.mxu0
        %2072 = vmatpush.msra.mxu0 0.0
        %2073 = vmatpush.msra.mxu0 0.0
        %2074 = vmatpush.msra.mxu0 0.0
        %2075 = vmatpush.msra.mxu0 0.0
        %2076 = vmatpush.msra.mxu0 0.0
        %2077 = vmatpush.msra.mxu0 0.0
        %2078 = vmatpush.msra.mxu0 0.0
        %2079 = vmatpush.msra.mxu0 0.0
        %2080 = vmatpush.msra.mxu0 %v1835
        %2081 = vmatpush.msra.mxu0 %v1803
        %2082 = vmatpush.msra.mxu0 %v1771
        %2083 = vmatpush.msra.mxu0 %v1739
        %2084 = vmatpush.msra.mxu0 %v1707
        %2085 = vmatpush.msra.mxu0 %v1675
        %2086 = vmatpush.msra.mxu0 %v1643
        %2087 = vmatpush.msra.mxu0 %v1611
        %2088 = vmatmul.f32.gmra.mxu0 %v1860
        %v2089 = vpop.f32.mrf.mxu0
        %v2090 = vadd.f32 0.0, %v2089
        %2091 = vmatmul.f32.gmra.mxu0 %v1863
        %v2092 = vpop.f32.mrf.mxu0
        %v2093 = vadd.f32 0.0, %v2092
        %2094 = vdwg.mxu0
        %2095 = vmatpush.msra.mxu0 0.0
        %2096 = vmatpush.msra.mxu0 0.0
        %2097 = vmatpush.msra.mxu0 0.0
        %2098 = vmatpush.msra.mxu0 0.0
        %2099 = vmatpush.msra.mxu0 0.0
        %2100 = vmatpush.msra.mxu0 0.0
        %2101 = vmatpush.msra.mxu0 0.0
        %2102 = vmatpush.msra.mxu0 0.0
        %2103 = vmatpush.msra.mxu0 %v1836
        %2104 = vmatpush.msra.mxu0 %v1804
        %2105 = vmatpush.msra.mxu0 %v1772
        %2106 = vmatpush.msra.mxu0 %v1740
        %2107 = vmatpush.msra.mxu0 %v1708
        %2108 = vmatpush.msra.mxu0 %v1676
        %2109 = vmatpush.msra.mxu0 %v1644
        %2110 = vmatpush.msra.mxu0 %v1612
        %2111 = vmatmul.f32.gmra.mxu0 %v1860
        %v2112 = vpop.f32.mrf.mxu0
        %v2113 = vadd.f32 0.0, %v2112
        %2114 = vmatmul.f32.gmra.mxu0 %v1863
        %v2115 = vpop.f32.mrf.mxu0
        %v2116 = vadd.f32 0.0, %v2115
        %2117 = vdwg.mxu0
        %2118 = vmatpush.msra.mxu0 0.0
        %2119 = vmatpush.msra.mxu0 0.0
        %2120 = vmatpush.msra.mxu0 0.0
        %2121 = vmatpush.msra.mxu0 0.0
        %2122 = vmatpush.msra.mxu0 0.0
        %2123 = vmatpush.msra.mxu0 0.0
        %2124 = vmatpush.msra.mxu0 0.0
        %2125 = vmatpush.msra.mxu0 0.0
        %2126 = vmatpush.msra.mxu0 %v1837
        %2127 = vmatpush.msra.mxu0 %v1805
        %2128 = vmatpush.msra.mxu0 %v1773
        %2129 = vmatpush.msra.mxu0 %v1741
        %2130 = vmatpush.msra.mxu0 %v1709
        %2131 = vmatpush.msra.mxu0 %v1677
        %2132 = vmatpush.msra.mxu0 %v1645
        %2133 = vmatpush.msra.mxu0 %v1613
        %2134 = vmatmul.f32.gmra.mxu0 %v1860
        %v2135 = vpop.f32.mrf.mxu0
        %v2136 = vadd.f32 0.0, %v2135
        %2137 = vmatmul.f32.gmra.mxu0 %v1863
        %v2138 = vpop.f32.mrf.mxu0
        %v2139 = vadd.f32 0.0, %v2138
        %2140 = vdwg.mxu0
        %2141 = vmatpush.msra.mxu0 0.0
        %2142 = vmatpush.msra.mxu0 0.0
        %2143 = vmatpush.msra.mxu0 0.0
        %2144 = vmatpush.msra.mxu0 0.0
        %2145 = vmatpush.msra.mxu0 0.0
        %2146 = vmatpush.msra.mxu0 0.0
        %2147 = vmatpush.msra.mxu0 0.0
        %2148 = vmatpush.msra.mxu0 0.0
        %2149 = vmatpush.msra.mxu0 %v1838
        %2150 = vmatpush.msra.mxu0 %v1806
        %2151 = vmatpush.msra.mxu0 %v1774
        %2152 = vmatpush.msra.mxu0 %v1742
        %2153 = vmatpush.msra.mxu0 %v1710
        %2154 = vmatpush.msra.mxu0 %v1678
        %2155 = vmatpush.msra.mxu0 %v1646
        %2156 = vmatpush.msra.mxu0 %v1614
        %2157 = vmatmul.f32.gmra.mxu0 %v1860
        %v2158 = vpop.f32.mrf.mxu0
        %v2159 = vadd.f32 0.0, %v2158
        %2160 = vmatmul.f32.gmra.mxu0 %v1863
        %v2161 = vpop.f32.mrf.mxu0
        %v2162 = vadd.f32 0.0, %v2161
        %2163 = vdwg.mxu0
        %2164 = vmatpush.msra.mxu0 0.0
        %2165 = vmatpush.msra.mxu0 0.0
        %2166 = vmatpush.msra.mxu0 0.0
        %2167 = vmatpush.msra.mxu0 0.0
        %2168 = vmatpush.msra.mxu0 0.0
        %2169 = vmatpush.msra.mxu0 0.0
        %2170 = vmatpush.msra.mxu0 0.0
        %2171 = vmatpush.msra.mxu0 0.0
        %2172 = vmatpush.msra.mxu0 %v1839
        %2173 = vmatpush.msra.mxu0 %v1807
        %2174 = vmatpush.msra.mxu0 %v1775
        %2175 = vmatpush.msra.mxu0 %v1743
        %2176 = vmatpush.msra.mxu0 %v1711
        %2177 = vmatpush.msra.mxu0 %v1679
        %2178 = vmatpush.msra.mxu0 %v1647
        %2179 = vmatpush.msra.mxu0 %v1615
        %2180 = vmatmul.f32.gmra.mxu0 %v1860
        %v2181 = vpop.f32.mrf.mxu0
        %v2182 = vadd.f32 0.0, %v2181
        %2183 = vmatmul.f32.gmra.mxu0 %v1863
        %v2184 = vpop.f32.mrf.mxu0
        %v2185 = vadd.f32 0.0, %v2184
        %2186 = vdwg.mxu0
        %2187 = vmatpush.msra.mxu0 0.0
        %2188 = vmatpush.msra.mxu0 0.0
        %2189 = vmatpush.msra.mxu0 0.0
        %2190 = vmatpush.msra.mxu0 0.0
        %2191 = vmatpush.msra.mxu0 0.0
        %2192 = vmatpush.msra.mxu0 0.0
        %2193 = vmatpush.msra.mxu0 0.0
        %2194 = vmatpush.msra.mxu0 0.0
        %2195 = vmatpush.msra.mxu0 %v1840
        %2196 = vmatpush.msra.mxu0 %v1808
        %2197 = vmatpush.msra.mxu0 %v1776
        %2198 = vmatpush.msra.mxu0 %v1744
        %2199 = vmatpush.msra.mxu0 %v1712
        %2200 = vmatpush.msra.mxu0 %v1680
        %2201 = vmatpush.msra.mxu0 %v1648
        %2202 = vmatpush.msra.mxu0 %v1616
        %2203 = vmatmul.f32.gmra.mxu0 %v1860
        %v2204 = vpop.f32.mrf.mxu0
        %v2205 = vadd.f32 0.0, %v2204
        %2206 = vmatmul.f32.gmra.mxu0 %v1863
        %v2207 = vpop.f32.mrf.mxu0
        %v2208 = vadd.f32 0.0, %v2207
        %2209 = vdwg.mxu0
        %2210 = vmatpush.msra.mxu0 0.0
        %2211 = vmatpush.msra.mxu0 0.0
        %2212 = vmatpush.msra.mxu0 0.0
        %2213 = vmatpush.msra.mxu0 0.0
        %2214 = vmatpush.msra.mxu0 0.0
        %2215 = vmatpush.msra.mxu0 0.0
        %2216 = vmatpush.msra.mxu0 0.0
        %2217 = vmatpush.msra.mxu0 0.0
        %2218 = vmatpush.msra.mxu0 %v1841
        %2219 = vmatpush.msra.mxu0 %v1809
        %2220 = vmatpush.msra.mxu0 %v1777
        %2221 = vmatpush.msra.mxu0 %v1745
        %2222 = vmatpush.msra.mxu0 %v1713
        %2223 = vmatpush.msra.mxu0 %v1681
        %2224 = vmatpush.msra.mxu0 %v1649
        %2225 = vmatpush.msra.mxu0 %v1617
        %2226 = vmatmul.f32.gmra.mxu0 %v1860
        %v2227 = vpop.f32.mrf.mxu0
        %v2228 = vadd.f32 0.0, %v2227
        %2229 = vmatmul.f32.gmra.mxu0 %v1863
        %v2230 = vpop.f32.mrf.mxu0
        %v2231 = vadd.f32 0.0, %v2230
        %2232 = vdwg.mxu0
        %2233 = vmatpush.msra.mxu0 0.0
        %2234 = vmatpush.msra.mxu0 0.0
        %2235 = vmatpush.msra.mxu0 0.0
        %2236 = vmatpush.msra.mxu0 0.0
        %2237 = vmatpush.msra.mxu0 0.0
        %2238 = vmatpush.msra.mxu0 0.0
        %2239 = vmatpush.msra.mxu0 0.0
        %2240 = vmatpush.msra.mxu0 0.0
        %2241 = vmatpush.msra.mxu0 %v1842
        %2242 = vmatpush.msra.mxu0 %v1810
        %2243 = vmatpush.msra.mxu0 %v1778
        %2244 = vmatpush.msra.mxu0 %v1746
        %2245 = vmatpush.msra.mxu0 %v1714
        %2246 = vmatpush.msra.mxu0 %v1682
        %2247 = vmatpush.msra.mxu0 %v1650
        %2248 = vmatpush.msra.mxu0 %v1618
        %2249 = vmatmul.f32.gmra.mxu0 %v1860
        %v2250 = vpop.f32.mrf.mxu0
        %v2251 = vadd.f32 0.0, %v2250
        %2252 = vmatmul.f32.gmra.mxu0 %v1863
        %v2253 = vpop.f32.mrf.mxu0
        %v2254 = vadd.f32 0.0, %v2253
        %2255 = vdwg.mxu0
        %2256 = vmatpush.msra.mxu0 0.0
        %2257 = vmatpush.msra.mxu0 0.0
        %2258 = vmatpush.msra.mxu0 0.0
        %2259 = vmatpush.msra.mxu0 0.0
        %2260 = vmatpush.msra.mxu0 0.0
        %2261 = vmatpush.msra.mxu0 0.0
        %2262 = vmatpush.msra.mxu0 0.0
        %2263 = vmatpush.msra.mxu0 0.0
        %2264 = vmatpush.msra.mxu0 %v1843
        %2265 = vmatpush.msra.mxu0 %v1811
        %2266 = vmatpush.msra.mxu0 %v1779
        %2267 = vmatpush.msra.mxu0 %v1747
        %2268 = vmatpush.msra.mxu0 %v1715
        %2269 = vmatpush.msra.mxu0 %v1683
        %2270 = vmatpush.msra.mxu0 %v1651
        %2271 = vmatpush.msra.mxu0 %v1619
        %2272 = vmatmul.f32.gmra.mxu0 %v1860
        %v2273 = vpop.f32.mrf.mxu0
        %v2274 = vadd.f32 0.0, %v2273
        %2275 = vmatmul.f32.gmra.mxu0 %v1863
        %v2276 = vpop.f32.mrf.mxu0
        %v2277 = vadd.f32 0.0, %v2276
        %2278 = vdwg.mxu0
        %2279 = vmatpush.msra.mxu0 0.0
        %2280 = vmatpush.msra.mxu0 0.0
        %2281 = vmatpush.msra.mxu0 0.0
        %2282 = vmatpush.msra.mxu0 0.0
        %2283 = vmatpush.msra.mxu0 0.0
        %2284 = vmatpush.msra.mxu0 0.0
        %2285 = vmatpush.msra.mxu0 0.0
        %2286 = vmatpush.msra.mxu0 0.0
        %2287 = vmatpush.msra.mxu0 %v1844
        %2288 = vmatpush.msra.mxu0 %v1812
        %2289 = vmatpush.msra.mxu0 %v1780
        %2290 = vmatpush.msra.mxu0 %v1748
        %2291 = vmatpush.msra.mxu0 %v1716
        %2292 = vmatpush.msra.mxu0 %v1684
        %2293 = vmatpush.msra.mxu0 %v1652
        %2294 = vmatpush.msra.mxu0 %v1620
        %2295 = vmatmul.f32.gmra.mxu0 %v1860
        %v2296 = vpop.f32.mrf.mxu0
        %v2297 = vadd.f32 0.0, %v2296
        %2298 = vmatmul.f32.gmra.mxu0 %v1863
        %v2299 = vpop.f32.mrf.mxu0
        %v2300 = vadd.f32 0.0, %v2299
        %2301 = vdwg.mxu0
        %2302 = vmatpush.msra.mxu0 0.0
        %2303 = vmatpush.msra.mxu0 0.0
        %2304 = vmatpush.msra.mxu0 0.0
        %2305 = vmatpush.msra.mxu0 0.0
        %2306 = vmatpush.msra.mxu0 0.0
        %2307 = vmatpush.msra.mxu0 0.0
        %2308 = vmatpush.msra.mxu0 0.0
        %2309 = vmatpush.msra.mxu0 0.0
        %2310 = vmatpush.msra.mxu0 %v1845
        %2311 = vmatpush.msra.mxu0 %v1813
        %2312 = vmatpush.msra.mxu0 %v1781
        %2313 = vmatpush.msra.mxu0 %v1749
        %2314 = vmatpush.msra.mxu0 %v1717
        %2315 = vmatpush.msra.mxu0 %v1685
        %2316 = vmatpush.msra.mxu0 %v1653
        %2317 = vmatpush.msra.mxu0 %v1621
        %2318 = vmatmul.f32.gmra.mxu0 %v1860
        %v2319 = vpop.f32.mrf.mxu0
        %v2320 = vadd.f32 0.0, %v2319
        %2321 = vmatmul.f32.gmra.mxu0 %v1863
        %v2322 = vpop.f32.mrf.mxu0
        %v2323 = vadd.f32 0.0, %v2322
        %2324 = vdwg.mxu0
        %2325 = vmatpush.msra.mxu0 0.0
        %2326 = vmatpush.msra.mxu0 0.0
        %2327 = vmatpush.msra.mxu0 0.0
        %2328 = vmatpush.msra.mxu0 0.0
        %2329 = vmatpush.msra.mxu0 0.0
        %2330 = vmatpush.msra.mxu0 0.0
        %2331 = vmatpush.msra.mxu0 0.0
        %2332 = vmatpush.msra.mxu0 0.0
        %2333 = vmatpush.msra.mxu0 %v1846
        %2334 = vmatpush.msra.mxu0 %v1814
        %2335 = vmatpush.msra.mxu0 %v1782
        %2336 = vmatpush.msra.mxu0 %v1750
        %2337 = vmatpush.msra.mxu0 %v1718
        %2338 = vmatpush.msra.mxu0 %v1686
        %2339 = vmatpush.msra.mxu0 %v1654
        %2340 = vmatpush.msra.mxu0 %v1622
        %2341 = vmatmul.f32.gmra.mxu0 %v1860
        %v2342 = vpop.f32.mrf.mxu0
        %v2343 = vadd.f32 0.0, %v2342
        %2344 = vmatmul.f32.gmra.mxu0 %v1863
        %v2345 = vpop.f32.mrf.mxu0
        %v2346 = vadd.f32 0.0, %v2345
        %2347 = vdwg.mxu0
        %2348 = vmatpush.msra.mxu0 0.0
        %2349 = vmatpush.msra.mxu0 0.0
        %2350 = vmatpush.msra.mxu0 0.0
        %2351 = vmatpush.msra.mxu0 0.0
        %2352 = vmatpush.msra.mxu0 0.0
        %2353 = vmatpush.msra.mxu0 0.0
        %2354 = vmatpush.msra.mxu0 0.0
        %2355 = vmatpush.msra.mxu0 0.0
        %2356 = vmatpush.msra.mxu0 %v1847
        %2357 = vmatpush.msra.mxu0 %v1815
        %2358 = vmatpush.msra.mxu0 %v1783
        %2359 = vmatpush.msra.mxu0 %v1751
        %2360 = vmatpush.msra.mxu0 %v1719
        %2361 = vmatpush.msra.mxu0 %v1687
        %2362 = vmatpush.msra.mxu0 %v1655
        %2363 = vmatpush.msra.mxu0 %v1623
        %2364 = vmatmul.f32.gmra.mxu0 %v1860
        %v2365 = vpop.f32.mrf.mxu0
        %v2366 = vadd.f32 0.0, %v2365
        %2367 = vmatmul.f32.gmra.mxu0 %v1863
        %v2368 = vpop.f32.mrf.mxu0
        %v2369 = vadd.f32 0.0, %v2368
        %2370 = vdwg.mxu0
        %2371 = vmatpush.msra.mxu0 0.0
        %2372 = vmatpush.msra.mxu0 0.0
        %2373 = vmatpush.msra.mxu0 0.0
        %2374 = vmatpush.msra.mxu0 0.0
        %2375 = vmatpush.msra.mxu0 0.0
        %2376 = vmatpush.msra.mxu0 0.0
        %2377 = vmatpush.msra.mxu0 0.0
        %2378 = vmatpush.msra.mxu0 0.0
        %2379 = vmatpush.msra.mxu0 %v1848
        %2380 = vmatpush.msra.mxu0 %v1816
        %2381 = vmatpush.msra.mxu0 %v1784
        %2382 = vmatpush.msra.mxu0 %v1752
        %2383 = vmatpush.msra.mxu0 %v1720
        %2384 = vmatpush.msra.mxu0 %v1688
        %2385 = vmatpush.msra.mxu0 %v1656
        %2386 = vmatpush.msra.mxu0 %v1624
        %2387 = vmatmul.f32.gmra.mxu0 %v1860
        %v2388 = vpop.f32.mrf.mxu0
        %v2389 = vadd.f32 0.0, %v2388
        %2390 = vmatmul.f32.gmra.mxu0 %v1863
        %v2391 = vpop.f32.mrf.mxu0
        %v2392 = vadd.f32 0.0, %v2391
        %2393 = vdwg.mxu0
        %2394 = vmatpush.msra.mxu0 0.0
        %2395 = vmatpush.msra.mxu0 0.0
        %2396 = vmatpush.msra.mxu0 0.0
        %2397 = vmatpush.msra.mxu0 0.0
        %2398 = vmatpush.msra.mxu0 0.0
        %2399 = vmatpush.msra.mxu0 0.0
        %2400 = vmatpush.msra.mxu0 0.0
        %2401 = vmatpush.msra.mxu0 0.0
        %2402 = vmatpush.msra.mxu0 %v1849
        %2403 = vmatpush.msra.mxu0 %v1817
        %2404 = vmatpush.msra.mxu0 %v1785
        %2405 = vmatpush.msra.mxu0 %v1753
        %2406 = vmatpush.msra.mxu0 %v1721
        %2407 = vmatpush.msra.mxu0 %v1689
        %2408 = vmatpush.msra.mxu0 %v1657
        %2409 = vmatpush.msra.mxu0 %v1625
        %2410 = vmatmul.f32.gmra.mxu0 %v1860
        %v2411 = vpop.f32.mrf.mxu0
        %v2412 = vadd.f32 0.0, %v2411
        %2413 = vmatmul.f32.gmra.mxu0 %v1863
        %v2414 = vpop.f32.mrf.mxu0
        %v2415 = vadd.f32 0.0, %v2414
        %2416 = vdwg.mxu0
        %2417 = vmatpush.msra.mxu0 0.0
        %2418 = vmatpush.msra.mxu0 0.0
        %2419 = vmatpush.msra.mxu0 0.0
        %2420 = vmatpush.msra.mxu0 0.0
        %2421 = vmatpush.msra.mxu0 0.0
        %2422 = vmatpush.msra.mxu0 0.0
        %2423 = vmatpush.msra.mxu0 0.0
        %2424 = vmatpush.msra.mxu0 0.0
        %2425 = vmatpush.msra.mxu0 %v1850
        %2426 = vmatpush.msra.mxu0 %v1818
        %2427 = vmatpush.msra.mxu0 %v1786
        %2428 = vmatpush.msra.mxu0 %v1754
        %2429 = vmatpush.msra.mxu0 %v1722
        %2430 = vmatpush.msra.mxu0 %v1690
        %2431 = vmatpush.msra.mxu0 %v1658
        %2432 = vmatpush.msra.mxu0 %v1626
        %2433 = vmatmul.f32.gmra.mxu0 %v1860
        %v2434 = vpop.f32.mrf.mxu0
        %v2435 = vadd.f32 0.0, %v2434
        %2436 = vmatmul.f32.gmra.mxu0 %v1863
        %v2437 = vpop.f32.mrf.mxu0
        %v2438 = vadd.f32 0.0, %v2437
        %2439 = vdwg.mxu0
        %2440 = vmatpush.msra.mxu0 0.0
        %2441 = vmatpush.msra.mxu0 0.0
        %2442 = vmatpush.msra.mxu0 0.0
        %2443 = vmatpush.msra.mxu0 0.0
        %2444 = vmatpush.msra.mxu0 0.0
        %2445 = vmatpush.msra.mxu0 0.0
        %2446 = vmatpush.msra.mxu0 0.0
        %2447 = vmatpush.msra.mxu0 0.0
        %2448 = vmatpush.msra.mxu0 %v1851
        %2449 = vmatpush.msra.mxu0 %v1819
        %2450 = vmatpush.msra.mxu0 %v1787
        %2451 = vmatpush.msra.mxu0 %v1755
        %2452 = vmatpush.msra.mxu0 %v1723
        %2453 = vmatpush.msra.mxu0 %v1691
        %2454 = vmatpush.msra.mxu0 %v1659
        %2455 = vmatpush.msra.mxu0 %v1627
        %2456 = vmatmul.f32.gmra.mxu0 %v1860
        %v2457 = vpop.f32.mrf.mxu0
        %v2458 = vadd.f32 0.0, %v2457
        %2459 = vmatmul.f32.gmra.mxu0 %v1863
        %v2460 = vpop.f32.mrf.mxu0
        %v2461 = vadd.f32 0.0, %v2460
        %2462 = vdwg.mxu0
        %2463 = vmatpush.msra.mxu0 0.0
        %2464 = vmatpush.msra.mxu0 0.0
        %2465 = vmatpush.msra.mxu0 0.0
        %2466 = vmatpush.msra.mxu0 0.0
        %2467 = vmatpush.msra.mxu0 0.0
        %2468 = vmatpush.msra.mxu0 0.0
        %2469 = vmatpush.msra.mxu0 0.0
        %2470 = vmatpush.msra.mxu0 0.0
        %2471 = vmatpush.msra.mxu0 %v1852
        %2472 = vmatpush.msra.mxu0 %v1820
        %2473 = vmatpush.msra.mxu0 %v1788
        %2474 = vmatpush.msra.mxu0 %v1756
        %2475 = vmatpush.msra.mxu0 %v1724
        %2476 = vmatpush.msra.mxu0 %v1692
        %2477 = vmatpush.msra.mxu0 %v1660
        %2478 = vmatpush.msra.mxu0 %v1628
        %2479 = vmatmul.f32.gmra.mxu0 %v1860
        %v2480 = vpop.f32.mrf.mxu0
        %v2481 = vadd.f32 0.0, %v2480
        %2482 = vmatmul.f32.gmra.mxu0 %v1863
        %v2483 = vpop.f32.mrf.mxu0
        %v2484 = vadd.f32 0.0, %v2483
        %2485 = vdwg.mxu0
        %2486 = vmatpush.msra.mxu0 0.0
        %2487 = vmatpush.msra.mxu0 0.0
        %2488 = vmatpush.msra.mxu0 0.0
        %2489 = vmatpush.msra.mxu0 0.0
        %2490 = vmatpush.msra.mxu0 0.0
        %2491 = vmatpush.msra.mxu0 0.0
        %2492 = vmatpush.msra.mxu0 0.0
        %2493 = vmatpush.msra.mxu0 0.0
        %2494 = vmatpush.msra.mxu0 %v1853
        %2495 = vmatpush.msra.mxu0 %v1821
        %2496 = vmatpush.msra.mxu0 %v1789
        %2497 = vmatpush.msra.mxu0 %v1757
        %2498 = vmatpush.msra.mxu0 %v1725
        %2499 = vmatpush.msra.mxu0 %v1693
        %2500 = vmatpush.msra.mxu0 %v1661
        %2501 = vmatpush.msra.mxu0 %v1629
        %2502 = vmatmul.f32.gmra.mxu0 %v1860
        %v2503 = vpop.f32.mrf.mxu0
        %v2504 = vadd.f32 0.0, %v2503
        %2505 = vmatmul.f32.gmra.mxu0 %v1863
        %v2506 = vpop.f32.mrf.mxu0
        %v2507 = vadd.f32 0.0, %v2506
        %2508 = vdwg.mxu0
        %2509 = vmatpush.msra.mxu0 0.0
        %2510 = vmatpush.msra.mxu0 0.0
        %2511 = vmatpush.msra.mxu0 0.0
        %2512 = vmatpush.msra.mxu0 0.0
        %2513 = vmatpush.msra.mxu0 0.0
        %2514 = vmatpush.msra.mxu0 0.0
        %2515 = vmatpush.msra.mxu0 0.0
        %2516 = vmatpush.msra.mxu0 0.0
        %2517 = vmatpush.msra.mxu0 %v1854
        %2518 = vmatpush.msra.mxu0 %v1822
        %2519 = vmatpush.msra.mxu0 %v1790
        %2520 = vmatpush.msra.mxu0 %v1758
        %2521 = vmatpush.msra.mxu0 %v1726
        %2522 = vmatpush.msra.mxu0 %v1694
        %2523 = vmatpush.msra.mxu0 %v1662
        %2524 = vmatpush.msra.mxu0 %v1630
        %2525 = vmatmul.f32.gmra.mxu0 %v1860
        %v2526 = vpop.f32.mrf.mxu0
        %v2527 = vadd.f32 0.0, %v2526
        %2528 = vmatmul.f32.gmra.mxu0 %v1863
        %v2529 = vpop.f32.mrf.mxu0
        %v2530 = vadd.f32 0.0, %v2529
        %2531 = vdwg.mxu0
        %2532 = vmatpush.msra.mxu0 0.0
        %2533 = vmatpush.msra.mxu0 0.0
        %2534 = vmatpush.msra.mxu0 0.0
        %2535 = vmatpush.msra.mxu0 0.0
        %2536 = vmatpush.msra.mxu0 0.0
        %2537 = vmatpush.msra.mxu0 0.0
        %2538 = vmatpush.msra.mxu0 0.0
        %2539 = vmatpush.msra.mxu0 0.0
        %2540 = vmatpush.msra.mxu0 %v1855
        %2541 = vmatpush.msra.mxu0 %v1823
        %2542 = vmatpush.msra.mxu0 %v1791
        %2543 = vmatpush.msra.mxu0 %v1759
        %2544 = vmatpush.msra.mxu0 %v1727
        %2545 = vmatpush.msra.mxu0 %v1695
        %2546 = vmatpush.msra.mxu0 %v1663
        %2547 = vmatpush.msra.mxu0 %v1631
        %2548 = vmatmul.f32.gmra.mxu0 %v1860
        %v2549 = vpop.f32.mrf.mxu0
        %v2550 = vadd.f32 0.0, %v2549
        %2551 = vmatmul.f32.gmra.mxu0 %v1863
        %v2552 = vpop.f32.mrf.mxu0
        %v2553 = vadd.f32 0.0, %v2552
        %2554 = vdwg.mxu0
        %2555 = vmatpush.msra.mxu0 0.0
        %2556 = vmatpush.msra.mxu0 0.0
        %2557 = vmatpush.msra.mxu0 0.0
        %2558 = vmatpush.msra.mxu0 0.0
        %2559 = vmatpush.msra.mxu0 0.0
        %2560 = vmatpush.msra.mxu0 0.0
        %2561 = vmatpush.msra.mxu0 0.0
        %2562 = vmatpush.msra.mxu0 0.0
        %2563 = vmatpush.msra.mxu0 %v1856
        %2564 = vmatpush.msra.mxu0 %v1824
        %2565 = vmatpush.msra.mxu0 %v1792
        %2566 = vmatpush.msra.mxu0 %v1760
        %2567 = vmatpush.msra.mxu0 %v1728
        %2568 = vmatpush.msra.mxu0 %v1696
        %2569 = vmatpush.msra.mxu0 %v1664
        %2570 = vmatpush.msra.mxu0 %v1632
        %2571 = vmatmul.f32.gmra.mxu0 %v1860
        %v2572 = vpop.f32.mrf.mxu0
        %v2573 = vadd.f32 0.0, %v2572
        %2574 = vmatmul.f32.gmra.mxu0 %v1863
        %v2575 = vpop.f32.mrf.mxu0
        %v2576 = vadd.f32 0.0, %v2575
        %2577 = vdwg.mxu0
        %2578 = vmatpush.msra.mxu0 0.0
        %2579 = vmatpush.msra.mxu0 0.0
        %2580 = vmatpush.msra.mxu0 0.0
        %2581 = vmatpush.msra.mxu0 0.0
        %2582 = vmatpush.msra.mxu0 0.0
        %2583 = vmatpush.msra.mxu0 0.0
        %2584 = vmatpush.msra.mxu0 0.0
        %2585 = vmatpush.msra.mxu0 0.0
        %2586 = vmatpush.msra.mxu0 %v1857
        %2587 = vmatpush.msra.mxu0 %v1825
        %2588 = vmatpush.msra.mxu0 %v1793
        %2589 = vmatpush.msra.mxu0 %v1761
        %2590 = vmatpush.msra.mxu0 %v1729
        %2591 = vmatpush.msra.mxu0 %v1697
        %2592 = vmatpush.msra.mxu0 %v1665
        %2593 = vmatpush.msra.mxu0 %v1633
        %2594 = vmatmul.f32.gmra.mxu0 %v1860
        %v2595 = vpop.f32.mrf.mxu0
        %v2596 = vadd.f32 0.0, %v2595
        %2597 = vmatmul.f32.gmra.mxu0 %v1863
        %v2598 = vpop.f32.mrf.mxu0
        %v2599 = vadd.f32 0.0, %v2598
        %2600 = vdwg.mxu0
        %v2601 = vmul.f32 %v1030, %v1883
        %v2602 = vmul.f32 %v1059, %v1906
        %v2603 = vmul.f32 %v1088, %v1929
        %v2604 = vmul.f32 %v1117, %v1952
        %v2605 = vmul.f32 %v1146, %v1975
        %v2606 = vmul.f32 %v1175, %v1998
        %v2607 = vmul.f32 %v1204, %v2021
        %v2608 = vmul.f32 %v1233, %v2044
        %v2609 = vmul.f32 %v1262, %v2067
        %v2610 = vmul.f32 %v1291, %v2090
        %v2611 = vmul.f32 %v1320, %v2113
        %v2612 = vmul.f32 %v1349, %v2136
        %v2613 = vmul.f32 %v1378, %v2159
        %v2614 = vmul.f32 %v1407, %v2182
        %v2615 = vmul.f32 %v1436, %v2205
        %v2616 = vmul.f32 %v1465, %v2228
        %v2617 = vmul.f32 %v1033, %v1886
        %v2618 = vmul.f32 %v1062, %v1909
        %v2619 = vmul.f32 %v1091, %v1932
        %v2620 = vmul.f32 %v1120, %v1955
        %v2621 = vmul.f32 %v1149, %v1978
        %v2622 = vmul.f32 %v1178, %v2001
        %v2623 = vmul.f32 %v1207, %v2024
        %v2624 = vmul.f32 %v1236, %v2047
        %v2625 = vmul.f32 %v1265, %v2070
        %v2626 = vmul.f32 %v1294, %v2093
        %v2627 = vmul.f32 %v1323, %v2116
        %v2628 = vmul.f32 %v1352, %v2139
        %v2629 = vmul.f32 %v1381, %v2162
        %v2630 = vmul.f32 %v1410, %v2185
        %v2631 = vmul.f32 %v1439, %v2208
        %v2632 = vmul.f32 %v1468, %v2231
        %v2665 = vrot.slane %v1539, 7
        %v2666 = vrot.slane %v1541, 7
        %v2667 = vrot.slane %v1543, 7
        %v2668 = vrot.slane %v1545, 7
        %v2669 = vrot.slane %v1547, 7
        %v2670 = vrot.slane %v1549, 7
        %v2671 = vrot.slane %v1551, 7
        %v2672 = vrot.slane %v1553, 7
        %v2673 = vrot.slane %v1555, 7
        %v2674 = vrot.slane %v1557, 7
        %v2675 = vrot.slane %v1559, 7
        %v2676 = vrot.slane %v1561, 7
        %v2677 = vrot.slane %v1563, 7
        %v2678 = vrot.slane %v1565, 7
        %v2679 = vrot.slane %v1567, 7
        %v2680 = vrot.slane %v1569, 7
        %v2681 = vrot.slane %v1571, 7
        %v2682 = vsel %vm537, %v2665, %v2681
        %v2683 = vrot.slane %v1573, 7
        %v2684 = vsel %vm537, %v2666, %v2683
        %v2685 = vrot.slane %v1575, 7
        %v2686 = vsel %vm537, %v2667, %v2685
        %v2687 = vrot.slane %v1577, 7
        %v2688 = vsel %vm537, %v2668, %v2687
        %v2689 = vrot.slane %v1579, 7
        %v2690 = vsel %vm537, %v2669, %v2689
        %v2691 = vrot.slane %v1581, 7
        %v2692 = vsel %vm537, %v2670, %v2691
        %v2693 = vrot.slane %v1583, 7
        %v2694 = vsel %vm537, %v2671, %v2693
        %v2695 = vrot.slane %v1585, 7
        %v2696 = vsel %vm537, %v2672, %v2695
        %v2697 = vrot.slane %v1587, 7
        %v2698 = vsel %vm537, %v2673, %v2697
        %v2699 = vrot.slane %v1589, 7
        %v2700 = vsel %vm537, %v2674, %v2699
        %v2701 = vrot.slane %v1591, 7
        %v2702 = vsel %vm537, %v2675, %v2701
        %v2703 = vrot.slane %v1593, 7
        %v2704 = vsel %vm537, %v2676, %v2703
        %v2705 = vrot.slane %v1595, 7
        %v2706 = vsel %vm537, %v2677, %v2705
        %v2707 = vrot.slane %v1597, 7
        %v2708 = vsel %vm537, %v2678, %v2707
        %v2709 = vrot.slane %v1599, 7
        %v2710 = vsel %vm537, %v2679, %v2709
        %v2711 = vrot.slane %v1601, 7
        %v2712 = vsel %vm537, %v2680, %v2711
        %v2745 = vsel %vm537, 1.0, %v2665
        %v2746 = vsel %vm537, 1.0, %v2666
        %v2747 = vsel %vm537, 1.0, %v2667
        %v2748 = vsel %vm537, 1.0, %v2668
        %v2749 = vsel %vm537, 1.0, %v2669
        %v2750 = vsel %vm537, 1.0, %v2670
        %v2751 = vsel %vm537, 1.0, %v2671
        %v2752 = vsel %vm537, 1.0, %v2672
        %v2753 = vsel %vm537, 1.0, %v2673
        %v2754 = vsel %vm537, 1.0, %v2674
        %v2755 = vsel %vm537, 1.0, %v2675
        %v2756 = vsel %vm537, 1.0, %v2676
        %v2757 = vsel %vm537, 1.0, %v2677
        %v2758 = vsel %vm537, 1.0, %v2678
        %v2759 = vsel %vm537, 1.0, %v2679
        %v2760 = vsel %vm537, 1.0, %v2680
        %v2761 = vsel %vm548, %v2745, 1.0
        %v2762 = vsel %vm548, %v2746, 1.0
        %v2763 = vsel %vm548, %v2747, 1.0
        %v2764 = vsel %vm548, %v2748, 1.0
        %v2765 = vsel %vm548, %v2749, 1.0
        %v2766 = vsel %vm548, %v2750, 1.0
        %v2767 = vsel %vm548, %v2751, 1.0
        %v2768 = vsel %vm548, %v2752, 1.0
        %v2769 = vsel %vm548, %v2753, 1.0
        %v2770 = vsel %vm548, %v2754, 1.0
        %v2771 = vsel %vm548, %v2755, 1.0
        %v2772 = vsel %vm548, %v2756, 1.0
        %v2773 = vsel %vm548, %v2757, 1.0
        %v2774 = vsel %vm548, %v2758, 1.0
        %v2775 = vsel %vm548, %v2759, 1.0
        %v2776 = vsel %vm548, %v2760, 1.0
        %v2777 = vsel %vm549, %v2682, 1.0
        %v2778 = vsel %vm549, %v2684, 1.0
        %v2779 = vsel %vm549, %v2686, 1.0
        %v2780 = vsel %vm549, %v2688, 1.0
        %v2781 = vsel %vm549, %v2690, 1.0
        %v2782 = vsel %vm549, %v2692, 1.0
        %v2783 = vsel %vm549, %v2694, 1.0
        %v2784 = vsel %vm549, %v2696, 1.0
        %v2785 = vsel %vm549, %v2698, 1.0
        %v2786 = vsel %vm549, %v2700, 1.0
        %v2787 = vsel %vm549, %v2702, 1.0
        %v2788 = vsel %vm549, %v2704, 1.0
        %v2789 = vsel %vm549, %v2706, 1.0
        %v2790 = vsel %vm549, %v2708, 1.0
        %v2791 = vsel %vm549, %v2710, 1.0
        %v2792 = vsel %vm549, %v2712, 1.0
        %v2825 = vrot.slane %v2601, 7
        %v2826 = vrot.slane %v2602, 7
        %v2827 = vrot.slane %v2603, 7
        %v2828 = vrot.slane %v2604, 7
        %v2829 = vrot.slane %v2605, 7
        %v2830 = vrot.slane %v2606, 7
        %v2831 = vrot.slane %v2607, 7
        %v2832 = vrot.slane %v2608, 7
        %v2833 = vrot.slane %v2609, 7
        %v2834 = vrot.slane %v2610, 7
        %v2835 = vrot.slane %v2611, 7
        %v2836 = vrot.slane %v2612, 7
        %v2837 = vrot.slane %v2613, 7
        %v2838 = vrot.slane %v2614, 7
        %v2839 = vrot.slane %v2615, 7
        %v2840 = vrot.slane %v2616, 7
        %v2841 = vrot.slane %v2617, 7
        %v2842 = vsel %vm537, %v2825, %v2841
        %v2843 = vrot.slane %v2618, 7
        %v2844 = vsel %vm537, %v2826, %v2843
        %v2845 = vrot.slane %v2619, 7
        %v2846 = vsel %vm537, %v2827, %v2845
        %v2847 = vrot.slane %v2620, 7
        %v2848 = vsel %vm537, %v2828, %v2847
        %v2849 = vrot.slane %v2621, 7
        %v2850 = vsel %vm537, %v2829, %v2849
        %v2851 = vrot.slane %v2622, 7
        %v2852 = vsel %vm537, %v2830, %v2851
        %v2853 = vrot.slane %v2623, 7
        %v2854 = vsel %vm537, %v2831, %v2853
        %v2855 = vrot.slane %v2624, 7
        %v2856 = vsel %vm537, %v2832, %v2855
        %v2857 = vrot.slane %v2625, 7
        %v2858 = vsel %vm537, %v2833, %v2857
        %v2859 = vrot.slane %v2626, 7
        %v2860 = vsel %vm537, %v2834, %v2859
        %v2861 = vrot.slane %v2627, 7
        %v2862 = vsel %vm537, %v2835, %v2861
        %v2863 = vrot.slane %v2628, 7
        %v2864 = vsel %vm537, %v2836, %v2863
        %v2865 = vrot.slane %v2629, 7
        %v2866 = vsel %vm537, %v2837, %v2865
        %v2867 = vrot.slane %v2630, 7
        %v2868 = vsel %vm537, %v2838, %v2867
        %v2869 = vrot.slane %v2631, 7
        %v2870 = vsel %vm537, %v2839, %v2869
        %v2871 = vrot.slane %v2632, 7
        %v2872 = vsel %vm537, %v2840, %v2871
        %v2905 = vsel %vm537, 0.0, %v2825
        %v2906 = vsel %vm537, 0.0, %v2826
        %v2907 = vsel %vm537, 0.0, %v2827
        %v2908 = vsel %vm537, 0.0, %v2828
        %v2909 = vsel %vm537, 0.0, %v2829
        %v2910 = vsel %vm537, 0.0, %v2830
        %v2911 = vsel %vm537, 0.0, %v2831
        %v2912 = vsel %vm537, 0.0, %v2832
        %v2913 = vsel %vm537, 0.0, %v2833
        %v2914 = vsel %vm537, 0.0, %v2834
        %v2915 = vsel %vm537, 0.0, %v2835
        %v2916 = vsel %vm537, 0.0, %v2836
        %v2917 = vsel %vm537, 0.0, %v2837
        %v2918 = vsel %vm537, 0.0, %v2838
        %v2919 = vsel %vm537, 0.0, %v2839
        %v2920 = vsel %vm537, 0.0, %v2840
        %v2921 = vsel %vm548, %v2905, 0.0
        %v2922 = vsel %vm548, %v2906, 0.0
        %v2923 = vsel %vm548, %v2907, 0.0
        %v2924 = vsel %vm548, %v2908, 0.0
        %v2925 = vsel %vm548, %v2909, 0.0
        %v2926 = vsel %vm548, %v2910, 0.0
        %v2927 = vsel %vm548, %v2911, 0.0
        %v2928 = vsel %vm548, %v2912, 0.0
        %v2929 = vsel %vm548, %v2913, 0.0
        %v2930 = vsel %vm548, %v2914, 0.0
        %v2931 = vsel %vm548, %v2915, 0.0
        %v2932 = vsel %vm548, %v2916, 0.0
        %v2933 = vsel %vm548, %v2917, 0.0
        %v2934 = vsel %vm548, %v2918, 0.0
        %v2935 = vsel %vm548, %v2919, 0.0
        %v2936 = vsel %vm548, %v2920, 0.0
        %v2937 = vsel %vm549, %v2842, 0.0
        %v2938 = vsel %vm549, %v2844, 0.0
        %v2939 = vsel %vm549, %v2846, 0.0
        %v2940 = vsel %vm549, %v2848, 0.0
        %v2941 = vsel %vm549, %v2850, 0.0
        %v2942 = vsel %vm549, %v2852, 0.0
        %v2943 = vsel %vm549, %v2854, 0.0
        %v2944 = vsel %vm549, %v2856, 0.0
        %v2945 = vsel %vm549, %v2858, 0.0
        %v2946 = vsel %vm549, %v2860, 0.0
        %v2947 = vsel %vm549, %v2862, 0.0
        %v2948 = vsel %vm549, %v2864, 0.0
        %v2949 = vsel %vm549, %v2866, 0.0
        %v2950 = vsel %vm549, %v2868, 0.0
        %v2951 = vsel %vm549, %v2870, 0.0
        %v2952 = vsel %vm549, %v2872, 0.0
        %v2953 = vmul.f32 %v1539, %v2921
        %v2954 = vmul.f32 %v1541, %v2922
        %v2955 = vmul.f32 %v1543, %v2923
        %v2956 = vmul.f32 %v1545, %v2924
        %v2957 = vmul.f32 %v1547, %v2925
        %v2958 = vmul.f32 %v1549, %v2926
        %v2959 = vmul.f32 %v1551, %v2927
        %v2960 = vmul.f32 %v1553, %v2928
        %v2961 = vmul.f32 %v1555, %v2929
        %v2962 = vmul.f32 %v1557, %v2930
        %v2963 = vmul.f32 %v1559, %v2931
        %v2964 = vmul.f32 %v1561, %v2932
        %v2965 = vmul.f32 %v1563, %v2933
        %v2966 = vmul.f32 %v1565, %v2934
        %v2967 = vmul.f32 %v1567, %v2935
        %v2968 = vmul.f32 %v1569, %v2936
        %v2969 = vmul.f32 %v1571, %v2937
        %v2970 = vmul.f32 %v1573, %v2938
        %v2971 = vmul.f32 %v1575, %v2939
        %v2972 = vmul.f32 %v1577, %v2940
        %v2973 = vmul.f32 %v1579, %v2941
        %v2974 = vmul.f32 %v1581, %v2942
        %v2975 = vmul.f32 %v1583, %v2943
        %v2976 = vmul.f32 %v1585, %v2944
        %v2977 = vmul.f32 %v1587, %v2945
        %v2978 = vmul.f32 %v1589, %v2946
        %v2979 = vmul.f32 %v1591, %v2947
        %v2980 = vmul.f32 %v1593, %v2948
        %v2981 = vmul.f32 %v1595, %v2949
        %v2982 = vmul.f32 %v1597, %v2950
        %v2983 = vmul.f32 %v1599, %v2951
        %v2984 = vmul.f32 %v1601, %v2952
        %v2985 = vadd.f32 %v2953, %v2601
        %v2986 = vadd.f32 %v2954, %v2602
        %v2987 = vadd.f32 %v2955, %v2603
        %v2988 = vadd.f32 %v2956, %v2604
        %v2989 = vadd.f32 %v2957, %v2605
        %v2990 = vadd.f32 %v2958, %v2606
        %v2991 = vadd.f32 %v2959, %v2607
        %v2992 = vadd.f32 %v2960, %v2608
        %v2993 = vadd.f32 %v2961, %v2609
        %v2994 = vadd.f32 %v2962, %v2610
        %v2995 = vadd.f32 %v2963, %v2611
        %v2996 = vadd.f32 %v2964, %v2612
        %v2997 = vadd.f32 %v2965, %v2613
        %v2998 = vadd.f32 %v2966, %v2614
        %v2999 = vadd.f32 %v2967, %v2615
        %v3000 = vadd.f32 %v2968, %v2616
        %v3001 = vadd.f32 %v2969, %v2617
        %v3002 = vadd.f32 %v2970, %v2618
        %v3003 = vadd.f32 %v2971, %v2619
        %v3004 = vadd.f32 %v2972, %v2620
        %v3005 = vadd.f32 %v2973, %v2621
        %v3006 = vadd.f32 %v2974, %v2622
        %v3007 = vadd.f32 %v2975, %v2623
        %v3008 = vadd.f32 %v2976, %v2624
        %v3009 = vadd.f32 %v2977, %v2625
        %v3010 = vadd.f32 %v2978, %v2626
        %v3011 = vadd.f32 %v2979, %v2627
        %v3012 = vadd.f32 %v2980, %v2628
        %v3013 = vadd.f32 %v2981, %v2629
        %v3014 = vadd.f32 %v2982, %v2630
        %v3015 = vadd.f32 %v2983, %v2631
        %v3016 = vadd.f32 %v2984, %v2632
        %v3017 = vmul.f32 %v1539, %v2761
        %v3018 = vmul.f32 %v1541, %v2762
        %v3019 = vmul.f32 %v1543, %v2763
        %v3020 = vmul.f32 %v1545, %v2764
        %v3021 = vmul.f32 %v1547, %v2765
        %v3022 = vmul.f32 %v1549, %v2766
        %v3023 = vmul.f32 %v1551, %v2767
        %v3024 = vmul.f32 %v1553, %v2768
        %v3025 = vmul.f32 %v1555, %v2769
        %v3026 = vmul.f32 %v1557, %v2770
        %v3027 = vmul.f32 %v1559, %v2771
        %v3028 = vmul.f32 %v1561, %v2772
        %v3029 = vmul.f32 %v1563, %v2773
        %v3030 = vmul.f32 %v1565, %v2774
        %v3031 = vmul.f32 %v1567, %v2775
        %v3032 = vmul.f32 %v1569, %v2776
        %v3033 = vmul.f32 %v1571, %v2777
        %v3034 = vmul.f32 %v1573, %v2778
        %v3035 = vmul.f32 %v1575, %v2779
        %v3036 = vmul.f32 %v1577, %v2780
        %v3037 = vmul.f32 %v1579, %v2781
        %v3038 = vmul.f32 %v1581, %v2782
        %v3039 = vmul.f32 %v1583, %v2783
        %v3040 = vmul.f32 %v1585, %v2784
        %v3041 = vmul.f32 %v1587, %v2785
        %v3042 = vmul.f32 %v1589, %v2786
        %v3043 = vmul.f32 %v1591, %v2787
        %v3044 = vmul.f32 %v1593, %v2788
        %v3045 = vmul.f32 %v1595, %v2789
        %v3046 = vmul.f32 %v1597, %v2790
        %v3047 = vmul.f32 %v1599, %v2791
        %v3048 = vmul.f32 %v1601, %v2792
        %v3081 = vrot.slane %v3017, 6
        %v3082 = vrot.slane %v3018, 6
        %v3083 = vrot.slane %v3019, 6
        %v3084 = vrot.slane %v3020, 6
        %v3085 = vrot.slane %v3021, 6
        %v3086 = vrot.slane %v3022, 6
        %v3087 = vrot.slane %v3023, 6
        %v3088 = vrot.slane %v3024, 6
        %v3089 = vrot.slane %v3025, 6
        %v3090 = vrot.slane %v3026, 6
        %v3091 = vrot.slane %v3027, 6
        %v3092 = vrot.slane %v3028, 6
        %v3093 = vrot.slane %v3029, 6
        %v3094 = vrot.slane %v3030, 6
        %v3095 = vrot.slane %v3031, 6
        %v3096 = vrot.slane %v3032, 6
        %v3097 = vrot.slane %v3033, 6
        %v3098 = vsel %vm517, %v3081, %v3097
        %v3099 = vrot.slane %v3034, 6
        %v3100 = vsel %vm517, %v3082, %v3099
        %v3101 = vrot.slane %v3035, 6
        %v3102 = vsel %vm517, %v3083, %v3101
        %v3103 = vrot.slane %v3036, 6
        %v3104 = vsel %vm517, %v3084, %v3103
        %v3105 = vrot.slane %v3037, 6
        %v3106 = vsel %vm517, %v3085, %v3105
        %v3107 = vrot.slane %v3038, 6
        %v3108 = vsel %vm517, %v3086, %v3107
        %v3109 = vrot.slane %v3039, 6
        %v3110 = vsel %vm517, %v3087, %v3109
        %v3111 = vrot.slane %v3040, 6
        %v3112 = vsel %vm517, %v3088, %v3111
        %v3113 = vrot.slane %v3041, 6
        %v3114 = vsel %vm517, %v3089, %v3113
        %v3115 = vrot.slane %v3042, 6
        %v3116 = vsel %vm517, %v3090, %v3115
        %v3117 = vrot.slane %v3043, 6
        %v3118 = vsel %vm517, %v3091, %v3117
        %v3119 = vrot.slane %v3044, 6
        %v3120 = vsel %vm517, %v3092, %v3119
        %v3121 = vrot.slane %v3045, 6
        %v3122 = vsel %vm517, %v3093, %v3121
        %v3123 = vrot.slane %v3046, 6
        %v3124 = vsel %vm517, %v3094, %v3123
        %v3125 = vrot.slane %v3047, 6
        %v3126 = vsel %vm517, %v3095, %v3125
        %v3127 = vrot.slane %v3048, 6
        %v3128 = vsel %vm517, %v3096, %v3127
        %v3161 = vsel %vm517, 1.0, %v3081
        %v3162 = vsel %vm517, 1.0, %v3082
        %v3163 = vsel %vm517, 1.0, %v3083
        %v3164 = vsel %vm517, 1.0, %v3084
        %v3165 = vsel %vm517, 1.0, %v3085
        %v3166 = vsel %vm517, 1.0, %v3086
        %v3167 = vsel %vm517, 1.0, %v3087
        %v3168 = vsel %vm517, 1.0, %v3088
        %v3169 = vsel %vm517, 1.0, %v3089
        %v3170 = vsel %vm517, 1.0, %v3090
        %v3171 = vsel %vm517, 1.0, %v3091
        %v3172 = vsel %vm517, 1.0, %v3092
        %v3173 = vsel %vm517, 1.0, %v3093
        %v3174 = vsel %vm517, 1.0, %v3094
        %v3175 = vsel %vm517, 1.0, %v3095
        %v3176 = vsel %vm517, 1.0, %v3096
        %v3177 = vsel %vm528, %v3161, 1.0
        %v3178 = vsel %vm528, %v3162, 1.0
        %v3179 = vsel %vm528, %v3163, 1.0
        %v3180 = vsel %vm528, %v3164, 1.0
        %v3181 = vsel %vm528, %v3165, 1.0
        %v3182 = vsel %vm528, %v3166, 1.0
        %v3183 = vsel %vm528, %v3167, 1.0
        %v3184 = vsel %vm528, %v3168, 1.0
        %v3185 = vsel %vm528, %v3169, 1.0
        %v3186 = vsel %vm528, %v3170, 1.0
        %v3187 = vsel %vm528, %v3171, 1.0
        %v3188 = vsel %vm528, %v3172, 1.0
        %v3189 = vsel %vm528, %v3173, 1.0
        %v3190 = vsel %vm528, %v3174, 1.0
        %v3191 = vsel %vm528, %v3175, 1.0
        %v3192 = vsel %vm528, %v3176, 1.0
        %v3193 = vsel %vm529, %v3098, 1.0
        %v3194 = vsel %vm529, %v3100, 1.0
        %v3195 = vsel %vm529, %v3102, 1.0
        %v3196 = vsel %vm529, %v3104, 1.0
        %v3197 = vsel %vm529, %v3106, 1.0
        %v3198 = vsel %vm529, %v3108, 1.0
        %v3199 = vsel %vm529, %v3110, 1.0
        %v3200 = vsel %vm529, %v3112, 1.0
        %v3201 = vsel %vm529, %v3114, 1.0
        %v3202 = vsel %vm529, %v3116, 1.0
        %v3203 = vsel %vm529, %v3118, 1.0
        %v3204 = vsel %vm529, %v3120, 1.0
        %v3205 = vsel %vm529, %v3122, 1.0
        %v3206 = vsel %vm529, %v3124, 1.0
        %v3207 = vsel %vm529, %v3126, 1.0
        %v3208 = vsel %vm529, %v3128, 1.0
        %v3241 = vrot.slane %v2985, 6
        %v3242 = vrot.slane %v2986, 6
        %v3243 = vrot.slane %v2987, 6
        %v3244 = vrot.slane %v2988, 6
        %v3245 = vrot.slane %v2989, 6
        %v3246 = vrot.slane %v2990, 6
        %v3247 = vrot.slane %v2991, 6
        %v3248 = vrot.slane %v2992, 6
        %v3249 = vrot.slane %v2993, 6
        %v3250 = vrot.slane %v2994, 6
        %v3251 = vrot.slane %v2995, 6
        %v3252 = vrot.slane %v2996, 6
        %v3253 = vrot.slane %v2997, 6
        %v3254 = vrot.slane %v2998, 6
        %v3255 = vrot.slane %v2999, 6
        %v3256 = vrot.slane %v3000, 6
        %v3257 = vrot.slane %v3001, 6
        %v3258 = vsel %vm517, %v3241, %v3257
        %v3259 = vrot.slane %v3002, 6
        %v3260 = vsel %vm517, %v3242, %v3259
        %v3261 = vrot.slane %v3003, 6
        %v3262 = vsel %vm517, %v3243, %v3261
        %v3263 = vrot.slane %v3004, 6
        %v3264 = vsel %vm517, %v3244, %v3263
        %v3265 = vrot.slane %v3005, 6
        %v3266 = vsel %vm517, %v3245, %v3265
        %v3267 = vrot.slane %v3006, 6
        %v3268 = vsel %vm517, %v3246, %v3267
        %v3269 = vrot.slane %v3007, 6
        %v3270 = vsel %vm517, %v3247, %v3269
        %v3271 = vrot.slane %v3008, 6
        %v3272 = vsel %vm517, %v3248, %v3271
        %v3273 = vrot.slane %v3009, 6
        %v3274 = vsel %vm517, %v3249, %v3273
        %v3275 = vrot.slane %v3010, 6
        %v3276 = vsel %vm517, %v3250, %v3275
        %v3277 = vrot.slane %v3011, 6
        %v3278 = vsel %vm517, %v3251, %v3277
        %v3279 = vrot.slane %v3012, 6
        %v3280 = vsel %vm517, %v3252, %v3279
        %v3281 = vrot.slane %v3013, 6
        %v3282 = vsel %vm517, %v3253, %v3281
        %v3283 = vrot.slane %v3014, 6
        %v3284 = vsel %vm517, %v3254, %v3283
        %v3285 = vrot.slane %v3015, 6
        %v3286 = vsel %vm517, %v3255, %v3285
        %v3287 = vrot.slane %v3016, 6
        %v3288 = vsel %vm517, %v3256, %v3287
        %v3321 = vsel %vm517, 0.0, %v3241
        %v3322 = vsel %vm517, 0.0, %v3242
        %v3323 = vsel %vm517, 0.0, %v3243
        %v3324 = vsel %vm517, 0.0, %v3244
        %v3325 = vsel %vm517, 0.0, %v3245
        %v3326 = vsel %vm517, 0.0, %v3246
        %v3327 = vsel %vm517, 0.0, %v3247
        %v3328 = vsel %vm517, 0.0, %v3248
        %v3329 = vsel %vm517, 0.0, %v3249
        %v3330 = vsel %vm517, 0.0, %v3250
        %v3331 = vsel %vm517, 0.0, %v3251
        %v3332 = vsel %vm517, 0.0, %v3252
        %v3333 = vsel %vm517, 0.0, %v3253
        %v3334 = vsel %vm517, 0.0, %v3254
        %v3335 = vsel %vm517, 0.0, %v3255
        %v3336 = vsel %vm517, 0.0, %v3256
        %v3337 = vsel %vm528, %v3321, 0.0
        %v3338 = vsel %vm528, %v3322, 0.0
        %v3339 = vsel %vm528, %v3323, 0.0
        %v3340 = vsel %vm528, %v3324, 0.0
        %v3341 = vsel %vm528, %v3325, 0.0
        %v3342 = vsel %vm528, %v3326, 0.0
        %v3343 = vsel %vm528, %v3327, 0.0
        %v3344 = vsel %vm528, %v3328, 0.0
        %v3345 = vsel %vm528, %v3329, 0.0
        %v3346 = vsel %vm528, %v3330, 0.0
        %v3347 = vsel %vm528, %v3331, 0.0
        %v3348 = vsel %vm528, %v3332, 0.0
        %v3349 = vsel %vm528, %v3333, 0.0
        %v3350 = vsel %vm528, %v3334, 0.0
        %v3351 = vsel %vm528, %v3335, 0.0
        %v3352 = vsel %vm528, %v3336, 0.0
        %v3353 = vsel %vm529, %v3258, 0.0
        %v3354 = vsel %vm529, %v3260, 0.0
        %v3355 = vsel %vm529, %v3262, 0.0
        %v3356 = vsel %vm529, %v3264, 0.0
        %v3357 = vsel %vm529, %v3266, 0.0
        %v3358 = vsel %vm529, %v3268, 0.0
        %v3359 = vsel %vm529, %v3270, 0.0
        %v3360 = vsel %vm529, %v3272, 0.0
        %v3361 = vsel %vm529, %v3274, 0.0
        %v3362 = vsel %vm529, %v3276, 0.0
        %v3363 = vsel %vm529, %v3278, 0.0
        %v3364 = vsel %vm529, %v3280, 0.0
        %v3365 = vsel %vm529, %v3282, 0.0
        %v3366 = vsel %vm529, %v3284, 0.0
        %v3367 = vsel %vm529, %v3286, 0.0
        %v3368 = vsel %vm529, %v3288, 0.0
        %v3369 = vmul.f32 %v3017, %v3337
        %v3370 = vmul.f32 %v3018, %v3338
        %v3371 = vmul.f32 %v3019, %v3339
        %v3372 = vmul.f32 %v3020, %v3340
        %v3373 = vmul.f32 %v3021, %v3341
        %v3374 = vmul.f32 %v3022, %v3342
        %v3375 = vmul.f32 %v3023, %v3343
        %v3376 = vmul.f32 %v3024, %v3344
        %v3377 = vmul.f32 %v3025, %v3345
        %v3378 = vmul.f32 %v3026, %v3346
        %v3379 = vmul.f32 %v3027, %v3347
        %v3380 = vmul.f32 %v3028, %v3348
        %v3381 = vmul.f32 %v3029, %v3349
        %v3382 = vmul.f32 %v3030, %v3350
        %v3383 = vmul.f32 %v3031, %v3351
        %v3384 = vmul.f32 %v3032, %v3352
        %v3385 = vmul.f32 %v3033, %v3353
        %v3386 = vmul.f32 %v3034, %v3354
        %v3387 = vmul.f32 %v3035, %v3355
        %v3388 = vmul.f32 %v3036, %v3356
        %v3389 = vmul.f32 %v3037, %v3357
        %v3390 = vmul.f32 %v3038, %v3358
        %v3391 = vmul.f32 %v3039, %v3359
        %v3392 = vmul.f32 %v3040, %v3360
        %v3393 = vmul.f32 %v3041, %v3361
        %v3394 = vmul.f32 %v3042, %v3362
        %v3395 = vmul.f32 %v3043, %v3363
        %v3396 = vmul.f32 %v3044, %v3364
        %v3397 = vmul.f32 %v3045, %v3365
        %v3398 = vmul.f32 %v3046, %v3366
        %v3399 = vmul.f32 %v3047, %v3367
        %v3400 = vmul.f32 %v3048, %v3368
        %v3401 = vadd.f32 %v3369, %v2985
        %v3402 = vadd.f32 %v3370, %v2986
        %v3403 = vadd.f32 %v3371, %v2987
        %v3404 = vadd.f32 %v3372, %v2988
        %v3405 = vadd.f32 %v3373, %v2989
        %v3406 = vadd.f32 %v3374, %v2990
        %v3407 = vadd.f32 %v3375, %v2991
        %v3408 = vadd.f32 %v3376, %v2992
        %v3409 = vadd.f32 %v3377, %v2993
        %v3410 = vadd.f32 %v3378, %v2994
        %v3411 = vadd.f32 %v3379, %v2995
        %v3412 = vadd.f32 %v3380, %v2996
        %v3413 = vadd.f32 %v3381, %v2997
        %v3414 = vadd.f32 %v3382, %v2998
        %v3415 = vadd.f32 %v3383, %v2999
        %v3416 = vadd.f32 %v3384, %v3000
        %v3417 = vadd.f32 %v3385, %v3001
        %v3418 = vadd.f32 %v3386, %v3002
        %v3419 = vadd.f32 %v3387, %v3003
        %v3420 = vadd.f32 %v3388, %v3004
        %v3421 = vadd.f32 %v3389, %v3005
        %v3422 = vadd.f32 %v3390, %v3006
        %v3423 = vadd.f32 %v3391, %v3007
        %v3424 = vadd.f32 %v3392, %v3008
        %v3425 = vadd.f32 %v3393, %v3009
        %v3426 = vadd.f32 %v3394, %v3010
        %v3427 = vadd.f32 %v3395, %v3011
        %v3428 = vadd.f32 %v3396, %v3012
        %v3429 = vadd.f32 %v3397, %v3013
        %v3430 = vadd.f32 %v3398, %v3014
        %v3431 = vadd.f32 %v3399, %v3015
        %v3432 = vadd.f32 %v3400, %v3016
        %v3433 = vmul.f32 %v3017, %v3177
        %v3434 = vmul.f32 %v3018, %v3178
        %v3435 = vmul.f32 %v3019, %v3179
        %v3436 = vmul.f32 %v3020, %v3180
        %v3437 = vmul.f32 %v3021, %v3181
        %v3438 = vmul.f32 %v3022, %v3182
        %v3439 = vmul.f32 %v3023, %v3183
        %v3440 = vmul.f32 %v3024, %v3184
        %v3441 = vmul.f32 %v3025, %v3185
        %v3442 = vmul.f32 %v3026, %v3186
        %v3443 = vmul.f32 %v3027, %v3187
        %v3444 = vmul.f32 %v3028, %v3188
        %v3445 = vmul.f32 %v3029, %v3189
        %v3446 = vmul.f32 %v3030, %v3190
        %v3447 = vmul.f32 %v3031, %v3191
        %v3448 = vmul.f32 %v3032, %v3192
        %v3449 = vmul.f32 %v3033, %v3193
        %v3450 = vmul.f32 %v3034, %v3194
        %v3451 = vmul.f32 %v3035, %v3195
        %v3452 = vmul.f32 %v3036, %v3196
        %v3453 = vmul.f32 %v3037, %v3197
        %v3454 = vmul.f32 %v3038, %v3198
        %v3455 = vmul.f32 %v3039, %v3199
        %v3456 = vmul.f32 %v3040, %v3200
        %v3457 = vmul.f32 %v3041, %v3201
        %v3458 = vmul.f32 %v3042, %v3202
        %v3459 = vmul.f32 %v3043, %v3203
        %v3460 = vmul.f32 %v3044, %v3204
        %v3461 = vmul.f32 %v3045, %v3205
        %v3462 = vmul.f32 %v3046, %v3206
        %v3463 = vmul.f32 %v3047, %v3207
        %v3464 = vmul.f32 %v3048, %v3208
        %vm3465 = vcmp.ge.s32.totalorder %v492, 4
        %vm3466 = vcmp.ge.s32.totalorder %v493, 4
        %vm3499 = vcmask 1043456
        %v3500 = vrot.slane %v3401, 4
        %v3501 = vrot.slane %v3402, 4
        %v3502 = vrot.slane %v3403, 4
        %v3503 = vrot.slane %v3404, 4
        %v3504 = vrot.slane %v3405, 4
        %v3505 = vrot.slane %v3406, 4
        %v3506 = vrot.slane %v3407, 4
        %v3507 = vrot.slane %v3408, 4
        %v3508 = vrot.slane %v3409, 4
        %v3509 = vrot.slane %v3410, 4
        %v3510 = vrot.slane %v3411, 4
        %v3511 = vrot.slane %v3412, 4
        %v3512 = vrot.slane %v3413, 4
        %v3513 = vrot.slane %v3414, 4
        %v3514 = vrot.slane %v3415, 4
        %v3515 = vrot.slane %v3416, 4
        %v3516 = vrot.slane %v3417, 4
        %v3517 = vsel %vm3499, %v3500, %v3516
        %v3518 = vrot.slane %v3418, 4
        %v3519 = vsel %vm3499, %v3501, %v3518
        %v3520 = vrot.slane %v3419, 4
        %v3521 = vsel %vm3499, %v3502, %v3520
        %v3522 = vrot.slane %v3420, 4
        %v3523 = vsel %vm3499, %v3503, %v3522
        %v3524 = vrot.slane %v3421, 4
        %v3525 = vsel %vm3499, %v3504, %v3524
        %v3526 = vrot.slane %v3422, 4
        %v3527 = vsel %vm3499, %v3505, %v3526
        %v3528 = vrot.slane %v3423, 4
        %v3529 = vsel %vm3499, %v3506, %v3528
        %v3530 = vrot.slane %v3424, 4
        %v3531 = vsel %vm3499, %v3507, %v3530
        %v3532 = vrot.slane %v3425, 4
        %v3533 = vsel %vm3499, %v3508, %v3532
        %v3534 = vrot.slane %v3426, 4
        %v3535 = vsel %vm3499, %v3509, %v3534
        %v3536 = vrot.slane %v3427, 4
        %v3537 = vsel %vm3499, %v3510, %v3536
        %v3538 = vrot.slane %v3428, 4
        %v3539 = vsel %vm3499, %v3511, %v3538
        %v3540 = vrot.slane %v3429, 4
        %v3541 = vsel %vm3499, %v3512, %v3540
        %v3542 = vrot.slane %v3430, 4
        %v3543 = vsel %vm3499, %v3513, %v3542
        %v3544 = vrot.slane %v3431, 4
        %v3545 = vsel %vm3499, %v3514, %v3544
        %v3546 = vrot.slane %v3432, 4
        %v3547 = vsel %vm3499, %v3515, %v3546
        %v3580 = vsel %vm3499, 0.0, %v3500
        %v3581 = vsel %vm3499, 0.0, %v3501
        %v3582 = vsel %vm3499, 0.0, %v3502
        %v3583 = vsel %vm3499, 0.0, %v3503
        %v3584 = vsel %vm3499, 0.0, %v3504
        %v3585 = vsel %vm3499, 0.0, %v3505
        %v3586 = vsel %vm3499, 0.0, %v3506
        %v3587 = vsel %vm3499, 0.0, %v3507
        %v3588 = vsel %vm3499, 0.0, %v3508
        %v3589 = vsel %vm3499, 0.0, %v3509
        %v3590 = vsel %vm3499, 0.0, %v3510
        %v3591 = vsel %vm3499, 0.0, %v3511
        %v3592 = vsel %vm3499, 0.0, %v3512
        %v3593 = vsel %vm3499, 0.0, %v3513
        %v3594 = vsel %vm3499, 0.0, %v3514
        %v3595 = vsel %vm3499, 0.0, %v3515
        %v3596 = vsel %vm3465, 1, 0
        %v3597 = vsel %vm3466, 1, 0
        %vm3598 = vcmp.eq.s32.totalorder %v3596, 1
        %vm3599 = vcmp.eq.s32.totalorder %v3597, 1
        %v3600 = vsel %vm3598, %v3580, 0.0
        %v3601 = vsel %vm3598, %v3581, 0.0
        %v3602 = vsel %vm3598, %v3582, 0.0
        %v3603 = vsel %vm3598, %v3583, 0.0
        %v3604 = vsel %vm3598, %v3584, 0.0
        %v3605 = vsel %vm3598, %v3585, 0.0
        %v3606 = vsel %vm3598, %v3586, 0.0
        %v3607 = vsel %vm3598, %v3587, 0.0
        %v3608 = vsel %vm3598, %v3588, 0.0
        %v3609 = vsel %vm3598, %v3589, 0.0
        %v3610 = vsel %vm3598, %v3590, 0.0
        %v3611 = vsel %vm3598, %v3591, 0.0
        %v3612 = vsel %vm3598, %v3592, 0.0
        %v3613 = vsel %vm3598, %v3593, 0.0
        %v3614 = vsel %vm3598, %v3594, 0.0
        %v3615 = vsel %vm3598, %v3595, 0.0
        %v3616 = vsel %vm3599, %v3517, 0.0
        %v3617 = vsel %vm3599, %v3519, 0.0
        %v3618 = vsel %vm3599, %v3521, 0.0
        %v3619 = vsel %vm3599, %v3523, 0.0
        %v3620 = vsel %vm3599, %v3525, 0.0
        %v3621 = vsel %vm3599, %v3527, 0.0
        %v3622 = vsel %vm3599, %v3529, 0.0
        %v3623 = vsel %vm3599, %v3531, 0.0
        %v3624 = vsel %vm3599, %v3533, 0.0
        %v3625 = vsel %vm3599, %v3535, 0.0
        %v3626 = vsel %vm3599, %v3537, 0.0
        %v3627 = vsel %vm3599, %v3539, 0.0
        %v3628 = vsel %vm3599, %v3541, 0.0
        %v3629 = vsel %vm3599, %v3543, 0.0
        %v3630 = vsel %vm3599, %v3545, 0.0
        %v3631 = vsel %vm3599, %v3547, 0.0
        %v3632 = vmul.f32 %v3433, %v3600
        %v3633 = vmul.f32 %v3434, %v3601
        %v3634 = vmul.f32 %v3435, %v3602
        %v3635 = vmul.f32 %v3436, %v3603
        %v3636 = vmul.f32 %v3437, %v3604
        %v3637 = vmul.f32 %v3438, %v3605
        %v3638 = vmul.f32 %v3439, %v3606
        %v3639 = vmul.f32 %v3440, %v3607
        %v3640 = vmul.f32 %v3441, %v3608
        %v3641 = vmul.f32 %v3442, %v3609
        %v3642 = vmul.f32 %v3443, %v3610
        %v3643 = vmul.f32 %v3444, %v3611
        %v3644 = vmul.f32 %v3445, %v3612
        %v3645 = vmul.f32 %v3446, %v3613
        %v3646 = vmul.f32 %v3447, %v3614
        %v3647 = vmul.f32 %v3448, %v3615
        %v3648 = vmul.f32 %v3449, %v3616
        %v3649 = vmul.f32 %v3450, %v3617
        %v3650 = vmul.f32 %v3451, %v3618
        %v3651 = vmul.f32 %v3452, %v3619
        %v3652 = vmul.f32 %v3453, %v3620
        %v3653 = vmul.f32 %v3454, %v3621
        %v3654 = vmul.f32 %v3455, %v3622
        %v3655 = vmul.f32 %v3456, %v3623
        %v3656 = vmul.f32 %v3457, %v3624
        %v3657 = vmul.f32 %v3458, %v3625
        %v3658 = vmul.f32 %v3459, %v3626
        %v3659 = vmul.f32 %v3460, %v3627
        %v3660 = vmul.f32 %v3461, %v3628
        %v3661 = vmul.f32 %v3462, %v3629
        %v3662 = vmul.f32 %v3463, %v3630
        %v3663 = vmul.f32 %v3464, %v3631
        %v3664 = vadd.f32 %v3632, %v3401
        %v3665 = vadd.f32 %v3633, %v3402
        %v3666 = vadd.f32 %v3634, %v3403
        %v3667 = vadd.f32 %v3635, %v3404
        %v3668 = vadd.f32 %v3636, %v3405
        %v3669 = vadd.f32 %v3637, %v3406
        %v3670 = vadd.f32 %v3638, %v3407
        %v3671 = vadd.f32 %v3639, %v3408
        %v3672 = vadd.f32 %v3640, %v3409
        %v3673 = vadd.f32 %v3641, %v3410
        %v3674 = vadd.f32 %v3642, %v3411
        %v3675 = vadd.f32 %v3643, %v3412
        %v3676 = vadd.f32 %v3644, %v3413
        %v3677 = vadd.f32 %v3645, %v3414
        %v3678 = vadd.f32 %v3646, %v3415
        %v3679 = vadd.f32 %v3647, %v3416
        %v3680 = vadd.f32 %v3648, %v3417
        %v3681 = vadd.f32 %v3649, %v3418
        %v3682 = vadd.f32 %v3650, %v3419
        %v3683 = vadd.f32 %v3651, %v3420
        %v3684 = vadd.f32 %v3652, %v3421
        %v3685 = vadd.f32 %v3653, %v3422
        %v3686 = vadd.f32 %v3654, %v3423
        %v3687 = vadd.f32 %v3655, %v3424
        %v3688 = vadd.f32 %v3656, %v3425
        %v3689 = vadd.f32 %v3657, %v3426
        %v3690 = vadd.f32 %v3658, %v3427
        %v3691 = vadd.f32 %v3659, %v3428
        %v3692 = vadd.f32 %v3660, %v3429
        %v3693 = vadd.f32 %v3661, %v3430
        %v3694 = vadd.f32 %v3662, %v3431
        %v3695 = vadd.f32 %v3663, %v3432
        %v3696 = vmul.f32 %v3664, %v2251
        %v3697 = vmul.f32 %v3665, %v2274
        %v3698 = vmul.f32 %v3666, %v2297
        %v3699 = vmul.f32 %v3667, %v2320
        %v3700 = vmul.f32 %v3668, %v2343
        %v3701 = vmul.f32 %v3669, %v2366
        %v3702 = vmul.f32 %v3670, %v2389
        %v3703 = vmul.f32 %v3671, %v2412
        %v3704 = vmul.f32 %v3672, %v2435
        %v3705 = vmul.f32 %v3673, %v2458
        %v3706 = vmul.f32 %v3674, %v2481
        %v3707 = vmul.f32 %v3675, %v2504
        %v3708 = vmul.f32 %v3676, %v2527
        %v3709 = vmul.f32 %v3677, %v2550
        %v3710 = vmul.f32 %v3678, %v2573
        %v3711 = vmul.f32 %v3679, %v2596
        %v3712 = vmul.f32 %v3680, %v2254
        %v3713 = vmul.f32 %v3681, %v2277
        %v3714 = vmul.f32 %v3682, %v2300
        %v3715 = vmul.f32 %v3683, %v2323
        %v3716 = vmul.f32 %v3684, %v2346
        %v3717 = vmul.f32 %v3685, %v2369
        %v3718 = vmul.f32 %v3686, %v2392
        %v3719 = vmul.f32 %v3687, %v2415
        %v3720 = vmul.f32 %v3688, %v2438
        %v3721 = vmul.f32 %v3689, %v2461
        %v3722 = vmul.f32 %v3690, %v2484
        %v3723 = vmul.f32 %v3691, %v2507
        %v3724 = vmul.f32 %v3692, %v2530
        %v3725 = vmul.f32 %v3693, %v2553
        %v3726 = vmul.f32 %v3694, %v2576
        %v3727 = vmul.f32 %v3695, %v2599
        %v3728 = vld [vmem:[#allocation7] sm:$0xff]
        %v3729 = vld [vmem:[#allocation7 + $0x8] sm:$0xff]
        %v3730 = vld [vmem:[#allocation7 + $0x10] sm:$0xff]
        %v3731 = vld [vmem:[#allocation7 + $0x18] sm:$0xff]
        %v3732 = vld [vmem:[#allocation7 + $0x20] sm:$0xff]
        %v3733 = vld [vmem:[#allocation7 + $0x28] sm:$0xff]
        %v3734 = vld [vmem:[#allocation7 + $0x30] sm:$0xff]
        %v3735 = vld [vmem:[#allocation7 + $0x38] sm:$0xff]
        %v3736 = vld [vmem:[#allocation7 + $0x40] sm:$0xff]
        %v3737 = vld [vmem:[#allocation7 + $0x48] sm:$0xff]
        %v3738 = vld [vmem:[#allocation7 + $0x50] sm:$0xff]
        %v3739 = vld [vmem:[#allocation7 + $0x58] sm:$0xff]
        %v3740 = vld [vmem:[#allocation7 + $0x60] sm:$0xff]
        %v3741 = vld [vmem:[#allocation7 + $0x68] sm:$0xff]
        %v3742 = vld [vmem:[#allocation7 + $0x70] sm:$0xff]
        %v3743 = vld [vmem:[#allocation7 + $0x78] sm:$0xff]
        %v3744 = vld [vmem:[#allocation7 + $0x80] sm:$0xff]
        %v3745 = vld [vmem:[#allocation7 + $0x88] sm:$0xff]
        %v3746 = vld [vmem:[#allocation7 + $0x90] sm:$0xff]
        %v3747 = vld [vmem:[#allocation7 + $0x98] sm:$0xff]
        %v3748 = vld [vmem:[#allocation7 + $0xa0] sm:$0xff]
        %v3749 = vld [vmem:[#allocation7 + $0xa8] sm:$0xff]
        %v3750 = vld [vmem:[#allocation7 + $0xb0] sm:$0xff]
        %v3751 = vld [vmem:[#allocation7 + $0xb8] sm:$0xff]
        %v3752 = vld [vmem:[#allocation7 + $0xc0] sm:$0xff]
        %v3753 = vld [vmem:[#allocation7 + $0xc8] sm:$0xff]
        %v3754 = vld [vmem:[#allocation7 + $0xd0] sm:$0xff]
        %v3755 = vld [vmem:[#allocation7 + $0xd8] sm:$0xff]
        %v3756 = vld [vmem:[#allocation7 + $0xe0] sm:$0xff]
        %v3757 = vld [vmem:[#allocation7 + $0xe8] sm:$0xff]
        %v3758 = vld [vmem:[#allocation7 + $0xf0] sm:$0xff]
        %v3759 = vld [vmem:[#allocation7 + $0xf8] sm:$0xff]
        %v3760 = vld [vmem:[#allocation7 + $0x100] sm:$0xff]
        %v3761 = vld [vmem:[#allocation7 + $0x108] sm:$0xff]
        %v3762 = vld [vmem:[#allocation7 + $0x110] sm:$0xff]
        %v3763 = vld [vmem:[#allocation7 + $0x118] sm:$0xff]
        %v3764 = vld [vmem:[#allocation7 + $0x120] sm:$0xff]
        %v3765 = vld [vmem:[#allocation7 + $0x128] sm:$0xff]
        %v3766 = vld [vmem:[#allocation7 + $0x130] sm:$0xff]
        %v3767 = vld [vmem:[#allocation7 + $0x138] sm:$0xff]
        %v3768 = vld [vmem:[#allocation7 + $0x140] sm:$0xff]
        %v3769 = vld [vmem:[#allocation7 + $0x148] sm:$0xff]
        %v3770 = vld [vmem:[#allocation7 + $0x150] sm:$0xff]
        %v3771 = vld [vmem:[#allocation7 + $0x158] sm:$0xff]
        %v3772 = vld [vmem:[#allocation7 + $0x160] sm:$0xff]
        %v3773 = vld [vmem:[#allocation7 + $0x168] sm:$0xff]
        %v3774 = vld [vmem:[#allocation7 + $0x170] sm:$0xff]
        %v3775 = vld [vmem:[#allocation7 + $0x178] sm:$0xff]
        %v3776 = vld [vmem:[#allocation7 + $0x180] sm:$0xff]
        %v3777 = vld [vmem:[#allocation7 + $0x188] sm:$0xff]
        %v3778 = vld [vmem:[#allocation7 + $0x190] sm:$0xff]
        %v3779 = vld [vmem:[#allocation7 + $0x198] sm:$0xff]
        %v3780 = vld [vmem:[#allocation7 + $0x1a0] sm:$0xff]
        %v3781 = vld [vmem:[#allocation7 + $0x1a8] sm:$0xff]
        %v3782 = vld [vmem:[#allocation7 + $0x1b0] sm:$0xff]
        %v3783 = vld [vmem:[#allocation7 + $0x1b8] sm:$0xff]
        %v3784 = vld [vmem:[#allocation7 + $0x1c0] sm:$0xff]
        %v3785 = vld [vmem:[#allocation7 + $0x1c8] sm:$0xff]
        %v3786 = vld [vmem:[#allocation7 + $0x1d0] sm:$0xff]
        %v3787 = vld [vmem:[#allocation7 + $0x1d8] sm:$0xff]
        %v3788 = vld [vmem:[#allocation7 + $0x1e0] sm:$0xff]
        %v3789 = vld [vmem:[#allocation7 + $0x1e8] sm:$0xff]
        %v3790 = vld [vmem:[#allocation7 + $0x1f0] sm:$0xff]
        %v3791 = vld [vmem:[#allocation7 + $0x1f8] sm:$0xff]
        %v3792 = vld [vmem:[#allocation7 + $0x200] sm:$0xff]
        %v3793 = vld [vmem:[#allocation7 + $0x208] sm:$0xff]
        %v3794 = vld [vmem:[#allocation7 + $0x210] sm:$0xff]
        %v3795 = vld [vmem:[#allocation7 + $0x218] sm:$0xff]
        %v3796 = vld [vmem:[#allocation7 + $0x220] sm:$0xff]
        %v3797 = vld [vmem:[#allocation7 + $0x228] sm:$0xff]
        %v3798 = vld [vmem:[#allocation7 + $0x230] sm:$0xff]
        %v3799 = vld [vmem:[#allocation7 + $0x238] sm:$0xff]
        %v3800 = vld [vmem:[#allocation7 + $0x240] sm:$0xff]
        %v3801 = vld [vmem:[#allocation7 + $0x248] sm:$0xff]
        %v3802 = vld [vmem:[#allocation7 + $0x250] sm:$0xff]
        %v3803 = vld [vmem:[#allocation7 + $0x258] sm:$0xff]
        %v3804 = vld [vmem:[#allocation7 + $0x260] sm:$0xff]
        %v3805 = vld [vmem:[#allocation7 + $0x268] sm:$0xff]
        %v3806 = vld [vmem:[#allocation7 + $0x270] sm:$0xff]
        %v3807 = vld [vmem:[#allocation7 + $0x278] sm:$0xff]
        %v3808 = vld [vmem:[#allocation7 + $0x280] sm:$0xff]
        %v3809 = vld [vmem:[#allocation7 + $0x288] sm:$0xff]
        %v3810 = vld [vmem:[#allocation7 + $0x290] sm:$0xff]
        %v3811 = vld [vmem:[#allocation7 + $0x298] sm:$0xff]
        %v3812 = vld [vmem:[#allocation7 + $0x2a0] sm:$0xff]
        %v3813 = vld [vmem:[#allocation7 + $0x2a8] sm:$0xff]
        %v3814 = vld [vmem:[#allocation7 + $0x2b0] sm:$0xff]
        %v3815 = vld [vmem:[#allocation7 + $0x2b8] sm:$0xff]
        %v3816 = vld [vmem:[#allocation7 + $0x2c0] sm:$0xff]
        %v3817 = vld [vmem:[#allocation7 + $0x2c8] sm:$0xff]
        %v3818 = vld [vmem:[#allocation7 + $0x2d0] sm:$0xff]
        %v3819 = vld [vmem:[#allocation7 + $0x2d8] sm:$0xff]
        %v3820 = vld [vmem:[#allocation7 + $0x2e0] sm:$0xff]
        %v3821 = vld [vmem:[#allocation7 + $0x2e8] sm:$0xff]
        %v3822 = vld [vmem:[#allocation7 + $0x2f0] sm:$0xff]
        %v3823 = vld [vmem:[#allocation7 + $0x2f8] sm:$0xff]
        %v3824 = vld [vmem:[#allocation7 + $0x300] sm:$0xff]
        %v3825 = vld [vmem:[#allocation7 + $0x308] sm:$0xff]
        %v3826 = vld [vmem:[#allocation7 + $0x310] sm:$0xff]
        %v3827 = vld [vmem:[#allocation7 + $0x318] sm:$0xff]
        %v3828 = vld [vmem:[#allocation7 + $0x320] sm:$0xff]
        %v3829 = vld [vmem:[#allocation7 + $0x328] sm:$0xff]
        %v3830 = vld [vmem:[#allocation7 + $0x330] sm:$0xff]
        %v3831 = vld [vmem:[#allocation7 + $0x338] sm:$0xff]
        %v3832 = vld [vmem:[#allocation7 + $0x340] sm:$0xff]
        %v3833 = vld [vmem:[#allocation7 + $0x348] sm:$0xff]
        %v3834 = vld [vmem:[#allocation7 + $0x350] sm:$0xff]
        %v3835 = vld [vmem:[#allocation7 + $0x358] sm:$0xff]
        %v3836 = vld [vmem:[#allocation7 + $0x360] sm:$0xff]
        %v3837 = vld [vmem:[#allocation7 + $0x368] sm:$0xff]
        %v3838 = vld [vmem:[#allocation7 + $0x370] sm:$0xff]
        %v3839 = vld [vmem:[#allocation7 + $0x378] sm:$0xff]
        %v3840 = vld [vmem:[#allocation7 + $0x380] sm:$0xff]
        %v3841 = vld [vmem:[#allocation7 + $0x388] sm:$0xff]
        %v3842 = vld [vmem:[#allocation7 + $0x390] sm:$0xff]
        %v3843 = vld [vmem:[#allocation7 + $0x398] sm:$0xff]
        %v3844 = vld [vmem:[#allocation7 + $0x3a0] sm:$0xff]
        %v3845 = vld [vmem:[#allocation7 + $0x3a8] sm:$0xff]
        %v3846 = vld [vmem:[#allocation7 + $0x3b0] sm:$0xff]
        %v3847 = vld [vmem:[#allocation7 + $0x3b8] sm:$0xff]
        %v3848 = vld [vmem:[#allocation7 + $0x3c0] sm:$0xff]
        %v3849 = vld [vmem:[#allocation7 + $0x3c8] sm:$0xff]
        %v3850 = vld [vmem:[#allocation7 + $0x3d0] sm:$0xff]
        %v3851 = vld [vmem:[#allocation7 + $0x3d8] sm:$0xff]
        %v3852 = vld [vmem:[#allocation7 + $0x3e0] sm:$0xff]
        %v3853 = vld [vmem:[#allocation7 + $0x3e8] sm:$0xff]
        %v3854 = vld [vmem:[#allocation7 + $0x3f0] sm:$0xff]
        %v3855 = vld [vmem:[#allocation7 + $0x3f8] sm:$0xff]
        %v3856 = vld [vmem:[#allocation7 + $0x400] sm:$0xff]
        %v3857 = vld [vmem:[#allocation7 + $0x408] sm:$0xff]
        %v3858 = vld [vmem:[#allocation7 + $0x410] sm:$0xff]
        %v3859 = vld [vmem:[#allocation7 + $0x418] sm:$0xff]
        %v3860 = vld [vmem:[#allocation7 + $0x420] sm:$0xff]
        %v3861 = vld [vmem:[#allocation7 + $0x428] sm:$0xff]
        %v3862 = vld [vmem:[#allocation7 + $0x430] sm:$0xff]
        %v3863 = vld [vmem:[#allocation7 + $0x438] sm:$0xff]
        %v3864 = vld [vmem:[#allocation7 + $0x440] sm:$0xff]
        %v3865 = vld [vmem:[#allocation7 + $0x448] sm:$0xff]
        %v3866 = vld [vmem:[#allocation7 + $0x450] sm:$0xff]
        %v3867 = vld [vmem:[#allocation7 + $0x458] sm:$0xff]
        %v3868 = vld [vmem:[#allocation7 + $0x460] sm:$0xff]
        %v3869 = vld [vmem:[#allocation7 + $0x468] sm:$0xff]
        %v3870 = vld [vmem:[#allocation7 + $0x470] sm:$0xff]
        %v3871 = vld [vmem:[#allocation7 + $0x478] sm:$0xff]
        %v3872 = vld [vmem:[#allocation7 + $0x480] sm:$0xff]
        %v3873 = vld [vmem:[#allocation7 + $0x488] sm:$0xff]
        %v3874 = vld [vmem:[#allocation7 + $0x490] sm:$0xff]
        %v3875 = vld [vmem:[#allocation7 + $0x498] sm:$0xff]
        %v3876 = vld [vmem:[#allocation7 + $0x4a0] sm:$0xff]
        %v3877 = vld [vmem:[#allocation7 + $0x4a8] sm:$0xff]
        %v3878 = vld [vmem:[#allocation7 + $0x4b0] sm:$0xff]
        %v3879 = vld [vmem:[#allocation7 + $0x4b8] sm:$0xff]
        %v3880 = vld [vmem:[#allocation7 + $0x4c0] sm:$0xff]
        %v3881 = vld [vmem:[#allocation7 + $0x4c8] sm:$0xff]
        %v3882 = vld [vmem:[#allocation7 + $0x4d0] sm:$0xff]
        %v3883 = vld [vmem:[#allocation7 + $0x4d8] sm:$0xff]
        %v3884 = vld [vmem:[#allocation7 + $0x4e0] sm:$0xff]
        %v3885 = vld [vmem:[#allocation7 + $0x4e8] sm:$0xff]
        %v3886 = vld [vmem:[#allocation7 + $0x4f0] sm:$0xff]
        %v3887 = vld [vmem:[#allocation7 + $0x4f8] sm:$0xff]
        %v3888 = vld [vmem:[#allocation7 + $0x500] sm:$0xff]
        %v3889 = vld [vmem:[#allocation7 + $0x508] sm:$0xff]
        %v3890 = vld [vmem:[#allocation7 + $0x510] sm:$0xff]
        %v3891 = vld [vmem:[#allocation7 + $0x518] sm:$0xff]
        %v3892 = vld [vmem:[#allocation7 + $0x520] sm:$0xff]
        %v3893 = vld [vmem:[#allocation7 + $0x528] sm:$0xff]
        %v3894 = vld [vmem:[#allocation7 + $0x530] sm:$0xff]
        %v3895 = vld [vmem:[#allocation7 + $0x538] sm:$0xff]
        %v3896 = vld [vmem:[#allocation7 + $0x540] sm:$0xff]
        %v3897 = vld [vmem:[#allocation7 + $0x548] sm:$0xff]
        %v3898 = vld [vmem:[#allocation7 + $0x550] sm:$0xff]
        %v3899 = vld [vmem:[#allocation7 + $0x558] sm:$0xff]
        %v3900 = vld [vmem:[#allocation7 + $0x560] sm:$0xff]
        %v3901 = vld [vmem:[#allocation7 + $0x568] sm:$0xff]
        %v3902 = vld [vmem:[#allocation7 + $0x570] sm:$0xff]
        %v3903 = vld [vmem:[#allocation7 + $0x578] sm:$0xff]
        %v3904 = vld [vmem:[#allocation7 + $0x580] sm:$0xff]
        %v3905 = vld [vmem:[#allocation7 + $0x588] sm:$0xff]
        %v3906 = vld [vmem:[#allocation7 + $0x590] sm:$0xff]
        %v3907 = vld [vmem:[#allocation7 + $0x598] sm:$0xff]
        %v3908 = vld [vmem:[#allocation7 + $0x5a0] sm:$0xff]
        %v3909 = vld [vmem:[#allocation7 + $0x5a8] sm:$0xff]
        %v3910 = vld [vmem:[#allocation7 + $0x5b0] sm:$0xff]
        %v3911 = vld [vmem:[#allocation7 + $0x5b8] sm:$0xff]
        %v3912 = vld [vmem:[#allocation7 + $0x5c0] sm:$0xff]
        %v3913 = vld [vmem:[#allocation7 + $0x5c8] sm:$0xff]
        %v3914 = vld [vmem:[#allocation7 + $0x5d0] sm:$0xff]
        %v3915 = vld [vmem:[#allocation7 + $0x5d8] sm:$0xff]
        %v3916 = vld [vmem:[#allocation7 + $0x5e0] sm:$0xff]
        %v3917 = vld [vmem:[#allocation7 + $0x5e8] sm:$0xff]
        %v3918 = vld [vmem:[#allocation7 + $0x5f0] sm:$0xff]
        %v3919 = vld [vmem:[#allocation7 + $0x5f8] sm:$0xff]
        %v3920 = vld [vmem:[#allocation7 + $0x600] sm:$0xff]
        %v3921 = vld [vmem:[#allocation7 + $0x608] sm:$0xff]
        %v3922 = vld [vmem:[#allocation7 + $0x610] sm:$0xff]
        %v3923 = vld [vmem:[#allocation7 + $0x618] sm:$0xff]
        %v3924 = vld [vmem:[#allocation7 + $0x620] sm:$0xff]
        %v3925 = vld [vmem:[#allocation7 + $0x628] sm:$0xff]
        %v3926 = vld [vmem:[#allocation7 + $0x630] sm:$0xff]
        %v3927 = vld [vmem:[#allocation7 + $0x638] sm:$0xff]
        %v3928 = vld [vmem:[#allocation7 + $0x640] sm:$0xff]
        %v3929 = vld [vmem:[#allocation7 + $0x648] sm:$0xff]
        %v3930 = vld [vmem:[#allocation7 + $0x650] sm:$0xff]
        %v3931 = vld [vmem:[#allocation7 + $0x658] sm:$0xff]
        %v3932 = vld [vmem:[#allocation7 + $0x660] sm:$0xff]
        %v3933 = vld [vmem:[#allocation7 + $0x668] sm:$0xff]
        %v3934 = vld [vmem:[#allocation7 + $0x670] sm:$0xff]
        %v3935 = vld [vmem:[#allocation7 + $0x678] sm:$0xff]
        %v3936 = vld [vmem:[#allocation7 + $0x680] sm:$0xff]
        %v3937 = vld [vmem:[#allocation7 + $0x688] sm:$0xff]
        %v3938 = vld [vmem:[#allocation7 + $0x690] sm:$0xff]
        %v3939 = vld [vmem:[#allocation7 + $0x698] sm:$0xff]
        %v3940 = vld [vmem:[#allocation7 + $0x6a0] sm:$0xff]
        %v3941 = vld [vmem:[#allocation7 + $0x6a8] sm:$0xff]
        %v3942 = vld [vmem:[#allocation7 + $0x6b0] sm:$0xff]
        %v3943 = vld [vmem:[#allocation7 + $0x6b8] sm:$0xff]
        %v3944 = vld [vmem:[#allocation7 + $0x6c0] sm:$0xff]
        %v3945 = vld [vmem:[#allocation7 + $0x6c8] sm:$0xff]
        %v3946 = vld [vmem:[#allocation7 + $0x6d0] sm:$0xff]
        %v3947 = vld [vmem:[#allocation7 + $0x6d8] sm:$0xff]
        %v3948 = vld [vmem:[#allocation7 + $0x6e0] sm:$0xff]
        %v3949 = vld [vmem:[#allocation7 + $0x6e8] sm:$0xff]
        %v3950 = vld [vmem:[#allocation7 + $0x6f0] sm:$0xff]
        %v3951 = vld [vmem:[#allocation7 + $0x6f8] sm:$0xff]
        %v3952 = vld [vmem:[#allocation7 + $0x700] sm:$0xff]
        %v3953 = vld [vmem:[#allocation7 + $0x708] sm:$0xff]
        %v3954 = vld [vmem:[#allocation7 + $0x710] sm:$0xff]
        %v3955 = vld [vmem:[#allocation7 + $0x718] sm:$0xff]
        %v3956 = vld [vmem:[#allocation7 + $0x720] sm:$0xff]
        %v3957 = vld [vmem:[#allocation7 + $0x728] sm:$0xff]
        %v3958 = vld [vmem:[#allocation7 + $0x730] sm:$0xff]
        %v3959 = vld [vmem:[#allocation7 + $0x738] sm:$0xff]
        %v3960 = vld [vmem:[#allocation7 + $0x740] sm:$0xff]
        %v3961 = vld [vmem:[#allocation7 + $0x748] sm:$0xff]
        %v3962 = vld [vmem:[#allocation7 + $0x750] sm:$0xff]
        %v3963 = vld [vmem:[#allocation7 + $0x758] sm:$0xff]
        %v3964 = vld [vmem:[#allocation7 + $0x760] sm:$0xff]
        %v3965 = vld [vmem:[#allocation7 + $0x768] sm:$0xff]
        %v3966 = vld [vmem:[#allocation7 + $0x770] sm:$0xff]
        %v3967 = vld [vmem:[#allocation7 + $0x778] sm:$0xff]
        %v3968 = vld [vmem:[#allocation7 + $0x780] sm:$0xff]
        %v3969 = vld [vmem:[#allocation7 + $0x788] sm:$0xff]
        %v3970 = vld [vmem:[#allocation7 + $0x790] sm:$0xff]
        %v3971 = vld [vmem:[#allocation7 + $0x798] sm:$0xff]
        %v3972 = vld [vmem:[#allocation7 + $0x7a0] sm:$0xff]
        %v3973 = vld [vmem:[#allocation7 + $0x7a8] sm:$0xff]
        %v3974 = vld [vmem:[#allocation7 + $0x7b0] sm:$0xff]
        %v3975 = vld [vmem:[#allocation7 + $0x7b8] sm:$0xff]
        %v3976 = vld [vmem:[#allocation7 + $0x7c0] sm:$0xff]
        %v3977 = vld [vmem:[#allocation7 + $0x7c8] sm:$0xff]
        %v3978 = vld [vmem:[#allocation7 + $0x7d0] sm:$0xff]
        %v3979 = vld [vmem:[#allocation7 + $0x7d8] sm:$0xff]
        %v3980 = vld [vmem:[#allocation7 + $0x7e0] sm:$0xff]
        %v3981 = vld [vmem:[#allocation7 + $0x7e8] sm:$0xff]
        %v3982 = vld [vmem:[#allocation7 + $0x7f0] sm:$0xff]
        %v3983 = vld [vmem:[#allocation7 + $0x7f8] sm:$0xff]
        %v3984 = vperm.slane %v387, 7
        %v3985 = vmul.f32 %v600, %v3984
        %v3986 = vmul.f32 %v601, %v3984
        %3987 = vmatpush.msra.mxu0 %v3743
        %3988 = vmatpush.msra.mxu0 %v3742
        %3989 = vmatpush.msra.mxu0 %v3741
        %3990 = vmatpush.msra.mxu0 %v3740
        %3991 = vmatpush.msra.mxu0 %v3739
        %3992 = vmatpush.msra.mxu0 %v3738
        %3993 = vmatpush.msra.mxu0 %v3737
        %3994 = vmatpush.msra.mxu0 %v3736
        %3995 = vmatpush.msra.mxu0 %v3735
        %3996 = vmatpush.msra.mxu0 %v3734
        %3997 = vmatpush.msra.mxu0 %v3733
        %3998 = vmatpush.msra.mxu0 %v3732
        %3999 = vmatpush.msra.mxu0 %v3731
        %4000 = vmatpush.msra.mxu0 %v3730
        %4001 = vmatpush.msra.mxu0 %v3729
        %4002 = vmatpush.msra.mxu0 %v3728
        %4003 = vmatmul.f32.gmra.mxu0 %v3696
        %v4004 = vpop.f32.mrf.mxu0
        %v4005 = vadd.f32 %v3985, %v4004
        %4006 = vmatmul.f32.gmra.mxu0 %v3712
        %v4007 = vpop.f32.mrf.mxu0
        %v4008 = vadd.f32 %v3986, %v4007
        %4009 = vdwg.mxu0
        %4010 = vmatpush.msra.mxu0 %v3759
        %4011 = vmatpush.msra.mxu0 %v3758
        %4012 = vmatpush.msra.mxu0 %v3757
        %4013 = vmatpush.msra.mxu0 %v3756
        %4014 = vmatpush.msra.mxu0 %v3755
        %4015 = vmatpush.msra.mxu0 %v3754
        %4016 = vmatpush.msra.mxu0 %v3753
        %4017 = vmatpush.msra.mxu0 %v3752
        %4018 = vmatpush.msra.mxu0 %v3751
        %4019 = vmatpush.msra.mxu0 %v3750
        %4020 = vmatpush.msra.mxu0 %v3749
        %4021 = vmatpush.msra.mxu0 %v3748
        %4022 = vmatpush.msra.mxu0 %v3747
        %4023 = vmatpush.msra.mxu0 %v3746
        %4024 = vmatpush.msra.mxu0 %v3745
        %4025 = vmatpush.msra.mxu0 %v3744
        %4026 = vmatmul.f32.gmra.mxu0 %v3697
        %v4027 = vpop.f32.mrf.mxu0
        %v4028 = vadd.f32 %v4005, %v4027
        %4029 = vmatmul.f32.gmra.mxu0 %v3713
        %v4030 = vpop.f32.mrf.mxu0
        %v4031 = vadd.f32 %v4008, %v4030
        %4032 = vdwg.mxu0
        %4033 = vmatpush.msra.mxu0 %v3775
        %4034 = vmatpush.msra.mxu0 %v3774
        %4035 = vmatpush.msra.mxu0 %v3773
        %4036 = vmatpush.msra.mxu0 %v3772
        %4037 = vmatpush.msra.mxu0 %v3771
        %4038 = vmatpush.msra.mxu0 %v3770
        %4039 = vmatpush.msra.mxu0 %v3769
        %4040 = vmatpush.msra.mxu0 %v3768
        %4041 = vmatpush.msra.mxu0 %v3767
        %4042 = vmatpush.msra.mxu0 %v3766
        %4043 = vmatpush.msra.mxu0 %v3765
        %4044 = vmatpush.msra.mxu0 %v3764
        %4045 = vmatpush.msra.mxu0 %v3763
        %4046 = vmatpush.msra.mxu0 %v3762
        %4047 = vmatpush.msra.mxu0 %v3761
        %4048 = vmatpush.msra.mxu0 %v3760
        %4049 = vmatmul.f32.gmra.mxu0 %v3698
        %v4050 = vpop.f32.mrf.mxu0
        %v4051 = vadd.f32 %v4028, %v4050
        %4052 = vmatmul.f32.gmra.mxu0 %v3714
        %v4053 = vpop.f32.mrf.mxu0
        %v4054 = vadd.f32 %v4031, %v4053
        %4055 = vdwg.mxu0
        %4056 = vmatpush.msra.mxu0 %v3791
        %4057 = vmatpush.msra.mxu0 %v3790
        %4058 = vmatpush.msra.mxu0 %v3789
        %4059 = vmatpush.msra.mxu0 %v3788
        %4060 = vmatpush.msra.mxu0 %v3787
        %4061 = vmatpush.msra.mxu0 %v3786
        %4062 = vmatpush.msra.mxu0 %v3785
        %4063 = vmatpush.msra.mxu0 %v3784
        %4064 = vmatpush.msra.mxu0 %v3783
        %4065 = vmatpush.msra.mxu0 %v3782
        %4066 = vmatpush.msra.mxu0 %v3781
        %4067 = vmatpush.msra.mxu0 %v3780
        %4068 = vmatpush.msra.mxu0 %v3779
        %4069 = vmatpush.msra.mxu0 %v3778
        %4070 = vmatpush.msra.mxu0 %v3777
        %4071 = vmatpush.msra.mxu0 %v3776
        %4072 = vmatmul.f32.gmra.mxu0 %v3699
        %v4073 = vpop.f32.mrf.mxu0
        %v4074 = vadd.f32 %v4051, %v4073
        %4075 = vmatmul.f32.gmra.mxu0 %v3715
        %v4076 = vpop.f32.mrf.mxu0
        %v4077 = vadd.f32 %v4054, %v4076
        %4078 = vdwg.mxu0
        %4079 = vmatpush.msra.mxu0 %v3807
        %4080 = vmatpush.msra.mxu0 %v3806
        %4081 = vmatpush.msra.mxu0 %v3805
        %4082 = vmatpush.msra.mxu0 %v3804
        %4083 = vmatpush.msra.mxu0 %v3803
        %4084 = vmatpush.msra.mxu0 %v3802
        %4085 = vmatpush.msra.mxu0 %v3801
        %4086 = vmatpush.msra.mxu0 %v3800
        %4087 = vmatpush.msra.mxu0 %v3799
        %4088 = vmatpush.msra.mxu0 %v3798
        %4089 = vmatpush.msra.mxu0 %v3797
        %4090 = vmatpush.msra.mxu0 %v3796
        %4091 = vmatpush.msra.mxu0 %v3795
        %4092 = vmatpush.msra.mxu0 %v3794
        %4093 = vmatpush.msra.mxu0 %v3793
        %4094 = vmatpush.msra.mxu0 %v3792
        %4095 = vmatmul.f32.gmra.mxu0 %v3700
        %v4096 = vpop.f32.mrf.mxu0
        %v4097 = vadd.f32 %v4074, %v4096
        %4098 = vmatmul.f32.gmra.mxu0 %v3716
        %v4099 = vpop.f32.mrf.mxu0
        %v4100 = vadd.f32 %v4077, %v4099
        %4101 = vdwg.mxu0
        %4102 = vmatpush.msra.mxu0 %v3823
        %4103 = vmatpush.msra.mxu0 %v3822
        %4104 = vmatpush.msra.mxu0 %v3821
        %4105 = vmatpush.msra.mxu0 %v3820
        %4106 = vmatpush.msra.mxu0 %v3819
        %4107 = vmatpush.msra.mxu0 %v3818
        %4108 = vmatpush.msra.mxu0 %v3817
        %4109 = vmatpush.msra.mxu0 %v3816
        %4110 = vmatpush.msra.mxu0 %v3815
        %4111 = vmatpush.msra.mxu0 %v3814
        %4112 = vmatpush.msra.mxu0 %v3813
        %4113 = vmatpush.msra.mxu0 %v3812
        %4114 = vmatpush.msra.mxu0 %v3811
        %4115 = vmatpush.msra.mxu0 %v3810
        %4116 = vmatpush.msra.mxu0 %v3809
        %4117 = vmatpush.msra.mxu0 %v3808
        %4118 = vmatmul.f32.gmra.mxu0 %v3701
        %v4119 = vpop.f32.mrf.mxu0
        %v4120 = vadd.f32 %v4097, %v4119
        %4121 = vmatmul.f32.gmra.mxu0 %v3717
        %v4122 = vpop.f32.mrf.mxu0
        %v4123 = vadd.f32 %v4100, %v4122
        %4124 = vdwg.mxu0
        %4125 = vmatpush.msra.mxu0 %v3839
        %4126 = vmatpush.msra.mxu0 %v3838
        %4127 = vmatpush.msra.mxu0 %v3837
        %4128 = vmatpush.msra.mxu0 %v3836
        %4129 = vmatpush.msra.mxu0 %v3835
        %4130 = vmatpush.msra.mxu0 %v3834
        %4131 = vmatpush.msra.mxu0 %v3833
        %4132 = vmatpush.msra.mxu0 %v3832
        %4133 = vmatpush.msra.mxu0 %v3831
        %4134 = vmatpush.msra.mxu0 %v3830
        %4135 = vmatpush.msra.mxu0 %v3829
        %4136 = vmatpush.msra.mxu0 %v3828
        %4137 = vmatpush.msra.mxu0 %v3827
        %4138 = vmatpush.msra.mxu0 %v3826
        %4139 = vmatpush.msra.mxu0 %v3825
        %4140 = vmatpush.msra.mxu0 %v3824
        %4141 = vmatmul.f32.gmra.mxu0 %v3702
        %v4142 = vpop.f32.mrf.mxu0
        %v4143 = vadd.f32 %v4120, %v4142
        %4144 = vmatmul.f32.gmra.mxu0 %v3718
        %v4145 = vpop.f32.mrf.mxu0
        %v4146 = vadd.f32 %v4123, %v4145
        %4147 = vdwg.mxu0
        %4148 = vmatpush.msra.mxu0 %v3855
        %4149 = vmatpush.msra.mxu0 %v3854
        %4150 = vmatpush.msra.mxu0 %v3853
        %4151 = vmatpush.msra.mxu0 %v3852
        %4152 = vmatpush.msra.mxu0 %v3851
        %4153 = vmatpush.msra.mxu0 %v3850
        %4154 = vmatpush.msra.mxu0 %v3849
        %4155 = vmatpush.msra.mxu0 %v3848
        %4156 = vmatpush.msra.mxu0 %v3847
        %4157 = vmatpush.msra.mxu0 %v3846
        %4158 = vmatpush.msra.mxu0 %v3845
        %4159 = vmatpush.msra.mxu0 %v3844
        %4160 = vmatpush.msra.mxu0 %v3843
        %4161 = vmatpush.msra.mxu0 %v3842
        %4162 = vmatpush.msra.mxu0 %v3841
        %4163 = vmatpush.msra.mxu0 %v3840
        %4164 = vmatmul.f32.gmra.mxu0 %v3703
        %v4165 = vpop.f32.mrf.mxu0
        %v4166 = vadd.f32 %v4143, %v4165
        %4167 = vmatmul.f32.gmra.mxu0 %v3719
        %v4168 = vpop.f32.mrf.mxu0
        %v4169 = vadd.f32 %v4146, %v4168
        %4170 = vdwg.mxu0
        %4171 = vmatpush.msra.mxu0 %v3871
        %4172 = vmatpush.msra.mxu0 %v3870
        %4173 = vmatpush.msra.mxu0 %v3869
        %4174 = vmatpush.msra.mxu0 %v3868
        %4175 = vmatpush.msra.mxu0 %v3867
        %4176 = vmatpush.msra.mxu0 %v3866
        %4177 = vmatpush.msra.mxu0 %v3865
        %4178 = vmatpush.msra.mxu0 %v3864
        %4179 = vmatpush.msra.mxu0 %v3863
        %4180 = vmatpush.msra.mxu0 %v3862
        %4181 = vmatpush.msra.mxu0 %v3861
        %4182 = vmatpush.msra.mxu0 %v3860
        %4183 = vmatpush.msra.mxu0 %v3859
        %4184 = vmatpush.msra.mxu0 %v3858
        %4185 = vmatpush.msra.mxu0 %v3857
        %4186 = vmatpush.msra.mxu0 %v3856
        %4187 = vmatmul.f32.gmra.mxu0 %v3704
        %v4188 = vpop.f32.mrf.mxu0
        %v4189 = vadd.f32 %v4166, %v4188
        %4190 = vmatmul.f32.gmra.mxu0 %v3720
        %v4191 = vpop.f32.mrf.mxu0
        %v4192 = vadd.f32 %v4169, %v4191
        %4193 = vdwg.mxu0
        %4194 = vmatpush.msra.mxu0 %v3887
        %4195 = vmatpush.msra.mxu0 %v3886
        %4196 = vmatpush.msra.mxu0 %v3885
        %4197 = vmatpush.msra.mxu0 %v3884
        %4198 = vmatpush.msra.mxu0 %v3883
        %4199 = vmatpush.msra.mxu0 %v3882
        %4200 = vmatpush.msra.mxu0 %v3881
        %4201 = vmatpush.msra.mxu0 %v3880
        %4202 = vmatpush.msra.mxu0 %v3879
        %4203 = vmatpush.msra.mxu0 %v3878
        %4204 = vmatpush.msra.mxu0 %v3877
        %4205 = vmatpush.msra.mxu0 %v3876
        %4206 = vmatpush.msra.mxu0 %v3875
        %4207 = vmatpush.msra.mxu0 %v3874
        %4208 = vmatpush.msra.mxu0 %v3873
        %4209 = vmatpush.msra.mxu0 %v3872
        %4210 = vmatmul.f32.gmra.mxu0 %v3705
        %v4211 = vpop.f32.mrf.mxu0
        %v4212 = vadd.f32 %v4189, %v4211
        %4213 = vmatmul.f32.gmra.mxu0 %v3721
        %v4214 = vpop.f32.mrf.mxu0
        %v4215 = vadd.f32 %v4192, %v4214
        %4216 = vdwg.mxu0
        %4217 = vmatpush.msra.mxu0 %v3903
        %4218 = vmatpush.msra.mxu0 %v3902
        %4219 = vmatpush.msra.mxu0 %v3901
        %4220 = vmatpush.msra.mxu0 %v3900
        %4221 = vmatpush.msra.mxu0 %v3899
        %4222 = vmatpush.msra.mxu0 %v3898
        %4223 = vmatpush.msra.mxu0 %v3897
        %4224 = vmatpush.msra.mxu0 %v3896
        %4225 = vmatpush.msra.mxu0 %v3895
        %4226 = vmatpush.msra.mxu0 %v3894
        %4227 = vmatpush.msra.mxu0 %v3893
        %4228 = vmatpush.msra.mxu0 %v3892
        %4229 = vmatpush.msra.mxu0 %v3891
        %4230 = vmatpush.msra.mxu0 %v3890
        %4231 = vmatpush.msra.mxu0 %v3889
        %4232 = vmatpush.msra.mxu0 %v3888
        %4233 = vmatmul.f32.gmra.mxu0 %v3706
        %v4234 = vpop.f32.mrf.mxu0
        %v4235 = vadd.f32 %v4212, %v4234
        %4236 = vmatmul.f32.gmra.mxu0 %v3722
        %v4237 = vpop.f32.mrf.mxu0
        %v4238 = vadd.f32 %v4215, %v4237
        %4239 = vdwg.mxu0
        %4240 = vmatpush.msra.mxu0 %v3919
        %4241 = vmatpush.msra.mxu0 %v3918
        %4242 = vmatpush.msra.mxu0 %v3917
        %4243 = vmatpush.msra.mxu0 %v3916
        %4244 = vmatpush.msra.mxu0 %v3915
        %4245 = vmatpush.msra.mxu0 %v3914
        %4246 = vmatpush.msra.mxu0 %v3913
        %4247 = vmatpush.msra.mxu0 %v3912
        %4248 = vmatpush.msra.mxu0 %v3911
        %4249 = vmatpush.msra.mxu0 %v3910
        %4250 = vmatpush.msra.mxu0 %v3909
        %4251 = vmatpush.msra.mxu0 %v3908
        %4252 = vmatpush.msra.mxu0 %v3907
        %4253 = vmatpush.msra.mxu0 %v3906
        %4254 = vmatpush.msra.mxu0 %v3905
        %4255 = vmatpush.msra.mxu0 %v3904
        %4256 = vmatmul.f32.gmra.mxu0 %v3707
        %v4257 = vpop.f32.mrf.mxu0
        %v4258 = vadd.f32 %v4235, %v4257
        %4259 = vmatmul.f32.gmra.mxu0 %v3723
        %v4260 = vpop.f32.mrf.mxu0
        %v4261 = vadd.f32 %v4238, %v4260
        %4262 = vdwg.mxu0
        %4263 = vmatpush.msra.mxu0 %v3935
        %4264 = vmatpush.msra.mxu0 %v3934
        %4265 = vmatpush.msra.mxu0 %v3933
        %4266 = vmatpush.msra.mxu0 %v3932
        %4267 = vmatpush.msra.mxu0 %v3931
        %4268 = vmatpush.msra.mxu0 %v3930
        %4269 = vmatpush.msra.mxu0 %v3929
        %4270 = vmatpush.msra.mxu0 %v3928
        %4271 = vmatpush.msra.mxu0 %v3927
        %4272 = vmatpush.msra.mxu0 %v3926
        %4273 = vmatpush.msra.mxu0 %v3925
        %4274 = vmatpush.msra.mxu0 %v3924
        %4275 = vmatpush.msra.mxu0 %v3923
        %4276 = vmatpush.msra.mxu0 %v3922
        %4277 = vmatpush.msra.mxu0 %v3921
        %4278 = vmatpush.msra.mxu0 %v3920
        %4279 = vmatmul.f32.gmra.mxu0 %v3708
        %v4280 = vpop.f32.mrf.mxu0
        %v4281 = vadd.f32 %v4258, %v4280
        %4282 = vmatmul.f32.gmra.mxu0 %v3724
        %v4283 = vpop.f32.mrf.mxu0
        %v4284 = vadd.f32 %v4261, %v4283
        %4285 = vdwg.mxu0
        %4286 = vmatpush.msra.mxu0 %v3951
        %4287 = vmatpush.msra.mxu0 %v3950
        %4288 = vmatpush.msra.mxu0 %v3949
        %4289 = vmatpush.msra.mxu0 %v3948
        %4290 = vmatpush.msra.mxu0 %v3947
        %4291 = vmatpush.msra.mxu0 %v3946
        %4292 = vmatpush.msra.mxu0 %v3945
        %4293 = vmatpush.msra.mxu0 %v3944
        %4294 = vmatpush.msra.mxu0 %v3943
        %4295 = vmatpush.msra.mxu0 %v3942
        %4296 = vmatpush.msra.mxu0 %v3941
        %4297 = vmatpush.msra.mxu0 %v3940
        %4298 = vmatpush.msra.mxu0 %v3939
        %4299 = vmatpush.msra.mxu0 %v3938
        %4300 = vmatpush.msra.mxu0 %v3937
        %4301 = vmatpush.msra.mxu0 %v3936
        %4302 = vmatmul.f32.gmra.mxu0 %v3709
        %v4303 = vpop.f32.mrf.mxu0
        %v4304 = vadd.f32 %v4281, %v4303
        %4305 = vmatmul.f32.gmra.mxu0 %v3725
        %v4306 = vpop.f32.mrf.mxu0
        %v4307 = vadd.f32 %v4284, %v4306
        %4308 = vdwg.mxu0
        %4309 = vmatpush.msra.mxu0 %v3967
        %4310 = vmatpush.msra.mxu0 %v3966
        %4311 = vmatpush.msra.mxu0 %v3965
        %4312 = vmatpush.msra.mxu0 %v3964
        %4313 = vmatpush.msra.mxu0 %v3963
        %4314 = vmatpush.msra.mxu0 %v3962
        %4315 = vmatpush.msra.mxu0 %v3961
        %4316 = vmatpush.msra.mxu0 %v3960
        %4317 = vmatpush.msra.mxu0 %v3959
        %4318 = vmatpush.msra.mxu0 %v3958
        %4319 = vmatpush.msra.mxu0 %v3957
        %4320 = vmatpush.msra.mxu0 %v3956
        %4321 = vmatpush.msra.mxu0 %v3955
        %4322 = vmatpush.msra.mxu0 %v3954
        %4323 = vmatpush.msra.mxu0 %v3953
        %4324 = vmatpush.msra.mxu0 %v3952
        %4325 = vmatmul.f32.gmra.mxu0 %v3710
        %v4326 = vpop.f32.mrf.mxu0
        %v4327 = vadd.f32 %v4304, %v4326
        %4328 = vmatmul.f32.gmra.mxu0 %v3726
        %v4329 = vpop.f32.mrf.mxu0
        %v4330 = vadd.f32 %v4307, %v4329
        %4331 = vdwg.mxu0
        %4332 = vmatpush.msra.mxu0 %v3983
        %4333 = vmatpush.msra.mxu0 %v3982
        %4334 = vmatpush.msra.mxu0 %v3981
        %4335 = vmatpush.msra.mxu0 %v3980
        %4336 = vmatpush.msra.mxu0 %v3979
        %4337 = vmatpush.msra.mxu0 %v3978
        %4338 = vmatpush.msra.mxu0 %v3977
        %4339 = vmatpush.msra.mxu0 %v3976
        %4340 = vmatpush.msra.mxu0 %v3975
        %4341 = vmatpush.msra.mxu0 %v3974
        %4342 = vmatpush.msra.mxu0 %v3973
        %4343 = vmatpush.msra.mxu0 %v3972
        %4344 = vmatpush.msra.mxu0 %v3971
        %4345 = vmatpush.msra.mxu0 %v3970
        %4346 = vmatpush.msra.mxu0 %v3969
        %4347 = vmatpush.msra.mxu0 %v3968
        %4348 = vmatmul.f32.gmra.mxu0 %v3711
        %v4349 = vpop.f32.mrf.mxu0
        %v4350 = vadd.f32 %v4327, %v4349
        %4351 = vmatmul.f32.gmra.mxu0 %v3727
        %v4352 = vpop.f32.mrf.mxu0
        %v4353 = vadd.f32 %v4330, %v4352
        %4354 = vdwg.mxu0
        %4357 = vrot.lane.b32.xlu0 %v600, 64
        %v4358 = vpop.permute.xlu0 %4357
        %4359 = vrot.lane.b32.xlu0 %v601, 64
        %v4360 = vpop.permute.xlu0 %4359
        %v4363 = vmul.f32 %v4350, %v4358
        %v4364 = vmul.f32 %v4353, %v4360
        %v4365 = vpack.c.bf16 %v4364, %v4363
        %v4366 = vld [vmem:[%s5] sm:$0xf]
        %v4367 = vld [vmem:[%s5 + $0x4] sm:$0xf]
        %v4368 = vld [vmem:[%s5 + $0x8] sm:$0xf]
        %v4369 = vld [vmem:[%s5 + $0xc] sm:$0xf]
        %v4370 = vld [vmem:[%s5 + $0x10] sm:$0xf]
        %v4371 = vld [vmem:[%s5 + $0x14] sm:$0xf]
        %v4372 = vld [vmem:[%s5 + $0x18] sm:$0xf]
        %v4373 = vld [vmem:[%s5 + $0x1c] sm:$0xf]
        %v4374 = vld [vmem:[%s5 + $0x20] sm:$0xf]
        %v4375 = vld [vmem:[%s5 + $0x24] sm:$0xf]
        %v4376 = vld [vmem:[%s5 + $0x28] sm:$0xf]
        %v4377 = vld [vmem:[%s5 + $0x2c] sm:$0xf]
        %v4378 = vld [vmem:[%s5 + $0x30] sm:$0xf]
        %v4379 = vld [vmem:[%s5 + $0x34] sm:$0xf]
        %v4380 = vld [vmem:[%s5 + $0x38] sm:$0xf]
        %v4381 = vld [vmem:[%s5 + $0x3c] sm:$0xf]
        %v4398 = vunpack.c.l.b16 %v4366
        %v4399 = vunpack.c.l.b16 %v4367
        %v4400 = vunpack.c.l.b16 %v4368
        %v4401 = vunpack.c.l.b16 %v4369
        %v4402 = vunpack.c.l.b16 %v4370
        %v4403 = vunpack.c.l.b16 %v4371
        %v4404 = vunpack.c.l.b16 %v4372
        %v4405 = vunpack.c.l.b16 %v4373
        %v4406 = vunpack.c.l.b16 %v4374
        %v4407 = vunpack.c.l.b16 %v4375
        %v4408 = vunpack.c.l.b16 %v4376
        %v4409 = vunpack.c.l.b16 %v4377
        %v4410 = vunpack.c.l.b16 %v4378
        %v4411 = vunpack.c.l.b16 %v4379
        %v4412 = vunpack.c.l.b16 %v4380
        %v4413 = vunpack.c.l.b16 %v4381
        %v4414 = vpack.c.b16 %v4399, %v4398
        %v4415 = vpack.c.b16 %v4401, %v4400
        %v4416 = vpack.c.b16 %v4403, %v4402
        %v4417 = vpack.c.b16 %v4405, %v4404
        %v4418 = vpack.c.b16 %v4407, %v4406
        %v4419 = vpack.c.b16 %v4409, %v4408
        %v4420 = vpack.c.b16 %v4411, %v4410
        %v4421 = vpack.c.b16 %v4413, %v4412
        %4430 = vmatpush.bf16.msra.mxu0 %v4421
        %4431 = vmatpush.bf16.msra.mxu0 %v4420
        %4432 = vmatpush.bf16.msra.mxu0 %v4419
        %4433 = vmatpush.bf16.msra.mxu0 %v4418
        %4434 = vmatpush.bf16.msra.mxu0 %v4417
        %4435 = vmatpush.bf16.msra.mxu0 %v4416
        %4436 = vmatpush.bf16.msra.mxu0 %v4415
        %4437 = vmatpush.bf16.msra.mxu0 %v4414
        %4438 = vmatmul.bf16.gmra.mxu0 %v4365
        %v4439 = vpop.f32.mrf.mxu0
        %v4440 = vadd.f32 %v385, %v4439
        %v4441 = vpop.f32.mrf.mxu0
        %v4442 = vadd.f32 %v386, %v4441
        %4443 = vdwg.mxu0
        %4444 = vst.msk [vmem:[%s376] sm:$0xff] %vm390, %v4440
        %4445 = vst.msk [vmem:[%s376 + $0x8] sm:$0xff] %vm390, %v4442
        %s4446 = sand.u32 %s227, 1
        %s4447 = scalar_lea.sflag [#allocation4], %s4446
        %s4448 = sand.u32 %s227, 1
        %s4449 = smul.addr %s4448, 16
        %s4450 = scalar_lea.vmem [#allocation8], %s4449
        // Predicated region
        $region69: #{tpu_custom_call.1} parent=55 // pred_check
          %p4451 = pneg %p237
        $region70: #{tpu_custom_call.1} parent=55 // pred_check_branch
          %4453 = sbr.rel (%p4451) target = $region72
        $region71: #{tpu_custom_call.1} parent=55 // pred_region
          %s4454 = smul.u32 2, %s25
          %4456 = vsyncadd %s4447, 0
          %s4457 = smul.addr %s4454, 8
          %s4458 = scalar_lea.hbm %s9, %s4457
          %s4459 = sshll.u32 %s4450, 4
          %s4460 = int_to_ptr.vmem [resolvable:$true] %s4459
          %s4461 = sshll.u32 %s4458, 4
          %s4462 = int_to_ptr.hbm [resolvable:$true] %s4461
          %4467 = dma.vmem_to_hbm [thread:$0]  %s4460, 256, %s4462, %s4447, 128, 128, 8
        $region72: #{tpu_custom_call.1} parent=55 // pred_fallthru
          _
      $region56: #{tpu_custom_call.1} parent=5 // pred_fallthru
        _
      %p4468 = scmp.le.s32.totalorder 2, %s20
      // Predicated region
      $region73: #{tpu_custom_call.1} parent=5 // pred_check
        %p4469 = pneg %p4468
      $region74: #{tpu_custom_call.1} parent=5 // pred_check_branch
        %4471 = sbr.rel (%p4469) target = $region76
      $region75: #{tpu_custom_call.1} parent=5 // pred_region
        %s4472 = ssub.s32 %s20, 2
        // Predicated region
        $region77: #{tpu_custom_call.1} parent=75 // pred_check
          %p4473 = pneg %p243
        $region78: #{tpu_custom_call.1} parent=75 // pred_check_branch
          %4475 = sbr.rel (%p4473) target = $region80
        $region79: #{tpu_custom_call.1} parent=75 // pred_region
          %s4476 = sand.u32 %s228, 1
          %s4477 = scalar_lea.sflag [#allocation4], %s4476
          %s4478 = sand.u32 %s228, 1
          %s4479 = smul.addr %s4478, 16
          %s4480 = scalar_lea.vmem [#allocation8], %s4479
          %4482 = dma.done %s4477, 256
        $region80: #{tpu_custom_call.1} parent=75 // pred_fallthru
          _
      $region76: #{tpu_custom_call.1} parent=5 // pred_fallthru
        _
    $region6: #{tpu_custom_call.1} parent=1 // loop_footer
      %s24 = sadd.s32 1, %s20
    $region7: #{tpu_custom_call.1} parent=1 // loop_footer_branch
      %19 = sbr.rel target = $region3
    $region8: #{tpu_custom_call.1} parent=1 // loop_exit
      _
    %4483 = vsyncpa [#allocation3], 1
    %s4484 = scalar_lea.sflag [#allocation3], 1
    %4485 = vsyncpa %s4484, 1
    %4486 = vsyncpa [#allocation6], 1
    %4487 = vsyncpa [#allocation4], 1
    %s4488 = scalar_lea.sflag [#allocation4], 1
    %4489 = vsyncpa %s4488, 1

</llo_original>
